<compile_context>
chip_gen: v5e
topology: v5e:2x2
jax: 0.10.0
libtpu: 0.0.40
codegen_flags: <defaults>
</compile_context>

<pallas_src>
import numpy as np
import jax
import jax.numpy as jnp
from jax.experimental import pallas as pl
from jax.experimental.pallas import tpu as pltpu

KW = 4          # kernel_size of every conv in the module
PADW = 1        # padding of every conv in the module
NEG_SLOPE = 0.2
BN_EPS = 1e-5


# ---------------------------------------------------------------------------
# Module structure (mirrors NLayerDiscriminator.__init__ with BatchNorm2d,
# i.e. use_bias=False on the inner convs, bias=True on first/last convs).
# ---------------------------------------------------------------------------
def build_layer_configs(input_nc, ndf, n_layers):
    cfgs = [dict(cin=input_nc, cout=ndf, stride=2, bias=True, bn=False)]
    nf_mult = 1
    for n in range(1, n_layers):
        nf_prev, nf_mult = nf_mult, min(2 ** n, 8)
        cfgs.append(dict(cin=ndf * nf_prev, cout=ndf * nf_mult,
                         stride=2, bias=False, bn=True))
    nf_prev, nf_mult = nf_mult, min(2 ** n_layers, 8)
    cfgs.append(dict(cin=ndf * nf_prev, cout=ndf * nf_mult,
                     stride=1, bias=False, bn=True))
    cfgs.append(dict(cin=ndf * nf_mult, cout=1, stride=1, bias=True, bn=False))
    return cfgs


def init_params(key, cfgs):
    """Deterministic init: conv w ~ N(0, 0.02) stored HWIO, BN gamma ~ N(1,0.02)."""
    params = []
    for cfg in cfgs:
        key, kw_, kb, kg = jax.random.split(key, 4)
        p = {"w": 0.02 * jax.random.normal(kw_, (KW, KW, cfg["cin"], cfg["cout"]),
                                           jnp.float32)}
        if cfg["bias"]:
            p["b"] = 0.02 * jax.random.normal(kb, (cfg["cout"],), jnp.float32)
        if cfg["bn"]:
            p["gamma"] = 1.0 + 0.02 * jax.random.normal(kg, (cfg["cout"],), jnp.float32)
            p["beta"] = jnp.zeros((cfg["cout"],), jnp.float32)
        params.append(p)
    return params


# ---------------------------------------------------------------------------
# Host-side constants.
#   Activation layout:  X[b*(H+2) + (h+1), w*C + c] = x[b, c, h, w]
#   (one zero row of H-padding above and below every image in the slab).
#   conv(out) = G @ A_stacked, where
#     G = [gather_0(X) | gather_1(X) | gather_2(X) | gather_3(X)]   (lane concat)
#     gather_i picks rows  s*oy + i  of each padded image (strided pl.ds read)
#     A_stacked[(i, w, c), (ox, co)] = W[i, w-(s*ox-1), c, co]   (W-pad -> zeros)
# ---------------------------------------------------------------------------
def _stacked_conv_mat(w_hwio, stride, Win, cin_slab):
    kh, kw, cin, cout = w_hwio.shape
    OW = (Win + 2 * PADW - kw) // stride + 1
    w = np.asarray(w_hwio, np.float32)
    A = np.zeros((kh * Win * cin_slab, OW * cout), np.float32)
    for i in range(kh):
        for ox in range(OW):
            for j in range(kw):
                wc = stride * ox - PADW + j
                if 0 <= wc < Win:
                    r0 = i * Win * cin_slab + wc * cin_slab
                    A[r0:r0 + cin, ox * cout:(ox + 1) * cout] = w[i, j]
    return jnp.asarray(A, jnp.bfloat16), OW


def _tiled_row(vec, OW):
    """Per-channel vector tiled over spatial lanes -> [1, OW*C] (f32)."""
    v = np.asarray(vec, np.float32)
    return jnp.asarray(np.tile(v, OW)[None, :], jnp.float32)


# ---------------------------------------------------------------------------
# Forward builder: assembles constants, the fused kernel and a jitted wrapper.
# ---------------------------------------------------------------------------
def build_forward(params, cfgs, B, isize, use_sigmoid=False):
    H = W = isize
    n_layers_total = len(cfgs)
    cin0 = cfgs[0]["cin"]
    cin0_pad = -(-cin0 // 4) * 4          # 3 -> 4 so the input slab is [.., 128]

    const_ops = []       # list of (array, "block" | "any")
    pf_ops = []          # indices (into const_ops) of manually prefetched A's
    act_shapes = []      # zero-padded activation slabs kept in VMEM scratch (f32)
    plan = []

    Hin, Win = H, W
    for li, (cfg, prm) in enumerate(zip(cfgs, params)):
        last = li == n_layers_total - 1
        cin_slab = cin0_pad if li == 0 else cfg["cin"]
        A, OW = _stacked_conv_mat(prm["w"], cfg["stride"], Win, cin_slab)
        OH = (Hin + 2 * PADW - KW) // cfg["stride"] + 1

        prefetched = 0 < li < n_layers_total - 1       # overlap these A DMAs
        pf_slot = None
        a_idx = len(const_ops)
        const_ops.append((A, "any" if prefetched else "block"))
        if prefetched:
            pf_slot = len(pf_ops)
            pf_ops.append(a_idx)

        bias_idx = gamma_idx = beta_idx = None
        if cfg["bias"]:
            bias_idx = len(const_ops)
            const_ops.append((_tiled_row(prm["b"], OW), "block"))
        if cfg["bn"]:
            gamma_idx = len(const_ops)
            const_ops.append((_tiled_row(prm["gamma"], OW), "block"))
            beta_idx = len(const_ops)
            const_ops.append((_tiled_row(prm["beta"], OW), "block"))

        dst_idx = None
        if not last:
            dst_idx = len(act_shapes)
            act_shapes.append((B * (OH + 2), OW * cfg["cout"]))

        plan.append(dict(
            img_h=Hin + 2, stride=cfg["stride"], OH=OH, OW=OW, cout=cfg["cout"],
            a_idx=a_idx, prefetched=prefetched, pf_slot=pf_slot,
            bias_idx=bias_idx, gamma_idx=gamma_idx, beta_idx=beta_idx,
            bn=cfg["bn"],
            act=("sigmoid" if use_sigmoid else None) if last else "lrelu",
            src_idx=None if li == 0 else li - 1,
            dst_idx=dst_idx,
            n_stat=B * OH * OW))
        Hin, Win = OH, OW

    OHf, OWf, Cf = Hin, Win, cfgs[-1]["cout"]
    out_shape2d = (B * OHf, OWf * Cf)                  # tiny [4, 2] output
    n_const = len(const_ops)
    n_pf = len(pf_ops)
    const_arrays = [a for a, _ in const_ops]

    # ------------------------------------------------------------------ kernel
    def kernel(*refs):
        x_ref = refs[0]
        const = refs[1:1 + n_const]
        out_ref = refs[1 + n_const]
        scratch = refs[2 + n_const:]
        a_bufs = scratch[:n_pf]
        sem = scratch[n_pf]
        acts = scratch[n_pf + 1:]

        # Kick off DMAs for the later layers' stacked weight factors so that
        # their HBM->VMEM transfer overlaps with the earlier layers' compute.
        copies = []
        for slot, op_idx in enumerate(pf_ops):
            cp = pltpu.make_async_copy(const[op_idx], a_bufs[slot], sem.at[slot])
            cp.start()
            copies.append(cp)

        # Zero the padded activation slabs once (the pad rows implement the
        # conv's zero padding in H; interiors are overwritten below).
        for a in acts:
            a[...] = jnp.zeros(a.shape, a.dtype)

        for lp in plan:
            src = x_ref if lp["src_idx"] is None else acts[lp["src_idx"]]
            s, OH, img_h = lp["stride"], lp["OH"], lp["img_h"]

            # H-gather: 4 kernel-tap rows, strided sublane reads per image,
            # lane-concatenated into one big-K matmul operand.
            taps = []
            for i in range(KW):
                parts = []
                for b in range(B):
                    start = b * img_h + i
                    idx = pl.ds(start, OH, s) if s > 1 else pl.ds(start, OH)
                    parts.append(src[idx, :])
                taps.append(parts[0] if B == 1 else jnp.concatenate(parts, axis=0))
            G = jnp.concatenate(taps, axis=1).astype(jnp.bfloat16)

            if lp["prefetched"]:
                copies[lp["pf_slot"]].wait()
                A = a_bufs[lp["pf_slot"]][...]
            else:
                A = const[lp["a_idx"]][...]
            y = jnp.dot(G, A, preferred_element_type=jnp.float32)   # f32 acc

            if lp["bias_idx"] is not None:
                y = y + const[lp["bias_idx"]][...]

            if lp["bn"]:
                C = lp["cout"]
                L = lp["OW"] * C
                # Channel-averaging matrix built in-kernel (no DMA):
                #   P[a,b] = (a%C == b%C) / n_stat
                ia = jax.lax.broadcasted_iota(jnp.int32, (L, L), 0)
                ib = jax.lax.broadcasted_iota(jnp.int32, (L, L), 1)
                if C & (C - 1) == 0:
                    same = (ia & (C - 1)) == (ib & (C - 1))
                else:
                    same = (ia % C) == (ib % C)
                P = jnp.where(same, 1.0 / lp["n_stat"], 0.0).astype(jnp.float32)
                mean = jnp.sum(jnp.dot(y, P, preferred_element_type=jnp.float32),
                               axis=0, keepdims=True)
                d = y - mean
                var = jnp.sum(jnp.dot(d * d, P, preferred_element_type=jnp.float32),
                              axis=0, keepdims=True)
                var = jnp.maximum(var, 0.0)            # two-pass var, clamped
                y = d * jax.lax.rsqrt(var + BN_EPS)
                y = y * const[lp["gamma_idx"]][...] + const[lp["beta_idx"]][...]

            if lp["act"] == "lrelu":
                y = jnp.where(y > 0, y, NEG_SLOPE * y)
            elif lp["act"] == "sigmoid":
                y = jax.nn.sigmoid(y)

            if lp["dst_idx"] is not None:
                dst = acts[lp["dst_idx"]]
                for b in range(B):
                    dst[pl.ds(b * (OH + 2) + 1, OH), :] = (
                        y[b * OH:(b + 1) * OH, :].astype(dst.dtype))
            else:
                out_ref[...] = y.astype(out_ref.dtype)

    # --------------------------------------------------------------- wrapper
    def _block_spec(shape):
        zeros = (0,) * len(shape)
        return pl.BlockSpec(shape, lambda i, z=zeros: z)

    in_specs = [_block_spec((B * (H + 2), W * cin0_pad))]
    for arr, kind in const_ops:
        in_specs.append(pl.BlockSpec(memory_space=pl.ANY) if kind == "any"
                        else _block_spec(arr.shape))

    scratch_shapes = [pltpu.VMEM(const_arrays[i].shape, jnp.bfloat16) for i in pf_ops]
    scratch_shapes.append(pltpu.SemaphoreType.DMA((max(n_pf, 1),)))
    scratch_shapes += [pltpu.VMEM(s, jnp.float32) for s in act_shapes]

    def forward(x_nchw):
        # NCHW -> zero-padded lane-dense slab [B*(H+2), W*Cin_pad] (XLA side).
        x = jnp.transpose(x_nchw.astype(jnp.float32), (0, 2, 3, 1))
        x = jnp.pad(x, ((0, 0), (1, 1), (0, 0), (0, cin0_pad - cin0)))
        x2d = x.reshape(B * (H + 2), W * cin0_pad)
        out2d = pl.pallas_call(
            kernel,
            out_shape=jax.ShapeDtypeStruct(out_shape2d, jnp.float32),
            grid=(1,),
            in_specs=in_specs,
            out_specs=_block_spec(out_shape2d),
            scratch_shapes=scratch_shapes,
            compiler_params=pltpu.CompilerParams(
                dimension_semantics=("arbitrary",)),
        )(x2d, *const_arrays)
        out = out2d.reshape(B, OHf, OWf, Cf)
        return jnp.transpose(out, (0, 3, 1, 2))        # [B, 1, OHf, OWf] NCHW

    return jax.jit(forward)


# ---------------------------------------------------------------------------
# Pure-JAX reference (same math via XLA convs) for a correctness check.
# ---------------------------------------------------------------------------
def reference_forward(x_nchw, params, cfgs, use_sigmoid=False):
    dn = ("NCHW", "HWIO", "NCHW")
    h = x_nchw.astype(jnp.float32)
    for li, (cfg, prm) in enumerate(zip(cfgs, params)):
        y = jax.lax.conv_general_dilated(
            h, prm["w"], (cfg["stride"], cfg["stride"]),
            ((PADW, PADW), (PADW, PADW)), dimension_numbers=dn,
            precision=jax.lax.Precision.HIGHEST)
        if cfg["bias"]:
            y = y + prm["b"][None, :, None, None]
        if cfg["bn"]:
            m = jnp.mean(y, axis=(0, 2, 3), keepdims=True)
            v = jnp.mean((y - m) ** 2, axis=(0, 2, 3), keepdims=True)
            y = (y - m) * jax.lax.rsqrt(v + BN_EPS)
            y = y * prm["gamma"][None, :, None, None] + prm["beta"][None, :, None, None]
        if li < len(cfgs) - 1:
            y = jnp.where(y > 0, y, NEG_SLOPE * y)
        elif use_sigmoid:
            y = jax.nn.sigmoid(y)
        h = y
    return h


if __name__ == "__main__":
    # TODO(synk): BatchNorm uses training-mode batch statistics (fresh module /
    # train() behavior); eval()-mode running-stat normalization is not modeled.
    B, INPUT_NC, NDF, N_LAYERS, ISIZE = 2, 3, 8, 3, 32

    key = jax.random.PRNGKey(0)
    kx, kp = jax.random.split(key)
    x = jax.random.normal(kx, (B, INPUT_NC, ISIZE, ISIZE), jnp.float32)

    cfgs = build_layer_configs(INPUT_NC, NDF, N_LAYERS)
    params = init_params(kp, cfgs)

    fwd = build_forward(params, cfgs, B, ISIZE, use_sigmoid=False)
    y = fwd(x)
    jax.block_until_ready(y)

    y_ref = reference_forward(x, params, cfgs, use_sigmoid=False)
    assert y.shape == y_ref.shape, (y.shape, y_ref.shape)
    assert bool(jnp.all(jnp.isfinite(y)))
    # bf16 MXU path vs f32 XLA reference -> slightly relaxed tolerance.
    np.testing.assert_allclose(np.asarray(y), np.asarray(y_ref),
                               rtol=2e-2, atol=2e-2)
    print("KERNEL_OK")
</pallas_src>

<mosaic_0001>
module attributes {stable_mosaic.version = 11 : i64} {
  func.func @kernel(%arg0: i32, %arg1: memref<68x128xf32, #tpu.memory_space<vmem>>, %arg2: memref<512x128xbf16, #tpu.memory_space<vmem>>, %arg3: memref<1x128xf32, #tpu.memory_space<vmem>>, %arg4: memref<512x128xbf16, #tpu.memory_space<any>>, %arg5: memref<1x128xf32, #tpu.memory_space<vmem>>, %arg6: memref<1x128xf32, #tpu.memory_space<vmem>>, %arg7: memref<512x128xbf16, #tpu.memory_space<any>>, %arg8: memref<1x128xf32, #tpu.memory_space<vmem>>, %arg9: memref<1x128xf32, #tpu.memory_space<vmem>>, %arg10: memref<512x192xbf16, #tpu.memory_space<any>>, %arg11: memref<1x192xf32, #tpu.memory_space<vmem>>, %arg12: memref<1x192xf32, #tpu.memory_space<vmem>>, %arg13: memref<768x2xbf16, #tpu.memory_space<vmem>>, %arg14: memref<1x2xf32, #tpu.memory_space<vmem>>, %arg15: memref<4x2xf32, #tpu.memory_space<vmem>>, %arg16: memref<512x128xbf16, #tpu.memory_space<vmem>>, %arg17: memref<512x128xbf16, #tpu.memory_space<vmem>>, %arg18: memref<512x192xbf16, #tpu.memory_space<vmem>>, %arg19: memref<3x!tpu.dma_semaphore, #tpu.memory_space<semaphore_mem>>, %arg20: memref<36x128xf32, #tpu.memory_space<vmem>>, %arg21: memref<20x128xf32, #tpu.memory_space<vmem>>, %arg22: memref<12x128xf32, #tpu.memory_space<vmem>>, %arg23: memref<10x192xf32, #tpu.memory_space<vmem>>) attributes {dimension_semantics = [#tpu.dimension_semantics<arbitrary>], iteration_bounds = array<i64: 1>, scalar_prefetch = 0 : i64, scratch_operands = 8 : i64, tpu.core_type = #tpu.core_type<tc>, window_params = [{pipeline_mode = #tpu.pipeline_mode<synchronous>, transform_indices = @transform_0, window_bounds = array<i64: 68, 128>}, {pipeline_mode = #tpu.pipeline_mode<synchronous>, transform_indices = @transform_1, window_bounds = array<i64: 512, 128>}, {pipeline_mode = #tpu.pipeline_mode<synchronous>, transform_indices = @transform_2, window_bounds = array<i64: 1, 128>}, {}, {pipeline_mode = #tpu.pipeline_mode<synchronous>, transform_indices = @transform_4, window_bounds = array<i64: 1, 128>}, {pipeline_mode = #tpu.pipeline_mode<synchronous>, transform_indices = @transform_5, window_bounds = array<i64: 1, 128>}, {}, {pipeline_mode = #tpu.pipeline_mode<synchronous>, transform_indices = @transform_7, window_bounds = array<i64: 1, 128>}, {pipeline_mode = #tpu.pipeline_mode<synchronous>, transform_indices = @transform_8, window_bounds = array<i64: 1, 128>}, {}, {pipeline_mode = #tpu.pipeline_mode<synchronous>, transform_indices = @transform_10, window_bounds = array<i64: 1, 192>}, {pipeline_mode = #tpu.pipeline_mode<synchronous>, transform_indices = @transform_11, window_bounds = array<i64: 1, 192>}, {pipeline_mode = #tpu.pipeline_mode<synchronous>, transform_indices = @transform_12, window_bounds = array<i64: 768, 2>}, {pipeline_mode = #tpu.pipeline_mode<synchronous>, transform_indices = @transform_13, window_bounds = array<i64: 1, 2>}, {pipeline_mode = #tpu.pipeline_mode<synchronous>, transform_indices = @transform_14, window_bounds = array<i64: 4, 2>}]} {
    %c0_i32 = arith.constant 0 : i32
    %0 = tpu.memref_slice %arg19[%c0_i32] : memref<3x!tpu.dma_semaphore, #tpu.memory_space<semaphore_mem>> -> memref<1x!tpu.dma_semaphore, #tpu.memory_space<semaphore_mem>>
    %1 = tpu.memref_squeeze %0 : memref<1x!tpu.dma_semaphore, #tpu.memory_space<semaphore_mem>> -> memref<!tpu.dma_semaphore, #tpu.memory_space<semaphore_mem>>
    tpu.enqueue_dma source(%arg4 : memref<512x128xbf16, #tpu.memory_space<any>>) target(%arg16 : memref<512x128xbf16, #tpu.memory_space<vmem>>) target_semaphore(%1 : memref<!tpu.dma_semaphore, #tpu.memory_space<semaphore_mem>>)
    %c1_i32 = arith.constant 1 : i32
    %2 = tpu.memref_slice %arg19[%c1_i32] : memref<3x!tpu.dma_semaphore, #tpu.memory_space<semaphore_mem>> -> memref<1x!tpu.dma_semaphore, #tpu.memory_space<semaphore_mem>>
    %3 = tpu.memref_squeeze %2 : memref<1x!tpu.dma_semaphore, #tpu.memory_space<semaphore_mem>> -> memref<!tpu.dma_semaphore, #tpu.memory_space<semaphore_mem>>
    tpu.enqueue_dma source(%arg7 : memref<512x128xbf16, #tpu.memory_space<any>>) target(%arg17 : memref<512x128xbf16, #tpu.memory_space<vmem>>) target_semaphore(%3 : memref<!tpu.dma_semaphore, #tpu.memory_space<semaphore_mem>>)
    %c2_i32 = arith.constant 2 : i32
    %4 = tpu.memref_slice %arg19[%c2_i32] : memref<3x!tpu.dma_semaphore, #tpu.memory_space<semaphore_mem>> -> memref<1x!tpu.dma_semaphore, #tpu.memory_space<semaphore_mem>>
    %5 = tpu.memref_squeeze %4 : memref<1x!tpu.dma_semaphore, #tpu.memory_space<semaphore_mem>> -> memref<!tpu.dma_semaphore, #tpu.memory_space<semaphore_mem>>
    tpu.enqueue_dma source(%arg10 : memref<512x192xbf16, #tpu.memory_space<any>>) target(%arg18 : memref<512x192xbf16, #tpu.memory_space<vmem>>) target_semaphore(%5 : memref<!tpu.dma_semaphore, #tpu.memory_space<semaphore_mem>>)
    %cst = arith.constant 0.000000e+00 : f32
    %6 = vector.broadcast %cst : f32 to vector<36x128xf32>
    %c0 = arith.constant 0 : index
    %c0_0 = arith.constant 0 : index
    %7 = vector.load %arg20[%c0, %c0_0] : memref<36x128xf32, #tpu.memory_space<vmem>>, vector<36x128xf32>
    tpu.vector_store %arg20[%c0, %c0_0], %6 {strides = array<i32>} : memref<36x128xf32, #tpu.memory_space<vmem>>, vector<36x128xf32>,
    %cst_1 = arith.constant 0.000000e+00 : f32
    %8 = vector.broadcast %cst_1 : f32 to vector<20x128xf32>
    %c0_2 = arith.constant 0 : index
    %c0_3 = arith.constant 0 : index
    %9 = vector.load %arg21[%c0_2, %c0_3] : memref<20x128xf32, #tpu.memory_space<vmem>>, vector<20x128xf32>
    tpu.vector_store %arg21[%c0_2, %c0_3], %8 {strides = array<i32>} : memref<20x128xf32, #tpu.memory_space<vmem>>, vector<20x128xf32>,
    %cst_4 = arith.constant 0.000000e+00 : f32
    %10 = vector.broadcast %cst_4 : f32 to vector<12x128xf32>
    %c0_5 = arith.constant 0 : index
    %c0_6 = arith.constant 0 : index
    %11 = vector.load %arg22[%c0_5, %c0_6] : memref<12x128xf32, #tpu.memory_space<vmem>>, vector<12x128xf32>
    tpu.vector_store %arg22[%c0_5, %c0_6], %10 {strides = array<i32>} : memref<12x128xf32, #tpu.memory_space<vmem>>, vector<12x128xf32>,
    %cst_7 = arith.constant 0.000000e+00 : f32
    %12 = vector.broadcast %cst_7 : f32 to vector<10x192xf32>
    %c0_8 = arith.constant 0 : index
    %c0_9 = arith.constant 0 : index
    %13 = vector.load %arg23[%c0_8, %c0_9] : memref<10x192xf32, #tpu.memory_space<vmem>>, vector<10x192xf32>
    tpu.vector_store %arg23[%c0_8, %c0_9], %12 {strides = array<i32>} : memref<10x192xf32, #tpu.memory_space<vmem>>, vector<10x192xf32>,
    %c0_10 = arith.constant 0 : index
    %c0_11 = arith.constant 0 : index
    %14 = tpu.strided_load %arg1[%c0_10, %c0_11] {strides = array<i32: 2, 1>} : memref<68x128xf32, #tpu.memory_space<vmem>>, vector<16x128xf32>
    %c34 = arith.constant 34 : index
    %c0_12 = arith.constant 0 : index
    %15 = tpu.strided_load %arg1[%c34, %c0_12] {strides = array<i32: 2, 1>} : memref<68x128xf32, #tpu.memory_space<vmem>>, vector<16x128xf32>
    %16 = tpu.concatenate %14, %15 in 0 : vector<16x128xf32>, vector<16x128xf32> -> vector<32x128xf32>
    %c1 = arith.constant 1 : index
    %c0_13 = arith.constant 0 : index
    %17 = tpu.strided_load %arg1[%c1, %c0_13] {strides = array<i32: 2, 1>} : memref<68x128xf32, #tpu.memory_space<vmem>>, vector<16x128xf32>
    %c35 = arith.constant 35 : index
    %c0_14 = arith.constant 0 : index
    %18 = tpu.strided_load %arg1[%c35, %c0_14] {strides = array<i32: 2, 1>} : memref<68x128xf32, #tpu.memory_space<vmem>>, vector<16x128xf32>
    %19 = tpu.concatenate %17, %18 in 0 : vector<16x128xf32>, vector<16x128xf32> -> vector<32x128xf32>
    %c2 = arith.constant 2 : index
    %c0_15 = arith.constant 0 : index
    %20 = tpu.strided_load %arg1[%c2, %c0_15] {strides = array<i32: 2, 1>} : memref<68x128xf32, #tpu.memory_space<vmem>>, vector<16x128xf32>
    %c36 = arith.constant 36 : index
    %c0_16 = arith.constant 0 : index
    %21 = tpu.strided_load %arg1[%c36, %c0_16] {strides = array<i32: 2, 1>} : memref<68x128xf32, #tpu.memory_space<vmem>>, vector<16x128xf32>
    %22 = tpu.concatenate %20, %21 in 0 : vector<16x128xf32>, vector<16x128xf32> -> vector<32x128xf32>
    %c3 = arith.constant 3 : index
    %c0_17 = arith.constant 0 : index
    %23 = tpu.strided_load %arg1[%c3, %c0_17] {strides = array<i32: 2, 1>} : memref<68x128xf32, #tpu.memory_space<vmem>>, vector<16x128xf32>
    %c37 = arith.constant 37 : index
    %c0_18 = arith.constant 0 : index
    %24 = tpu.strided_load %arg1[%c37, %c0_18] {strides = array<i32: 2, 1>} : memref<68x128xf32, #tpu.memory_space<vmem>>, vector<16x128xf32>
    %25 = tpu.concatenate %23, %24 in 0 : vector<16x128xf32>, vector<16x128xf32> -> vector<32x128xf32>
    %26 = tpu.concatenate %16, %19, %22, %25 in 1 : vector<32x128xf32>, vector<32x128xf32>, vector<32x128xf32>, vector<32x128xf32> -> vector<32x512xf32>
    %27 = arith.truncf %26 : vector<32x512xf32> to vector<32x512xbf16>
    %c0_19 = arith.constant 0 : index
    %c0_20 = arith.constant 0 : index
    %28 = vector.load %arg2[%c0_19, %c0_20] : memref<512x128xbf16, #tpu.memory_space<vmem>>, vector<512x128xbf16>
    %cst_21 = arith.constant dense<0.000000e+00> : vector<32x128xf32>
    %29 = tpu.matmul %27, %28, %cst_21 {dimension_numbers = #tpu.dot_dimension_numbers<[1], [0], [0], [1], [0, 0, 1, 1], [], []>} : vector<32x512xbf16>, vector<512x128xbf16>, vector<32x128xf32> -> vector<32x128xf32>
    %c0_22 = arith.constant 0 : index
    %c0_23 = arith.constant 0 : index
    %30 = vector.load %arg3[%c0_22, %c0_23] : memref<1x128xf32, #tpu.memory_space<vmem>>, vector<1x128xf32>
    %31 = vector.broadcast %30 : vector<1x128xf32> to vector<32x128xf32>
    %32 = arith.addf %29, %31 : vector<32x128xf32>
    %cst_24 = arith.constant 0.000000e+00 : f32
    %33 = vector.broadcast %cst_24 : f32 to vector<32x128xf32>
    %34 = arith.cmpf ogt, %32, %33 : vector<32x128xf32>
    %cst_25 = arith.constant 2.000000e-01 : f32
    %35 = vector.broadcast %cst_25 : f32 to vector<32x128xf32>
    %36 = arith.mulf %35, %32 : vector<32x128xf32>
    %37 = arith.select %34, %32, %36 : vector<32x128xi1>, vector<32x128xf32>
    %38 = vector.extract_strided_slice %37 {offsets = [0, 0], sizes = [16, 128], strides = [1, 1]} : vector<32x128xf32> to vector<16x128xf32>
    %c1_26 = arith.constant 1 : index
    %c0_27 = arith.constant 0 : index
    %39 = vector.load %arg20[%c1_26, %c0_27] : memref<36x128xf32, #tpu.memory_space<vmem>>, vector<16x128xf32>
    tpu.vector_store %arg20[%c1_26, %c0_27], %38 {strides = array<i32>} : memref<36x128xf32, #tpu.memory_space<vmem>>, vector<16x128xf32>,
    %40 = vector.extract_strided_slice %37 {offsets = [16, 0], sizes = [16, 128], strides = [1, 1]} : vector<32x128xf32> to vector<16x128xf32>
    %c19 = arith.constant 19 : index
    %c0_28 = arith.constant 0 : index
    %41 = vector.load %arg20[%c19, %c0_28] : memref<36x128xf32, #tpu.memory_space<vmem>>, vector<16x128xf32>
    tpu.vector_store %arg20[%c19, %c0_28], %40 {strides = array<i32>} : memref<36x128xf32, #tpu.memory_space<vmem>>, vector<16x128xf32>,
    %c0_29 = arith.constant 0 : index
    %c0_30 = arith.constant 0 : index
    %42 = tpu.strided_load %arg20[%c0_29, %c0_30] {strides = array<i32: 2, 1>} : memref<36x128xf32, #tpu.memory_space<vmem>>, vector<8x128xf32>
    %c18 = arith.constant 18 : index
    %c0_31 = arith.constant 0 : index
    %43 = tpu.strided_load %arg20[%c18, %c0_31] {strides = array<i32: 2, 1>} : memref<36x128xf32, #tpu.memory_space<vmem>>, vector<8x128xf32>
    %44 = tpu.concatenate %42, %43 in 0 : vector<8x128xf32>, vector<8x128xf32> -> vector<16x128xf32>
    %c1_32 = arith.constant 1 : index
    %c0_33 = arith.constant 0 : index
    %45 = tpu.strided_load %arg20[%c1_32, %c0_33] {strides = array<i32: 2, 1>} : memref<36x128xf32, #tpu.memory_space<vmem>>, vector<8x128xf32>
    %c19_34 = arith.constant 19 : index
    %c0_35 = arith.constant 0 : index
    %46 = tpu.strided_load %arg20[%c19_34, %c0_35] {strides = array<i32: 2, 1>} : memref<36x128xf32, #tpu.memory_space<vmem>>, vector<8x128xf32>
    %47 = tpu.concatenate %45, %46 in 0 : vector<8x128xf32>, vector<8x128xf32> -> vector<16x128xf32>
    %c2_36 = arith.constant 2 : index
    %c0_37 = arith.constant 0 : index
    %48 = tpu.strided_load %arg20[%c2_36, %c0_37] {strides = array<i32: 2, 1>} : memref<36x128xf32, #tpu.memory_space<vmem>>, vector<8x128xf32>
    %c20 = arith.constant 20 : index
    %c0_38 = arith.constant 0 : index
    %49 = tpu.strided_load %arg20[%c20, %c0_38] {strides = array<i32: 2, 1>} : memref<36x128xf32, #tpu.memory_space<vmem>>, vector<8x128xf32>
    %50 = tpu.concatenate %48, %49 in 0 : vector<8x128xf32>, vector<8x128xf32> -> vector<16x128xf32>
    %c3_39 = arith.constant 3 : index
    %c0_40 = arith.constant 0 : index
    %51 = tpu.strided_load %arg20[%c3_39, %c0_40] {strides = array<i32: 2, 1>} : memref<36x128xf32, #tpu.memory_space<vmem>>, vector<8x128xf32>
    %c21 = arith.constant 21 : index
    %c0_41 = arith.constant 0 : index
    %52 = tpu.strided_load %arg20[%c21, %c0_41] {strides = array<i32: 2, 1>} : memref<36x128xf32, #tpu.memory_space<vmem>>, vector<8x128xf32>
    %53 = tpu.concatenate %51, %52 in 0 : vector<8x128xf32>, vector<8x128xf32> -> vector<16x128xf32>
    %54 = tpu.concatenate %44, %47, %50, %53 in 1 : vector<16x128xf32>, vector<16x128xf32>, vector<16x128xf32>, vector<16x128xf32> -> vector<16x512xf32>
    %55 = arith.truncf %54 : vector<16x512xf32> to vector<16x512xbf16>
    %c0_i32_42 = arith.constant 0 : i32
    %56 = tpu.memref_slice %arg19[%c0_i32_42] : memref<3x!tpu.dma_semaphore, #tpu.memory_space<semaphore_mem>> -> memref<1x!tpu.dma_semaphore, #tpu.memory_space<semaphore_mem>>
    %57 = tpu.memref_squeeze %56 : memref<1x!tpu.dma_semaphore, #tpu.memory_space<semaphore_mem>> -> memref<!tpu.dma_semaphore, #tpu.memory_space<semaphore_mem>>
    tpu.wait_dma2 semaphore(%57 : memref<!tpu.dma_semaphore, #tpu.memory_space<semaphore_mem>>) src(%arg4 : memref<512x128xbf16, #tpu.memory_space<any>>) dst(%arg16 : memref<512x128xbf16, #tpu.memory_space<vmem>>)
    %c0_43 = arith.constant 0 : index
    %c0_44 = arith.constant 0 : index
    %58 = vector.load %arg16[%c0_43, %c0_44] : memref<512x128xbf16, #tpu.memory_space<vmem>>, vector<512x128xbf16>
    %cst_45 = arith.constant dense<0.000000e+00> : vector<16x128xf32>
    %59 = tpu.matmul %55, %58, %cst_45 {dimension_numbers = #tpu.dot_dimension_numbers<[1], [0], [0], [1], [0, 0, 1, 1], [], []>} : vector<16x512xbf16>, vector<512x128xbf16>, vector<16x128xf32> -> vector<16x128xf32>
    %60 = tpu.iota {dimensions = array<i32: 0>} : vector<128x128xi32>
    %61 = tpu.iota {dimensions = array<i32: 1>} : vector<128x128xi32>
    %c15_i32 = arith.constant 15 : i32
    %62 = vector.broadcast %c15_i32 : i32 to vector<128x128xi32>
    %63 = arith.andi %60, %62 : vector<128x128xi32>
    %c15_i32_46 = arith.constant 15 : i32
    %64 = vector.broadcast %c15_i32_46 : i32 to vector<128x128xi32>
    %65 = arith.andi %61, %64 : vector<128x128xi32>
    %66 = arith.cmpi eq, %63, %65 : vector<128x128xi32>
    %cst_47 = arith.constant 7.812500e-03 : f32
    %cst_48 = arith.constant 0.000000e+00 : f32
    %67 = vector.broadcast %cst_47 : f32 to vector<128x128xf32>
    %68 = vector.broadcast %cst_48 : f32 to vector<128x128xf32>
    %69 = arith.select %66, %67, %68 : vector<128x128xi1>, vector<128x128xf32>
    %cst_49 = arith.constant dense<0.000000e+00> : vector<16x128xf32>
    %70 = tpu.matmul %59, %69, %cst_49 {dimension_numbers = #tpu.dot_dimension_numbers<[1], [0], [0], [1], [0, 0, 1, 1], [], []>} : vector<16x128xf32>, vector<128x128xf32>, vector<16x128xf32> -> vector<16x128xf32>
    %cst_50 = arith.constant dense<0.000000e+00> : vector<128xf32>
    %71 = vector.multi_reduction <add>, %70, %cst_50 [0] : vector<16x128xf32> to vector<128xf32>
    %72 = vector.shape_cast %71 : vector<128xf32> to vector<1x128xf32>
    %73 = vector.broadcast %72 : vector<1x128xf32> to vector<16x128xf32>
    %74 = arith.subf %59, %73 : vector<16x128xf32>
    %75 = arith.mulf %74, %74 : vector<16x128xf32>
    %cst_51 = arith.constant dense<0.000000e+00> : vector<16x128xf32>
    %76 = tpu.matmul %75, %69, %cst_51 {dimension_numbers = #tpu.dot_dimension_numbers<[1], [0], [0], [1], [0, 0, 1, 1], [], []>} : vector<16x128xf32>, vector<128x128xf32>, vector<16x128xf32> -> vector<16x128xf32>
    %cst_52 = arith.constant dense<0.000000e+00> : vector<128xf32>
    %77 = vector.multi_reduction <add>, %76, %cst_52 [0] : vector<16x128xf32> to vector<128xf32>
    %78 = vector.shape_cast %77 : vector<128xf32> to vector<1x128xf32>
    %cst_53 = arith.constant 0.000000e+00 : f32
    %79 = vector.broadcast %cst_53 : f32 to vector<1x128xf32>
    %80 = arith.maximumf %78, %79 : vector<1x128xf32>
    %cst_54 = arith.constant 9.99999974E-6 : f32
    %81 = vector.broadcast %cst_54 : f32 to vector<1x128xf32>
    %82 = arith.addf %80, %81 : vector<1x128xf32>
    %83 = math.rsqrt %82 : vector<1x128xf32>
    %84 = vector.broadcast %83 : vector<1x128xf32> to vector<16x128xf32>
    %85 = arith.mulf %74, %84 : vector<16x128xf32>
    %c0_55 = arith.constant 0 : index
    %c0_56 = arith.constant 0 : index
    %86 = vector.load %arg5[%c0_55, %c0_56] : memref<1x128xf32, #tpu.memory_space<vmem>>, vector<1x128xf32>
    %87 = vector.broadcast %86 : vector<1x128xf32> to vector<16x128xf32>
    %88 = arith.mulf %85, %87 : vector<16x128xf32>
    %c0_57 = arith.constant 0 : index
    %c0_58 = arith.constant 0 : index
    %89 = vector.load %arg6[%c0_57, %c0_58] : memref<1x128xf32, #tpu.memory_space<vmem>>, vector<1x128xf32>
    %90 = vector.broadcast %89 : vector<1x128xf32> to vector<16x128xf32>
    %91 = arith.addf %88, %90 : vector<16x128xf32>
    %cst_59 = arith.constant 0.000000e+00 : f32
    %92 = vector.broadcast %cst_59 : f32 to vector<16x128xf32>
    %93 = arith.cmpf ogt, %91, %92 : vector<16x128xf32>
    %cst_60 = arith.constant 2.000000e-01 : f32
    %94 = vector.broadcast %cst_60 : f32 to vector<16x128xf32>
    %95 = arith.mulf %94, %91 : vector<16x128xf32>
    %96 = arith.select %93, %91, %95 : vector<16x128xi1>, vector<16x128xf32>
    %97 = vector.extract_strided_slice %96 {offsets = [0, 0], sizes = [8, 128], strides = [1, 1]} : vector<16x128xf32> to vector<8x128xf32>
    %c1_61 = arith.constant 1 : index
    %c0_62 = arith.constant 0 : index
    %98 = vector.load %arg21[%c1_61, %c0_62] : memref<20x128xf32, #tpu.memory_space<vmem>>, vector<8x128xf32>
    tpu.vector_store %arg21[%c1_61, %c0_62], %97 {strides = array<i32>} : memref<20x128xf32, #tpu.memory_space<vmem>>, vector<8x128xf32>,
    %99 = vector.extract_strided_slice %96 {offsets = [8, 0], sizes = [8, 128], strides = [1, 1]} : vector<16x128xf32> to vector<8x128xf32>
    %c11 = arith.constant 11 : index
    %c0_63 = arith.constant 0 : index
    %100 = vector.load %arg21[%c11, %c0_63] : memref<20x128xf32, #tpu.memory_space<vmem>>, vector<8x128xf32>
    tpu.vector_store %arg21[%c11, %c0_63], %99 {strides = array<i32>} : memref<20x128xf32, #tpu.memory_space<vmem>>, vector<8x128xf32>,
    %c0_64 = arith.constant 0 : index
    %c0_65 = arith.constant 0 : index
    %101 = tpu.strided_load %arg21[%c0_64, %c0_65] {strides = array<i32: 2, 1>} : memref<20x128xf32, #tpu.memory_space<vmem>>, vector<4x128xf32>
    %c10 = arith.constant 10 : index
    %c0_66 = arith.constant 0 : index
    %102 = tpu.strided_load %arg21[%c10, %c0_66] {strides = array<i32: 2, 1>} : memref<20x128xf32, #tpu.memory_space<vmem>>, vector<4x128xf32>
    %103 = tpu.concatenate %101, %102 in 0 : vector<4x128xf32>, vector<4x128xf32> -> vector<8x128xf32>
    %c1_67 = arith.constant 1 : index
    %c0_68 = arith.constant 0 : index
    %104 = tpu.strided_load %arg21[%c1_67, %c0_68] {strides = array<i32: 2, 1>} : memref<20x128xf32, #tpu.memory_space<vmem>>, vector<4x128xf32>
    %c11_69 = arith.constant 11 : index
    %c0_70 = arith.constant 0 : index
    %105 = tpu.strided_load %arg21[%c11_69, %c0_70] {strides = array<i32: 2, 1>} : memref<20x128xf32, #tpu.memory_space<vmem>>, vector<4x128xf32>
    %106 = tpu.concatenate %104, %105 in 0 : vector<4x128xf32>, vector<4x128xf32> -> vector<8x128xf32>
    %c2_71 = arith.constant 2 : index
    %c0_72 = arith.constant 0 : index
    %107 = tpu.strided_load %arg21[%c2_71, %c0_72] {strides = array<i32: 2, 1>} : memref<20x128xf32, #tpu.memory_space<vmem>>, vector<4x128xf32>
    %c12 = arith.constant 12 : index
    %c0_73 = arith.constant 0 : index
    %108 = tpu.strided_load %arg21[%c12, %c0_73] {strides = array<i32: 2, 1>} : memref<20x128xf32, #tpu.memory_space<vmem>>, vector<4x128xf32>
    %109 = tpu.concatenate %107, %108 in 0 : vector<4x128xf32>, vector<4x128xf32> -> vector<8x128xf32>
    %c3_74 = arith.constant 3 : index
    %c0_75 = arith.constant 0 : index
    %110 = tpu.strided_load %arg21[%c3_74, %c0_75] {strides = array<i32: 2, 1>} : memref<20x128xf32, #tpu.memory_space<vmem>>, vector<4x128xf32>
    %c13 = arith.constant 13 : index
    %c0_76 = arith.constant 0 : index
    %111 = tpu.strided_load %arg21[%c13, %c0_76] {strides = array<i32: 2, 1>} : memref<20x128xf32, #tpu.memory_space<vmem>>, vector<4x128xf32>
    %112 = tpu.concatenate %110, %111 in 0 : vector<4x128xf32>, vector<4x128xf32> -> vector<8x128xf32>
    %113 = tpu.concatenate %103, %106, %109, %112 in 1 : vector<8x128xf32>, vector<8x128xf32>, vector<8x128xf32>, vector<8x128xf32> -> vector<8x512xf32>
    %114 = arith.truncf %113 : vector<8x512xf32> to vector<8x512xbf16>
    %c1_i32_77 = arith.constant 1 : i32
    %115 = tpu.memref_slice %arg19[%c1_i32_77] : memref<3x!tpu.dma_semaphore, #tpu.memory_space<semaphore_mem>> -> memref<1x!tpu.dma_semaphore, #tpu.memory_space<semaphore_mem>>
    %116 = tpu.memref_squeeze %115 : memref<1x!tpu.dma_semaphore, #tpu.memory_space<semaphore_mem>> -> memref<!tpu.dma_semaphore, #tpu.memory_space<semaphore_mem>>
    tpu.wait_dma2 semaphore(%116 : memref<!tpu.dma_semaphore, #tpu.memory_space<semaphore_mem>>) src(%arg7 : memref<512x128xbf16, #tpu.memory_space<any>>) dst(%arg17 : memref<512x128xbf16, #tpu.memory_space<vmem>>)
    %c0_78 = arith.constant 0 : index
    %c0_79 = arith.constant 0 : index
    %117 = vector.load %arg17[%c0_78, %c0_79] : memref<512x128xbf16, #tpu.memory_space<vmem>>, vector<512x128xbf16>
    %cst_80 = arith.constant dense<0.000000e+00> : vector<8x128xf32>
    %118 = tpu.matmul %114, %117, %cst_80 {dimension_numbers = #tpu.dot_dimension_numbers<[1], [0], [0], [1], [0, 0, 1, 1], [], []>} : vector<8x512xbf16>, vector<512x128xbf16>, vector<8x128xf32> -> vector<8x128xf32>
    %119 = tpu.iota {dimensions = array<i32: 0>} : vector<128x128xi32>
    %120 = tpu.iota {dimensions = array<i32: 1>} : vector<128x128xi32>
    %c31_i32 = arith.constant 31 : i32
    %121 = vector.broadcast %c31_i32 : i32 to vector<128x128xi32>
    %122 = arith.andi %119, %121 : vector<128x128xi32>
    %c31_i32_81 = arith.constant 31 : i32
    %123 = vector.broadcast %c31_i32_81 : i32 to vector<128x128xi32>
    %124 = arith.andi %120, %123 : vector<128x128xi32>
    %125 = arith.cmpi eq, %122, %124 : vector<128x128xi32>
    %cst_82 = arith.constant 3.125000e-02 : f32
    %cst_83 = arith.constant 0.000000e+00 : f32
    %126 = vector.broadcast %cst_82 : f32 to vector<128x128xf32>
    %127 = vector.broadcast %cst_83 : f32 to vector<128x128xf32>
    %128 = arith.select %125, %126, %127 : vector<128x128xi1>, vector<128x128xf32>
    %cst_84 = arith.constant dense<0.000000e+00> : vector<8x128xf32>
    %129 = tpu.matmul %118, %128, %cst_84 {dimension_numbers = #tpu.dot_dimension_numbers<[1], [0], [0], [1], [0, 0, 1, 1], [], []>} : vector<8x128xf32>, vector<128x128xf32>, vector<8x128xf32> -> vector<8x128xf32>
    %cst_85 = arith.constant dense<0.000000e+00> : vector<128xf32>
    %130 = vector.multi_reduction <add>, %129, %cst_85 [0] : vector<8x128xf32> to vector<128xf32>
    %131 = vector.shape_cast %130 : vector<128xf32> to vector<1x128xf32>
    %132 = vector.broadcast %131 : vector<1x128xf32> to vector<8x128xf32>
    %133 = arith.subf %118, %132 : vector<8x128xf32>
    %134 = arith.mulf %133, %133 : vector<8x128xf32>
    %cst_86 = arith.constant dense<0.000000e+00> : vector<8x128xf32>
    %135 = tpu.matmul %134, %128, %cst_86 {dimension_numbers = #tpu.dot_dimension_numbers<[1], [0], [0], [1], [0, 0, 1, 1], [], []>} : vector<8x128xf32>, vector<128x128xf32>, vector<8x128xf32> -> vector<8x128xf32>
    %cst_87 = arith.constant dense<0.000000e+00> : vector<128xf32>
    %136 = vector.multi_reduction <add>, %135, %cst_87 [0] : vector<8x128xf32> to vector<128xf32>
    %137 = vector.shape_cast %136 : vector<128xf32> to vector<1x128xf32>
    %cst_88 = arith.constant 0.000000e+00 : f32
    %138 = vector.broadcast %cst_88 : f32 to vector<1x128xf32>
    %139 = arith.maximumf %137, %138 : vector<1x128xf32>
    %cst_89 = arith.constant 9.99999974E-6 : f32
    %140 = vector.broadcast %cst_89 : f32 to vector<1x128xf32>
    %141 = arith.addf %139, %140 : vector<1x128xf32>
    %142 = math.rsqrt %141 : vector<1x128xf32>
    %143 = vector.broadcast %142 : vector<1x128xf32> to vector<8x128xf32>
    %144 = arith.mulf %133, %143 : vector<8x128xf32>
    %c0_90 = arith.constant 0 : index
    %c0_91 = arith.constant 0 : index
    %145 = vector.load %arg8[%c0_90, %c0_91] : memref<1x128xf32, #tpu.memory_space<vmem>>, vector<1x128xf32>
    %146 = vector.broadcast %145 : vector<1x128xf32> to vector<8x128xf32>
    %147 = arith.mulf %144, %146 : vector<8x128xf32>
    %c0_92 = arith.constant 0 : index
    %c0_93 = arith.constant 0 : index
    %148 = vector.load %arg9[%c0_92, %c0_93] : memref<1x128xf32, #tpu.memory_space<vmem>>, vector<1x128xf32>
    %149 = vector.broadcast %148 : vector<1x128xf32> to vector<8x128xf32>
    %150 = arith.addf %147, %149 : vector<8x128xf32>
    %cst_94 = arith.constant 0.000000e+00 : f32
    %151 = vector.broadcast %cst_94 : f32 to vector<8x128xf32>
    %152 = arith.cmpf ogt, %150, %151 : vector<8x128xf32>
    %cst_95 = arith.constant 2.000000e-01 : f32
    %153 = vector.broadcast %cst_95 : f32 to vector<8x128xf32>
    %154 = arith.mulf %153, %150 : vector<8x128xf32>
    %155 = arith.select %152, %150, %154 : vector<8x128xi1>, vector<8x128xf32>
    %156 = vector.extract_strided_slice %155 {offsets = [0, 0], sizes = [4, 128], strides = [1, 1]} : vector<8x128xf32> to vector<4x128xf32>
    %c1_96 = arith.constant 1 : index
    %c0_97 = arith.constant 0 : index
    %157 = vector.load %arg22[%c1_96, %c0_97] : memref<12x128xf32, #tpu.memory_space<vmem>>, vector<4x128xf32>
    tpu.vector_store %arg22[%c1_96, %c0_97], %156 {strides = array<i32>} : memref<12x128xf32, #tpu.memory_space<vmem>>, vector<4x128xf32>,
    %158 = vector.extract_strided_slice %155 {offsets = [4, 0], sizes = [4, 128], strides = [1, 1]} : vector<8x128xf32> to vector<4x128xf32>
    %c7 = arith.constant 7 : index
    %c0_98 = arith.constant 0 : index
    %159 = vector.load %arg22[%c7, %c0_98] : memref<12x128xf32, #tpu.memory_space<vmem>>, vector<4x128xf32>
    tpu.vector_store %arg22[%c7, %c0_98], %158 {strides = array<i32>} : memref<12x128xf32, #tpu.memory_space<vmem>>, vector<4x128xf32>,
    %c0_99 = arith.constant 0 : index
    %c0_100 = arith.constant 0 : index
    %160 = vector.load %arg22[%c0_99, %c0_100] : memref<12x128xf32, #tpu.memory_space<vmem>>, vector<3x128xf32>
    %c6 = arith.constant 6 : index
    %c0_101 = arith.constant 0 : index
    %161 = vector.load %arg22[%c6, %c0_101] : memref<12x128xf32, #tpu.memory_space<vmem>>, vector<3x128xf32>
    %162 = tpu.concatenate %160, %161 in 0 : vector<3x128xf32>, vector<3x128xf32> -> vector<6x128xf32>
    %c1_102 = arith.constant 1 : index
    %c0_103 = arith.constant 0 : index
    %163 = vector.load %arg22[%c1_102, %c0_103] : memref<12x128xf32, #tpu.memory_space<vmem>>, vector<3x128xf32>
    %c7_104 = arith.constant 7 : index
    %c0_105 = arith.constant 0 : index
    %164 = vector.load %arg22[%c7_104, %c0_105] : memref<12x128xf32, #tpu.memory_space<vmem>>, vector<3x128xf32>
    %165 = tpu.concatenate %163, %164 in 0 : vector<3x128xf32>, vector<3x128xf32> -> vector<6x128xf32>
    %c2_106 = arith.constant 2 : index
    %c0_107 = arith.constant 0 : index
    %166 = vector.load %arg22[%c2_106, %c0_107] : memref<12x128xf32, #tpu.memory_space<vmem>>, vector<3x128xf32>
    %c8 = arith.constant 8 : index
    %c0_108 = arith.constant 0 : index
    %167 = vector.load %arg22[%c8, %c0_108] : memref<12x128xf32, #tpu.memory_space<vmem>>, vector<3x128xf32>
    %168 = tpu.concatenate %166, %167 in 0 : vector<3x128xf32>, vector<3x128xf32> -> vector<6x128xf32>
    %c3_109 = arith.constant 3 : index
    %c0_110 = arith.constant 0 : index
    %169 = vector.load %arg22[%c3_109, %c0_110] : memref<12x128xf32, #tpu.memory_space<vmem>>, vector<3x128xf32>
    %c9 = arith.constant 9 : index
    %c0_111 = arith.constant 0 : index
    %170 = vector.load %arg22[%c9, %c0_111] : memref<12x128xf32, #tpu.memory_space<vmem>>, vector<3x128xf32>
    %171 = tpu.concatenate %169, %170 in 0 : vector<3x128xf32>, vector<3x128xf32> -> vector<6x128xf32>
    %172 = tpu.concatenate %162, %165, %168, %171 in 1 : vector<6x128xf32>, vector<6x128xf32>, vector<6x128xf32>, vector<6x128xf32> -> vector<6x512xf32>
    %173 = arith.truncf %172 : vector<6x512xf32> to vector<6x512xbf16>
    %c2_i32_112 = arith.constant 2 : i32
    %174 = tpu.memref_slice %arg19[%c2_i32_112] : memref<3x!tpu.dma_semaphore, #tpu.memory_space<semaphore_mem>> -> memref<1x!tpu.dma_semaphore, #tpu.memory_space<semaphore_mem>>
    %175 = tpu.memref_squeeze %174 : memref<1x!tpu.dma_semaphore, #tpu.memory_space<semaphore_mem>> -> memref<!tpu.dma_semaphore, #tpu.memory_space<semaphore_mem>>
    tpu.wait_dma2 semaphore(%175 : memref<!tpu.dma_semaphore, #tpu.memory_space<semaphore_mem>>) src(%arg10 : memref<512x192xbf16, #tpu.memory_space<any>>) dst(%arg18 : memref<512x192xbf16, #tpu.memory_space<vmem>>)
    %c0_113 = arith.constant 0 : index
    %c0_114 = arith.constant 0 : index
    %176 = vector.load %arg18[%c0_113, %c0_114] : memref<512x192xbf16, #tpu.memory_space<vmem>>, vector<512x192xbf16>
    %cst_115 = arith.constant dense<0.000000e+00> : vector<6x192xf32>
    %177 = tpu.matmul %173, %176, %cst_115 {dimension_numbers = #tpu.dot_dimension_numbers<[1], [0], [0], [1], [0, 0, 1, 1], [], []>} : vector<6x512xbf16>, vector<512x192xbf16>, vector<6x192xf32> -> vector<6x192xf32>
    %178 = tpu.iota {dimensions = array<i32: 0>} : vector<192x192xi32>
    %179 = tpu.iota {dimensions = array<i32: 1>} : vector<192x192xi32>
    %c63_i32 = arith.constant 63 : i32
    %180 = vector.broadcast %c63_i32 : i32 to vector<192x192xi32>
    %181 = arith.andi %178, %180 : vector<192x192xi32>
    %c63_i32_116 = arith.constant 63 : i32
    %182 = vector.broadcast %c63_i32_116 : i32 to vector<192x192xi32>
    %183 = arith.andi %179, %182 : vector<192x192xi32>
    %184 = arith.cmpi eq, %181, %183 : vector<192x192xi32>
    %cst_117 = arith.constant 0.055555556 : f32
    %cst_118 = arith.constant 0.000000e+00 : f32
    %185 = vector.broadcast %cst_117 : f32 to vector<192x192xf32>
    %186 = vector.broadcast %cst_118 : f32 to vector<192x192xf32>
    %187 = arith.select %184, %185, %186 : vector<192x192xi1>, vector<192x192xf32>
    %cst_119 = arith.constant dense<0.000000e+00> : vector<6x192xf32>
    %188 = tpu.matmul %177, %187, %cst_119 {dimension_numbers = #tpu.dot_dimension_numbers<[1], [0], [0], [1], [0, 0, 1, 1], [], []>} : vector<6x192xf32>, vector<192x192xf32>, vector<6x192xf32> -> vector<6x192xf32>
    %cst_120 = arith.constant dense<0.000000e+00> : vector<192xf32>
    %189 = vector.multi_reduction <add>, %188, %cst_120 [0] : vector<6x192xf32> to vector<192xf32>
    %190 = vector.shape_cast %189 : vector<192xf32> to vector<1x192xf32>
    %191 = vector.broadcast %190 : vector<1x192xf32> to vector<6x192xf32>
    %192 = arith.subf %177, %191 : vector<6x192xf32>
    %193 = arith.mulf %192, %192 : vector<6x192xf32>
    %cst_121 = arith.constant dense<0.000000e+00> : vector<6x192xf32>
    %194 = tpu.matmul %193, %187, %cst_121 {dimension_numbers = #tpu.dot_dimension_numbers<[1], [0], [0], [1], [0, 0, 1, 1], [], []>} : vector<6x192xf32>, vector<192x192xf32>, vector<6x192xf32> -> vector<6x192xf32>
    %cst_122 = arith.constant dense<0.000000e+00> : vector<192xf32>
    %195 = vector.multi_reduction <add>, %194, %cst_122 [0] : vector<6x192xf32> to vector<192xf32>
    %196 = vector.shape_cast %195 : vector<192xf32> to vector<1x192xf32>
    %cst_123 = arith.constant 0.000000e+00 : f32
    %197 = vector.broadcast %cst_123 : f32 to vector<1x192xf32>
    %198 = arith.maximumf %196, %197 : vector<1x192xf32>
    %cst_124 = arith.constant 9.99999974E-6 : f32
    %199 = vector.broadcast %cst_124 : f32 to vector<1x192xf32>
    %200 = arith.addf %198, %199 : vector<1x192xf32>
    %201 = math.rsqrt %200 : vector<1x192xf32>
    %202 = vector.broadcast %201 : vector<1x192xf32> to vector<6x192xf32>
    %203 = arith.mulf %192, %202 : vector<6x192xf32>
    %c0_125 = arith.constant 0 : index
    %c0_126 = arith.constant 0 : index
    %204 = vector.load %arg11[%c0_125, %c0_126] : memref<1x192xf32, #tpu.memory_space<vmem>>, vector<1x192xf32>
    %205 = vector.broadcast %204 : vector<1x192xf32> to vector<6x192xf32>
    %206 = arith.mulf %203, %205 : vector<6x192xf32>
    %c0_127 = arith.constant 0 : index
    %c0_128 = arith.constant 0 : index
    %207 = vector.load %arg12[%c0_127, %c0_128] : memref<1x192xf32, #tpu.memory_space<vmem>>, vector<1x192xf32>
    %208 = vector.broadcast %207 : vector<1x192xf32> to vector<6x192xf32>
    %209 = arith.addf %206, %208 : vector<6x192xf32>
    %cst_129 = arith.constant 0.000000e+00 : f32
    %210 = vector.broadcast %cst_129 : f32 to vector<6x192xf32>
    %211 = arith.cmpf ogt, %209, %210 : vector<6x192xf32>
    %cst_130 = arith.constant 2.000000e-01 : f32
    %212 = vector.broadcast %cst_130 : f32 to vector<6x192xf32>
    %213 = arith.mulf %212, %209 : vector<6x192xf32>
    %214 = arith.select %211, %209, %213 : vector<6x192xi1>, vector<6x192xf32>
    %215 = vector.extract_strided_slice %214 {offsets = [0, 0], sizes = [3, 192], strides = [1, 1]} : vector<6x192xf32> to vector<3x192xf32>
    %c1_131 = arith.constant 1 : index
    %c0_132 = arith.constant 0 : index
    %216 = vector.load %arg23[%c1_131, %c0_132] : memref<10x192xf32, #tpu.memory_space<vmem>>, vector<3x192xf32>
    tpu.vector_store %arg23[%c1_131, %c0_132], %215 {strides = array<i32>} : memref<10x192xf32, #tpu.memory_space<vmem>>, vector<3x192xf32>,
    %217 = vector.extract_strided_slice %214 {offsets = [3, 0], sizes = [3, 192], strides = [1, 1]} : vector<6x192xf32> to vector<3x192xf32>
    %c6_133 = arith.constant 6 : index
    %c0_134 = arith.constant 0 : index
    %218 = vector.load %arg23[%c6_133, %c0_134] : memref<10x192xf32, #tpu.memory_space<vmem>>, vector<3x192xf32>
    tpu.vector_store %arg23[%c6_133, %c0_134], %217 {strides = array<i32>} : memref<10x192xf32, #tpu.memory_space<vmem>>, vector<3x192xf32>,
    %c0_135 = arith.constant 0 : index
    %c0_136 = arith.constant 0 : index
    %219 = vector.load %arg23[%c0_135, %c0_136] : memref<10x192xf32, #tpu.memory_space<vmem>>, vector<2x192xf32>
    %c5 = arith.constant 5 : index
    %c0_137 = arith.constant 0 : index
    %220 = vector.load %arg23[%c5, %c0_137] : memref<10x192xf32, #tpu.memory_space<vmem>>, vector<2x192xf32>
    %221 = tpu.concatenate %219, %220 in 0 : vector<2x192xf32>, vector<2x192xf32> -> vector<4x192xf32>
    %c1_138 = arith.constant 1 : index
    %c0_139 = arith.constant 0 : index
    %222 = vector.load %arg23[%c1_138, %c0_139] : memref<10x192xf32, #tpu.memory_space<vmem>>, vector<2x192xf32>
    %c6_140 = arith.constant 6 : index
    %c0_141 = arith.constant 0 : index
    %223 = vector.load %arg23[%c6_140, %c0_141] : memref<10x192xf32, #tpu.memory_space<vmem>>, vector<2x192xf32>
    %224 = tpu.concatenate %222, %223 in 0 : vector<2x192xf32>, vector<2x192xf32> -> vector<4x192xf32>
    %c2_142 = arith.constant 2 : index
    %c0_143 = arith.constant 0 : index
    %225 = vector.load %arg23[%c2_142, %c0_143] : memref<10x192xf32, #tpu.memory_space<vmem>>, vector<2x192xf32>
    %c7_144 = arith.constant 7 : index
    %c0_145 = arith.constant 0 : index
    %226 = vector.load %arg23[%c7_144, %c0_145] : memref<10x192xf32, #tpu.memory_space<vmem>>, vector<2x192xf32>
    %227 = tpu.concatenate %225, %226 in 0 : vector<2x192xf32>, vector<2x192xf32> -> vector<4x192xf32>
    %c3_146 = arith.constant 3 : index
    %c0_147 = arith.constant 0 : index
    %228 = vector.load %arg23[%c3_146, %c0_147] : memref<10x192xf32, #tpu.memory_space<vmem>>, vector<2x192xf32>
    %c8_148 = arith.constant 8 : index
    %c0_149 = arith.constant 0 : index
    %229 = vector.load %arg23[%c8_148, %c0_149] : memref<10x192xf32, #tpu.memory_space<vmem>>, vector<2x192xf32>
    %230 = tpu.concatenate %228, %229 in 0 : vector<2x192xf32>, vector<2x192xf32> -> vector<4x192xf32>
    %231 = tpu.concatenate %221, %224, %227, %230 in 1 : vector<4x192xf32>, vector<4x192xf32>, vector<4x192xf32>, vector<4x192xf32> -> vector<4x768xf32>
    %232 = arith.truncf %231 : vector<4x768xf32> to vector<4x768xbf16>
    %c0_150 = arith.constant 0 : index
    %c0_151 = arith.constant 0 : index
    %233 = vector.load %arg13[%c0_150, %c0_151] : memref<768x2xbf16, #tpu.memory_space<vmem>>, vector<768x2xbf16>
    %cst_152 = arith.constant dense<0.000000e+00> : vector<4x2xf32>
    %234 = tpu.matmul %232, %233, %cst_152 {dimension_numbers = #tpu.dot_dimension_numbers<[1], [0], [0], [1], [0, 0, 1, 1], [], []>} : vector<4x768xbf16>, vector<768x2xbf16>, vector<4x2xf32> -> vector<4x2xf32>
    %c0_153 = arith.constant 0 : index
    %c0_154 = arith.constant 0 : index
    %235 = vector.load %arg14[%c0_153, %c0_154] : memref<1x2xf32, #tpu.memory_space<vmem>>, vector<1x2xf32>
    %236 = vector.broadcast %235 : vector<1x2xf32> to vector<4x2xf32>
    %237 = arith.addf %234, %236 : vector<4x2xf32>
    %c0_155 = arith.constant 0 : index
    %c0_156 = arith.constant 0 : index
    %238 = vector.load %arg15[%c0_155, %c0_156] : memref<4x2xf32, #tpu.memory_space<vmem>>, vector<4x2xf32>
    tpu.vector_store %arg15[%c0_155, %c0_156], %237 {strides = array<i32>} : memref<4x2xf32, #tpu.memory_space<vmem>>, vector<4x2xf32>,
    return
  }
  func.func @transform_0(%arg0: i32) -> (i32, i32) {
    %c0_i32 = arith.constant 0 : i32
    %c0_i32_0 = arith.constant 0 : i32
    %c0_i32_1 = arith.constant 0 : i32
    return %c0_i32, %c0_i32_0 : i32, i32
  }
  func.func @transform_1(%arg0: i32) -> (i32, i32) {
    %c0_i32 = arith.constant 0 : i32
    %c0_i32_0 = arith.constant 0 : i32
    %c0_i32_1 = arith.constant 0 : i32
    return %c0_i32, %c0_i32_0 : i32, i32
  }
  func.func @transform_2(%arg0: i32) -> (i32, i32) {
    %c0_i32 = arith.constant 0 : i32
    %c0_i32_0 = arith.constant 0 : i32
    %c0_i32_1 = arith.constant 0 : i32
    return %c0_i32, %c0_i32_0 : i32, i32
  }
  func.func @transform_4(%arg0: i32) -> (i32, i32) {
    %c0_i32 = arith.constant 0 : i32
    %c0_i32_0 = arith.constant 0 : i32
    %c0_i32_1 = arith.constant 0 : i32
    return %c0_i32, %c0_i32_0 : i32, i32
  }
  func.func @transform_5(%arg0: i32) -> (i32, i32) {
    %c0_i32 = arith.constant 0 : i32
    %c0_i32_0 = arith.constant 0 : i32
    %c0_i32_1 = arith.constant 0 : i32
    return %c0_i32, %c0_i32_0 : i32, i32
  }
  func.func @transform_7(%arg0: i32) -> (i32, i32) {
    %c0_i32 = arith.constant 0 : i32
    %c0_i32_0 = arith.constant 0 : i32
    %c0_i32_1 = arith.constant 0 : i32
    return %c0_i32, %c0_i32_0 : i32, i32
  }
  func.func @transform_8(%arg0: i32) -> (i32, i32) {
    %c0_i32 = arith.constant 0 : i32
    %c0_i32_0 = arith.constant 0 : i32
    %c0_i32_1 = arith.constant 0 : i32
    return %c0_i32, %c0_i32_0 : i32, i32
  }
  func.func @transform_10(%arg0: i32) -> (i32, i32) {
    %c0_i32 = arith.constant 0 : i32
    %c0_i32_0 = arith.constant 0 : i32
    %c0_i32_1 = arith.constant 0 : i32
    return %c0_i32, %c0_i32_0 : i32, i32
  }
  func.func @transform_11(%arg0: i32) -> (i32, i32) {
    %c0_i32 = arith.constant 0 : i32
    %c0_i32_0 = arith.constant 0 : i32
    %c0_i32_1 = arith.constant 0 : i32
    return %c0_i32, %c0_i32_0 : i32, i32
  }
  func.func @transform_12(%arg0: i32) -> (i32, i32) {
    %c0_i32 = arith.constant 0 : i32
    %c0_i32_0 = arith.constant 0 : i32
    %c0_i32_1 = arith.constant 0 : i32
    return %c0_i32, %c0_i32_0 : i32, i32
  }
  func.func @transform_13(%arg0: i32) -> (i32, i32) {
    %c0_i32 = arith.constant 0 : i32
    %c0_i32_0 = arith.constant 0 : i32
    %c0_i32_1 = arith.constant 0 : i32
    return %c0_i32, %c0_i32_0 : i32, i32
  }
  func.func @transform_14(%arg0: i32) -> (i32, i32) {
    %c0_i32 = arith.constant 0 : i32
    %c0_i32_0 = arith.constant 0 : i32
    %c0_i32_1 = arith.constant 0 : i32
    return %c0_i32, %c0_i32_0 : i32, i32
  }
}

</mosaic_0001>

<llo_original>
// kernel: forward.1
$region0: #{forward.1}
  #allocation0 [shape = 'u32[]', space=smem, size = 0x4, offset = 0x4, fixed_abs, tag = 'smem constant byte address 0x4 - core index']
  #allocation1 [shape = 'u32[72,128]{1,0:T(1,128)}', space=vmem, size = 0x9000, scoped, tag = 'internal scratch']
  #allocation2 [shape = 'bf16[512,128]{1,0:T(8,128)(2,1)}', space=vmem, size = 0x20000, scoped, tag = 'scratch operand']
  #allocation3 [shape = 'bf16[512,128]{1,0:T(8,128)(2,1)}', space=vmem, size = 0x20000, scoped, tag = 'scratch operand']
  #allocation4 [shape = 'bf16[512,192]{1,0:T(8,128)(2,1)}', space=vmem, size = 0x40000, scoped, tag = 'scratch operand']
  #allocation5 [shape = 's32[3]{0}', space=sflag, size = 0xc, scoped, tag = 'scratch operand']
  #allocation6 [shape = 'f32[36,128]{1,0:T(8,128)}', space=vmem, size = 0x5000, scoped, tag = 'scratch operand']
  #allocation7 [shape = 'f32[20,128]{1,0:T(8,128)}', space=vmem, size = 0x3000, scoped, tag = 'scratch operand']
  #allocation8 [shape = 'f32[12,128]{1,0:T(8,128)}', space=vmem, size = 0x2000, scoped, tag = 'scratch operand']
  #allocation9 [shape = 'f32[10,192]{1,0:T(8,128)}', space=vmem, size = 0x4000, scoped, tag = 'scratch operand']
  #allocation12 [shape = 's32[]', space=sflag, size = 0x4, offset = 0, fixed_abs, tag = 'sflag constant byte address 0x0 - dummy sync flag']
  #allocation13 [shape = 's32[]', space=sflag, size = 0x4, offset = 0, fixed_abs, tag = 'sflag constant byte address 0x0 - dummy sync flag']
  #allocation14 [shape = 's32[]', space=sflag, size = 0x4, offset = 0, fixed_abs, tag = 'sflag constant byte address 0x0 - dummy sync flag']
  #allocation15 [shape = 'u32[]', space=smem, size = 0x4, offset = 0x44, fixed_abs, tag = 'smem constant byte address 0x44 - assertion arg 0']
  #allocation16 [shape = 'u32[]', space=smem, size = 0x4, offset = 0x48, fixed_abs, tag = 'smem constant byte address 0x48 - assertion arg 1']
  #allocation17 [shape = 's32[]', space=sflag, size = 0x4, offset = 0, fixed_abs, tag = 'sflag constant byte address 0x0 - dummy sync flag']
  %s0 = inlined_call_operand.vmem [shape: f32[68,128], index: 0, kind: input, shape index: {}]
  %s1 = inlined_call_operand.vmem [shape: bf16[512,128], index: 1, kind: input, shape index: {}]
  %s2 = inlined_call_operand.vmem [shape: f32[1,128], index: 2, kind: input, shape index: {}]
  %s3 = inlined_call_operand.vmem [shape: bf16[512,128], index: 3, kind: input, shape index: {}]
  %s4 = inlined_call_operand.vmem [shape: f32[1,128], index: 4, kind: input, shape index: {}]
  %s5 = inlined_call_operand.vmem [shape: f32[1,128], index: 5, kind: input, shape index: {}, may-alias: {5,8}]
  %s6 = inlined_call_operand.hbm [shape: bf16[512,128], index: 6, kind: input, shape index: {}]
  %s7 = inlined_call_operand.vmem [shape: f32[1,128], index: 7, kind: input, shape index: {}]
  %s8 = inlined_call_operand.vmem [shape: f32[1,128], index: 8, kind: input, shape index: {}, may-alias: {5,8}]
  %s9 = inlined_call_operand.vmem [shape: bf16[512,192], index: 9, kind: input, shape index: {}]
  %s10 = inlined_call_operand.vmem [shape: f32[1,192], index: 10, kind: input, shape index: {}]
  %s11 = inlined_call_operand.vmem [shape: f32[1,192], index: 11, kind: input, shape index: {}]
  %s12 = inlined_call_operand.vmem [shape: bf16[768,2], index: 12, kind: input, shape index: {}]
  %s13 = inlined_call_operand.vmem [shape: f32[1,2], index: 13, kind: input, shape index: {}]
  %s14 = inlined_call_operand.hbm [shape: f32[4,2], index: 14, kind: output, shape index: {}]
  %s15 = sld [smem:[#allocation0]]
  $region96: #{forward.1} parent=0
    _
  %s17 = ssub.s32 1, %s15
  %s18 = scalar_select 0, %s17, %s15
  $region1: #{forward.1} parent=0
    #allocation10 [shape = 'u8[2048]{0}', space=vmem, size = 0x800, scoped, tag = 'output window, operand 0, single buffered']
    #allocation11 [shape = 's32[1]{0}', space=sflag, size = 0x4, scoped, tag = 'scoped memory for forward.1']
    %19 = vsyncpa [#allocation11], 0
    // Predicated region
    $region2: #{forward.1} parent=1 // pred_check
      _
    $region3: #{forward.1} parent=1 // pred_check_branch
      %21 = sbr.rel (0) target = $region5
    $region4: #{forward.1} parent=1 // pred_region
      _
    $region5: #{forward.1} parent=1 // pred_fallthru
      _
    // Predicated region
    $region6: #{forward.1} parent=1 // pred_check
      _
    $region7: #{forward.1} parent=1 // pred_check_branch
      %23 = sbr.rel (0) target = $region9
    $region8: #{forward.1} parent=1 // pred_region
      _
    $region9: #{forward.1} parent=1 // pred_fallthru
      _
    // Predicated region
    $region10: #{forward.1} parent=1 // pred_check
      _
    $region11: #{forward.1} parent=1 // pred_check_branch
      %25 = sbr.rel (0) target = $region13
    $region12: #{forward.1} parent=1 // pred_region
      _
    $region13: #{forward.1} parent=1 // pred_fallthru
      _
    // Predicated region
    $region14: #{forward.1} parent=1 // pred_check
      _
    $region15: #{forward.1} parent=1 // pred_check_branch
      %27 = sbr.rel (0) target = $region17
    $region16: #{forward.1} parent=1 // pred_region
      _
    $region17: #{forward.1} parent=1 // pred_fallthru
      _
    // Predicated region
    $region18: #{forward.1} parent=1 // pred_check
      _
    $region19: #{forward.1} parent=1 // pred_check_branch
      %29 = sbr.rel (0) target = $region21
    $region20: #{forward.1} parent=1 // pred_region
      _
    $region21: #{forward.1} parent=1 // pred_fallthru
      _
    // Predicated region
    $region22: #{forward.1} parent=1 // pred_check
      _
    $region23: #{forward.1} parent=1 // pred_check_branch
      %31 = sbr.rel (0) target = $region25
    $region24: #{forward.1} parent=1 // pred_region
      _
    $region25: #{forward.1} parent=1 // pred_fallthru
      _
    // Predicated region
    $region26: #{forward.1} parent=1 // pred_check
      _
    $region27: #{forward.1} parent=1 // pred_check_branch
      %33 = sbr.rel (0) target = $region29
    $region28: #{forward.1} parent=1 // pred_region
      _
    $region29: #{forward.1} parent=1 // pred_fallthru
      _
    // Predicated region
    $region30: #{forward.1} parent=1 // pred_check
      _
    $region31: #{forward.1} parent=1 // pred_check_branch
      %35 = sbr.rel (0) target = $region33
    $region32: #{forward.1} parent=1 // pred_region
      _
    $region33: #{forward.1} parent=1 // pred_fallthru
      _
    // Predicated region
    $region34: #{forward.1} parent=1 // pred_check
      _
    $region35: #{forward.1} parent=1 // pred_check_branch
      %37 = sbr.rel (0) target = $region37
    $region36: #{forward.1} parent=1 // pred_region
      _
    $region37: #{forward.1} parent=1 // pred_fallthru
      _
    // Predicated region
    $region38: #{forward.1} parent=1 // pred_check
      _
    $region39: #{forward.1} parent=1 // pred_check_branch
      %39 = sbr.rel (0) target = $region41
    $region40: #{forward.1} parent=1 // pred_region
      _
    $region41: #{forward.1} parent=1 // pred_fallthru
      _
    // Predicated region
    $region42: #{forward.1} parent=1 // pred_check
      _
    $region43: #{forward.1} parent=1 // pred_check_branch
      %41 = sbr.rel (0) target = $region45
    $region44: #{forward.1} parent=1 // pred_region
      _
    $region45: #{forward.1} parent=1 // pred_fallthru
      _
    // Predicated region
    $region46: #{forward.1} parent=1 // pred_check
      _
    $region47: #{forward.1} parent=1 // pred_check_branch
      %43 = sbr.rel (0) target = $region49
    $region48: #{forward.1} parent=1 // pred_region
      loop: start=0, step=1, limit=1
      $region50: #{forward.1} parent=48 // loop_pre_header
        _
      $region51: #{forward.1} parent=48 // loop_header
        %s45 = sphi 0, %s49
        %p46 = scmp.ge.s32.totalorder %s45, 1
        %s50 = sphi %s3, %s3
        %s51 = sphi [#allocation2], [#allocation2]
      $region52: #{forward.1} parent=48 // loop_header_branch
        %48 = sbr.rel (%p46) target = $region56
      $region53: #{forward.1} parent=48 // loop_body
        %v52 = vld [vmem:[%s50] sm:$0xff]
        %53 = vst [vmem:[%s51] sm:$0xff] %v52
        %v54 = vld [vmem:[%s50 + $0x8] sm:$0xff]
        %55 = vst [vmem:[%s51 + $0x8] sm:$0xff] %v54
        %v56 = vld [vmem:[%s50 + $0x10] sm:$0xff]
        %57 = vst [vmem:[%s51 + $0x10] sm:$0xff] %v56
        %v58 = vld [vmem:[%s50 + $0x18] sm:$0xff]
        %59 = vst [vmem:[%s51 + $0x18] sm:$0xff] %v58
        %v60 = vld [vmem:[%s50 + $0x20] sm:$0xff]
        %61 = vst [vmem:[%s51 + $0x20] sm:$0xff] %v60
        %v62 = vld [vmem:[%s50 + $0x28] sm:$0xff]
        %63 = vst [vmem:[%s51 + $0x28] sm:$0xff] %v62
        %v64 = vld [vmem:[%s50 + $0x30] sm:$0xff]
        %65 = vst [vmem:[%s51 + $0x30] sm:$0xff] %v64
        %v66 = vld [vmem:[%s50 + $0x38] sm:$0xff]
        %67 = vst [vmem:[%s51 + $0x38] sm:$0xff] %v66
        %v68 = vld [vmem:[%s50 + $0x40] sm:$0xff]
        %69 = vst [vmem:[%s51 + $0x40] sm:$0xff] %v68
        %v70 = vld [vmem:[%s50 + $0x48] sm:$0xff]
        %71 = vst [vmem:[%s51 + $0x48] sm:$0xff] %v70
        %v72 = vld [vmem:[%s50 + $0x50] sm:$0xff]
        %73 = vst [vmem:[%s51 + $0x50] sm:$0xff] %v72
        %v74 = vld [vmem:[%s50 + $0x58] sm:$0xff]
        %75 = vst [vmem:[%s51 + $0x58] sm:$0xff] %v74
        %v76 = vld [vmem:[%s50 + $0x60] sm:$0xff]
        %77 = vst [vmem:[%s51 + $0x60] sm:$0xff] %v76
        %v78 = vld [vmem:[%s50 + $0x68] sm:$0xff]
        %79 = vst [vmem:[%s51 + $0x68] sm:$0xff] %v78
        %v80 = vld [vmem:[%s50 + $0x70] sm:$0xff]
        %81 = vst [vmem:[%s51 + $0x70] sm:$0xff] %v80
        %v82 = vld [vmem:[%s50 + $0x78] sm:$0xff]
        %83 = vst [vmem:[%s51 + $0x78] sm:$0xff] %v82
        %v84 = vld [vmem:[%s50 + $0x80] sm:$0xff]
        %85 = vst [vmem:[%s51 + $0x80] sm:$0xff] %v84
        %v86 = vld [vmem:[%s50 + $0x88] sm:$0xff]
        %87 = vst [vmem:[%s51 + $0x88] sm:$0xff] %v86
        %v88 = vld [vmem:[%s50 + $0x90] sm:$0xff]
        %89 = vst [vmem:[%s51 + $0x90] sm:$0xff] %v88
        %v90 = vld [vmem:[%s50 + $0x98] sm:$0xff]
        %91 = vst [vmem:[%s51 + $0x98] sm:$0xff] %v90
        %v92 = vld [vmem:[%s50 + $0xa0] sm:$0xff]
        %93 = vst [vmem:[%s51 + $0xa0] sm:$0xff] %v92
        %v94 = vld [vmem:[%s50 + $0xa8] sm:$0xff]
        %95 = vst [vmem:[%s51 + $0xa8] sm:$0xff] %v94
        %v96 = vld [vmem:[%s50 + $0xb0] sm:$0xff]
        %97 = vst [vmem:[%s51 + $0xb0] sm:$0xff] %v96
        %v98 = vld [vmem:[%s50 + $0xb8] sm:$0xff]
        %99 = vst [vmem:[%s51 + $0xb8] sm:$0xff] %v98
        %v100 = vld [vmem:[%s50 + $0xc0] sm:$0xff]
        %101 = vst [vmem:[%s51 + $0xc0] sm:$0xff] %v100
        %v102 = vld [vmem:[%s50 + $0xc8] sm:$0xff]
        %103 = vst [vmem:[%s51 + $0xc8] sm:$0xff] %v102
        %v104 = vld [vmem:[%s50 + $0xd0] sm:$0xff]
        %105 = vst [vmem:[%s51 + $0xd0] sm:$0xff] %v104
        %v106 = vld [vmem:[%s50 + $0xd8] sm:$0xff]
        %107 = vst [vmem:[%s51 + $0xd8] sm:$0xff] %v106
        %v108 = vld [vmem:[%s50 + $0xe0] sm:$0xff]
        %109 = vst [vmem:[%s51 + $0xe0] sm:$0xff] %v108
        %v110 = vld [vmem:[%s50 + $0xe8] sm:$0xff]
        %111 = vst [vmem:[%s51 + $0xe8] sm:$0xff] %v110
        %v112 = vld [vmem:[%s50 + $0xf0] sm:$0xff]
        %113 = vst [vmem:[%s51 + $0xf0] sm:$0xff] %v112
        %v114 = vld [vmem:[%s50 + $0xf8] sm:$0xff]
        %115 = vst [vmem:[%s51 + $0xf8] sm:$0xff] %v114
      $region54: #{forward.1} parent=48 // loop_footer
        %s49 = sadd.s32 1, %s45
      $region55: #{forward.1} parent=48 // loop_footer_branch
        %44 = sbr.rel target = $region51
      $region56: #{forward.1} parent=48 // loop_exit
        _
    $region49: #{forward.1} parent=1 // pred_fallthru
      _
    // Predicated region
    $region57: #{forward.1} parent=1 // pred_check
      _
    $region58: #{forward.1} parent=1 // pred_check_branch
      %117 = sbr.rel target = $region60
    $region59: #{forward.1} parent=1 // pred_region
      _
    $region60: #{forward.1} parent=1 // pred_fallthru
      _
    // Predicated region
    $region61: #{forward.1} parent=1 // pred_check
      _
    $region62: #{forward.1} parent=1 // pred_check_branch
      %120 = sbr.rel (0) target = $region64
    $region63: #{forward.1} parent=1 // pred_region
      %121 = vsyncadd [#allocation5], 4096
    $region64: #{forward.1} parent=1 // pred_fallthru
      _
    %s122 = scalar_lea.sflag [#allocation5], 1
    // Predicated region
    $region65: #{forward.1} parent=1 // pred_check
      _
    $region66: #{forward.1} parent=1 // pred_check_branch
      %124 = sbr.rel target = $region68
    $region67: #{forward.1} parent=1 // pred_region
      %125 = sst [smem:[#allocation15]] [#allocation14]
      %126 = sst [smem:[#allocation16]] [#allocation13]
    $region68: #{forward.1} parent=1 // pred_fallthru
      _
    %128 = shalt.err (0)
    %s130 = sshll.u32 %s6, 4
    %s131 = int_to_ptr.hbm [resolvable:$true] %s130
    %s132 = sshll.u32 [#allocation3], 4
    %s133 = int_to_ptr.vmem [resolvable:$true] %s132
    %135 = dma.hbm_to_vmem [thread:$0]  %s131, 4096, %s133, %s122
    %s136 = scalar_lea.sflag [#allocation5], 2
    // Predicated region
    $region69: #{forward.1} parent=1 // pred_check
      _
    $region70: #{forward.1} parent=1 // pred_check_branch
      %138 = sbr.rel (0) target = $region72
    $region71: #{forward.1} parent=1 // pred_region
      loop: start=0, step=1, limit=1
      $region73: #{forward.1} parent=71 // loop_pre_header
        _
      $region74: #{forward.1} parent=71 // loop_header
        %s140 = sphi 0, %s144
        %p141 = scmp.ge.s32.totalorder %s140, 1
        %s145 = sphi %s9, %s9
        %s146 = sphi [#allocation4], [#allocation4]
      $region75: #{forward.1} parent=71 // loop_header_branch
        %143 = sbr.rel (%p141) target = $region79
      $region76: #{forward.1} parent=71 // loop_body
        %v147 = vld [vmem:[%s145] sm:$0xff]
        %148 = vst [vmem:[%s146] sm:$0xff] %v147
        %v149 = vld [vmem:[%s145 + $0x8] sm:$0xff]
        %150 = vst [vmem:[%s146 + $0x8] sm:$0xff] %v149
        %v151 = vld [vmem:[%s145 + $0x10] sm:$0xff]
        %152 = vst [vmem:[%s146 + $0x10] sm:$0xff] %v151
        %v153 = vld [vmem:[%s145 + $0x18] sm:$0xff]
        %154 = vst [vmem:[%s146 + $0x18] sm:$0xff] %v153
        %v155 = vld [vmem:[%s145 + $0x20] sm:$0xff]
        %156 = vst [vmem:[%s146 + $0x20] sm:$0xff] %v155
        %v157 = vld [vmem:[%s145 + $0x28] sm:$0xff]
        %158 = vst [vmem:[%s146 + $0x28] sm:$0xff] %v157
        %v159 = vld [vmem:[%s145 + $0x30] sm:$0xff]
        %160 = vst [vmem:[%s146 + $0x30] sm:$0xff] %v159
        %v161 = vld [vmem:[%s145 + $0x38] sm:$0xff]
        %162 = vst [vmem:[%s146 + $0x38] sm:$0xff] %v161
        %v163 = vld [vmem:[%s145 + $0x40] sm:$0xff]
        %164 = vst [vmem:[%s146 + $0x40] sm:$0xff] %v163
        %v165 = vld [vmem:[%s145 + $0x48] sm:$0xff]
        %166 = vst [vmem:[%s146 + $0x48] sm:$0xff] %v165
        %v167 = vld [vmem:[%s145 + $0x50] sm:$0xff]
        %168 = vst [vmem:[%s146 + $0x50] sm:$0xff] %v167
        %v169 = vld [vmem:[%s145 + $0x58] sm:$0xff]
        %170 = vst [vmem:[%s146 + $0x58] sm:$0xff] %v169
        %v171 = vld [vmem:[%s145 + $0x60] sm:$0xff]
        %172 = vst [vmem:[%s146 + $0x60] sm:$0xff] %v171
        %v173 = vld [vmem:[%s145 + $0x68] sm:$0xff]
        %174 = vst [vmem:[%s146 + $0x68] sm:$0xff] %v173
        %v175 = vld [vmem:[%s145 + $0x70] sm:$0xff]
        %176 = vst [vmem:[%s146 + $0x70] sm:$0xff] %v175
        %v177 = vld [vmem:[%s145 + $0x78] sm:$0xff]
        %178 = vst [vmem:[%s146 + $0x78] sm:$0xff] %v177
        %v179 = vld [vmem:[%s145 + $0x80] sm:$0xff]
        %180 = vst [vmem:[%s146 + $0x80] sm:$0xff] %v179
        %v181 = vld [vmem:[%s145 + $0x88] sm:$0xff]
        %182 = vst [vmem:[%s146 + $0x88] sm:$0xff] %v181
        %v183 = vld [vmem:[%s145 + $0x90] sm:$0xff]
        %184 = vst [vmem:[%s146 + $0x90] sm:$0xff] %v183
        %v185 = vld [vmem:[%s145 + $0x98] sm:$0xff]
        %186 = vst [vmem:[%s146 + $0x98] sm:$0xff] %v185
        %v187 = vld [vmem:[%s145 + $0xa0] sm:$0xff]
        %188 = vst [vmem:[%s146 + $0xa0] sm:$0xff] %v187
        %v189 = vld [vmem:[%s145 + $0xa8] sm:$0xff]
        %190 = vst [vmem:[%s146 + $0xa8] sm:$0xff] %v189
        %v191 = vld [vmem:[%s145 + $0xb0] sm:$0xff]
        %192 = vst [vmem:[%s146 + $0xb0] sm:$0xff] %v191
        %v193 = vld [vmem:[%s145 + $0xb8] sm:$0xff]
        %194 = vst [vmem:[%s146 + $0xb8] sm:$0xff] %v193
        %v195 = vld [vmem:[%s145 + $0xc0] sm:$0xff]
        %196 = vst [vmem:[%s146 + $0xc0] sm:$0xff] %v195
        %v197 = vld [vmem:[%s145 + $0xc8] sm:$0xff]
        %198 = vst [vmem:[%s146 + $0xc8] sm:$0xff] %v197
        %v199 = vld [vmem:[%s145 + $0xd0] sm:$0xff]
        %200 = vst [vmem:[%s146 + $0xd0] sm:$0xff] %v199
        %v201 = vld [vmem:[%s145 + $0xd8] sm:$0xff]
        %202 = vst [vmem:[%s146 + $0xd8] sm:$0xff] %v201
        %v203 = vld [vmem:[%s145 + $0xe0] sm:$0xff]
        %204 = vst [vmem:[%s146 + $0xe0] sm:$0xff] %v203
        %v205 = vld [vmem:[%s145 + $0xe8] sm:$0xff]
        %206 = vst [vmem:[%s146 + $0xe8] sm:$0xff] %v205
        %v207 = vld [vmem:[%s145 + $0xf0] sm:$0xff]
        %208 = vst [vmem:[%s146 + $0xf0] sm:$0xff] %v207
        %v209 = vld [vmem:[%s145 + $0xf8] sm:$0xff]
        %210 = vst [vmem:[%s146 + $0xf8] sm:$0xff] %v209
        %v211 = vld [vmem:[%s145 + $0x100] sm:$0xff]
        %212 = vst [vmem:[%s146 + $0x100] sm:$0xff] %v211
        %v213 = vld [vmem:[%s145 + $0x108] sm:$0xff]
        %214 = vst [vmem:[%s146 + $0x108] sm:$0xff] %v213
        %v215 = vld [vmem:[%s145 + $0x110] sm:$0xff]
        %216 = vst [vmem:[%s146 + $0x110] sm:$0xff] %v215
        %v217 = vld [vmem:[%s145 + $0x118] sm:$0xff]
        %218 = vst [vmem:[%s146 + $0x118] sm:$0xff] %v217
        %v219 = vld [vmem:[%s145 + $0x120] sm:$0xff]
        %220 = vst [vmem:[%s146 + $0x120] sm:$0xff] %v219
        %v221 = vld [vmem:[%s145 + $0x128] sm:$0xff]
        %222 = vst [vmem:[%s146 + $0x128] sm:$0xff] %v221
        %v223 = vld [vmem:[%s145 + $0x130] sm:$0xff]
        %224 = vst [vmem:[%s146 + $0x130] sm:$0xff] %v223
        %v225 = vld [vmem:[%s145 + $0x138] sm:$0xff]
        %226 = vst [vmem:[%s146 + $0x138] sm:$0xff] %v225
        %v227 = vld [vmem:[%s145 + $0x140] sm:$0xff]
        %228 = vst [vmem:[%s146 + $0x140] sm:$0xff] %v227
        %v229 = vld [vmem:[%s145 + $0x148] sm:$0xff]
        %230 = vst [vmem:[%s146 + $0x148] sm:$0xff] %v229
        %v231 = vld [vmem:[%s145 + $0x150] sm:$0xff]
        %232 = vst [vmem:[%s146 + $0x150] sm:$0xff] %v231
        %v233 = vld [vmem:[%s145 + $0x158] sm:$0xff]
        %234 = vst [vmem:[%s146 + $0x158] sm:$0xff] %v233
        %v235 = vld [vmem:[%s145 + $0x160] sm:$0xff]
        %236 = vst [vmem:[%s146 + $0x160] sm:$0xff] %v235
        %v237 = vld [vmem:[%s145 + $0x168] sm:$0xff]
        %238 = vst [vmem:[%s146 + $0x168] sm:$0xff] %v237
        %v239 = vld [vmem:[%s145 + $0x170] sm:$0xff]
        %240 = vst [vmem:[%s146 + $0x170] sm:$0xff] %v239
        %v241 = vld [vmem:[%s145 + $0x178] sm:$0xff]
        %242 = vst [vmem:[%s146 + $0x178] sm:$0xff] %v241
        %v243 = vld [vmem:[%s145 + $0x180] sm:$0xff]
        %244 = vst [vmem:[%s146 + $0x180] sm:$0xff] %v243
        %v245 = vld [vmem:[%s145 + $0x188] sm:$0xff]
        %246 = vst [vmem:[%s146 + $0x188] sm:$0xff] %v245
        %v247 = vld [vmem:[%s145 + $0x190] sm:$0xff]
        %248 = vst [vmem:[%s146 + $0x190] sm:$0xff] %v247
        %v249 = vld [vmem:[%s145 + $0x198] sm:$0xff]
        %250 = vst [vmem:[%s146 + $0x198] sm:$0xff] %v249
        %v251 = vld [vmem:[%s145 + $0x1a0] sm:$0xff]
        %252 = vst [vmem:[%s146 + $0x1a0] sm:$0xff] %v251
        %v253 = vld [vmem:[%s145 + $0x1a8] sm:$0xff]
        %254 = vst [vmem:[%s146 + $0x1a8] sm:$0xff] %v253
        %v255 = vld [vmem:[%s145 + $0x1b0] sm:$0xff]
        %256 = vst [vmem:[%s146 + $0x1b0] sm:$0xff] %v255
        %v257 = vld [vmem:[%s145 + $0x1b8] sm:$0xff]
        %258 = vst [vmem:[%s146 + $0x1b8] sm:$0xff] %v257
        %v259 = vld [vmem:[%s145 + $0x1c0] sm:$0xff]
        %260 = vst [vmem:[%s146 + $0x1c0] sm:$0xff] %v259
        %v261 = vld [vmem:[%s145 + $0x1c8] sm:$0xff]
        %262 = vst [vmem:[%s146 + $0x1c8] sm:$0xff] %v261
        %v263 = vld [vmem:[%s145 + $0x1d0] sm:$0xff]
        %264 = vst [vmem:[%s146 + $0x1d0] sm:$0xff] %v263
        %v265 = vld [vmem:[%s145 + $0x1d8] sm:$0xff]
        %266 = vst [vmem:[%s146 + $0x1d8] sm:$0xff] %v265
        %v267 = vld [vmem:[%s145 + $0x1e0] sm:$0xff]
        %268 = vst [vmem:[%s146 + $0x1e0] sm:$0xff] %v267
        %v269 = vld [vmem:[%s145 + $0x1e8] sm:$0xff]
        %270 = vst [vmem:[%s146 + $0x1e8] sm:$0xff] %v269
        %v271 = vld [vmem:[%s145 + $0x1f0] sm:$0xff]
        %272 = vst [vmem:[%s146 + $0x1f0] sm:$0xff] %v271
        %v273 = vld [vmem:[%s145 + $0x1f8] sm:$0xff]
        %274 = vst [vmem:[%s146 + $0x1f8] sm:$0xff] %v273
      $region77: #{forward.1} parent=71 // loop_footer
        %s144 = sadd.s32 1, %s140
      $region78: #{forward.1} parent=71 // loop_footer_branch
        %139 = sbr.rel target = $region74
      $region79: #{forward.1} parent=71 // loop_exit
        _
    $region72: #{forward.1} parent=1 // pred_fallthru
      _
    // Predicated region
    $region80: #{forward.1} parent=1 // pred_check
      _
    $region81: #{forward.1} parent=1 // pred_check_branch
      %276 = sbr.rel target = $region83
    $region82: #{forward.1} parent=1 // pred_region
      _
    $region83: #{forward.1} parent=1 // pred_fallthru
      _
    // Predicated region
    $region84: #{forward.1} parent=1 // pred_check
      _
    $region85: #{forward.1} parent=1 // pred_check_branch
      %279 = sbr.rel (0) target = $region87
    $region86: #{forward.1} parent=1 // pred_region
      %280 = vsyncadd %s136, 8192
    $region87: #{forward.1} parent=1 // pred_fallthru
      _
    %281 = vst [vmem:[#allocation6] sm:$0xff] 0.0
    %282 = vst [vmem:[#allocation6 + $0x8] sm:$0xff] 0.0
    %283 = vst [vmem:[#allocation6 + $0x10] sm:$0xff] 0.0
    %284 = vst [vmem:[#allocation6 + $0x18] sm:$0xff] 0.0
    %285 = vst [vmem:[#allocation6 + $0x20] sm:$0xf] 0.0
    %286 = vst [vmem:[#allocation7] sm:$0xff] 0.0
    %287 = vst [vmem:[#allocation7 + $0x8] sm:$0xff] 0.0
    %288 = vst [vmem:[#allocation7 + $0x10] sm:$0xf] 0.0
    %289 = vst [vmem:[#allocation8] sm:$0xff] 0.0
    %290 = vst [vmem:[#allocation8 + $0x8] sm:$0xf] 0.0
    %291 = vst [vmem:[#allocation9] sm:$0xff] 0.0
    %vm292 = vcmask 523264
    %293 = vst.msk [vmem:[#allocation9 + $0x8] sm:$0xff] %vm292, 0.0
    %294 = vst [vmem:[#allocation9 + $0x10] sm:$0x3] 0.0
    %vm295 = vcmask 517120
    %296 = vst.msk [vmem:[#allocation9 + $0x18] sm:$0x3] %vm295, 0.0
    %v297 = vld [vmem:[%s0] ss:$2 sm:$0xff]
    %s298 = scalar_lea.vmem %s0, 16
    %v299 = vld [vmem:[%s298] ss:$2 sm:$0xff]
    %s300 = scalar_lea.vmem %s0, 34
    %v301 = vld [vmem:[%s300] ss:$2 sm:$0xff]
    %s302 = scalar_lea.vmem %s0, 50
    %v303 = vld [vmem:[%s302] ss:$2 sm:$0xff]
    %s304 = scalar_lea.vmem %s0, 1
    %v305 = vld [vmem:[%s304] ss:$2 sm:$0xff]
    %s306 = scalar_lea.vmem %s0, 17
    %v307 = vld [vmem:[%s306] ss:$2 sm:$0xff]
    %s308 = scalar_lea.vmem %s0, 35
    %v309 = vld [vmem:[%s308] ss:$2 sm:$0xff]
    %s310 = scalar_lea.vmem %s0, 51
    %v311 = vld [vmem:[%s310] ss:$2 sm:$0xff]
    %s312 = scalar_lea.vmem %s0, 2
    %v313 = vld [vmem:[%s312] ss:$2 sm:$0xff]
    %s314 = scalar_lea.vmem %s0, 18
    %v315 = vld [vmem:[%s314] ss:$2 sm:$0xff]
    %s316 = scalar_lea.vmem %s0, 36
    %v317 = vld [vmem:[%s316] ss:$2 sm:$0xff]
    %s318 = scalar_lea.vmem %s0, 52
    %v319 = vld [vmem:[%s318] ss:$2 sm:$0xff]
    %s320 = scalar_lea.vmem %s0, 3
    %v321 = vld [vmem:[%s320] ss:$2 sm:$0xff]
    %s322 = scalar_lea.vmem %s0, 19
    %v323 = vld [vmem:[%s322] ss:$2 sm:$0xff]
    %s324 = scalar_lea.vmem %s0, 37
    %v325 = vld [vmem:[%s324] ss:$2 sm:$0xff]
    %s326 = scalar_lea.vmem %s0, 53
    %v327 = vld [vmem:[%s326] ss:$2 sm:$0xff]
    %v328 = vpack.c.bf16 %v299, %v297
    %v329 = vpack.c.bf16 %v307, %v305
    %v330 = vpack.c.bf16 %v315, %v313
    %v331 = vpack.c.bf16 %v323, %v321
    %v332 = vpack.c.bf16 %v303, %v301
    %v333 = vpack.c.bf16 %v311, %v309
    %v334 = vpack.c.bf16 %v319, %v317
    %v335 = vpack.c.bf16 %v327, %v325
    %v336 = vld [vmem:[%s1] sm:$0xf]
    %v337 = vld [vmem:[%s1 + $0x4] sm:$0xf]
    %v338 = vld [vmem:[%s1 + $0x8] sm:$0xf]
    %v339 = vld [vmem:[%s1 + $0xc] sm:$0xf]
    %v340 = vld [vmem:[%s1 + $0x10] sm:$0xf]
    %v341 = vld [vmem:[%s1 + $0x14] sm:$0xf]
    %v342 = vld [vmem:[%s1 + $0x18] sm:$0xf]
    %v343 = vld [vmem:[%s1 + $0x1c] sm:$0xf]
    %v344 = vld [vmem:[%s1 + $0x20] sm:$0xf]
    %v345 = vld [vmem:[%s1 + $0x24] sm:$0xf]
    %v346 = vld [vmem:[%s1 + $0x28] sm:$0xf]
    %v347 = vld [vmem:[%s1 + $0x2c] sm:$0xf]
    %v348 = vld [vmem:[%s1 + $0x30] sm:$0xf]
    %v349 = vld [vmem:[%s1 + $0x34] sm:$0xf]
    %v350 = vld [vmem:[%s1 + $0x38] sm:$0xf]
    %v351 = vld [vmem:[%s1 + $0x3c] sm:$0xf]
    %v352 = vld [vmem:[%s1 + $0x40] sm:$0xf]
    %v353 = vld [vmem:[%s1 + $0x44] sm:$0xf]
    %v354 = vld [vmem:[%s1 + $0x48] sm:$0xf]
    %v355 = vld [vmem:[%s1 + $0x4c] sm:$0xf]
    %v356 = vld [vmem:[%s1 + $0x50] sm:$0xf]
    %v357 = vld [vmem:[%s1 + $0x54] sm:$0xf]
    %v358 = vld [vmem:[%s1 + $0x58] sm:$0xf]
    %v359 = vld [vmem:[%s1 + $0x5c] sm:$0xf]
    %v360 = vld [vmem:[%s1 + $0x60] sm:$0xf]
    %v361 = vld [vmem:[%s1 + $0x64] sm:$0xf]
    %v362 = vld [vmem:[%s1 + $0x68] sm:$0xf]
    %v363 = vld [vmem:[%s1 + $0x6c] sm:$0xf]
    %v364 = vld [vmem:[%s1 + $0x70] sm:$0xf]
    %v365 = vld [vmem:[%s1 + $0x74] sm:$0xf]
    %v366 = vld [vmem:[%s1 + $0x78] sm:$0xf]
    %v367 = vld [vmem:[%s1 + $0x7c] sm:$0xf]
    %v368 = vld [vmem:[%s1 + $0x80] sm:$0xf]
    %v369 = vld [vmem:[%s1 + $0x84] sm:$0xf]
    %v370 = vld [vmem:[%s1 + $0x88] sm:$0xf]
    %v371 = vld [vmem:[%s1 + $0x8c] sm:$0xf]
    %v372 = vld [vmem:[%s1 + $0x90] sm:$0xf]
    %v373 = vld [vmem:[%s1 + $0x94] sm:$0xf]
    %v374 = vld [vmem:[%s1 + $0x98] sm:$0xf]
    %v375 = vld [vmem:[%s1 + $0x9c] sm:$0xf]
    %v376 = vld [vmem:[%s1 + $0xa0] sm:$0xf]
    %v377 = vld [vmem:[%s1 + $0xa4] sm:$0xf]
    %v378 = vld [vmem:[%s1 + $0xa8] sm:$0xf]
    %v379 = vld [vmem:[%s1 + $0xac] sm:$0xf]
    %v380 = vld [vmem:[%s1 + $0xb0] sm:$0xf]
    %v381 = vld [vmem:[%s1 + $0xb4] sm:$0xf]
    %v382 = vld [vmem:[%s1 + $0xb8] sm:$0xf]
    %v383 = vld [vmem:[%s1 + $0xbc] sm:$0xf]
    %v384 = vld [vmem:[%s1 + $0xc0] sm:$0xf]
    %v385 = vld [vmem:[%s1 + $0xc4] sm:$0xf]
    %v386 = vld [vmem:[%s1 + $0xc8] sm:$0xf]
    %v387 = vld [vmem:[%s1 + $0xcc] sm:$0xf]
    %v388 = vld [vmem:[%s1 + $0xd0] sm:$0xf]
    %v389 = vld [vmem:[%s1 + $0xd4] sm:$0xf]
    %v390 = vld [vmem:[%s1 + $0xd8] sm:$0xf]
    %v391 = vld [vmem:[%s1 + $0xdc] sm:$0xf]
    %v392 = vld [vmem:[%s1 + $0xe0] sm:$0xf]
    %v393 = vld [vmem:[%s1 + $0xe4] sm:$0xf]
    %v394 = vld [vmem:[%s1 + $0xe8] sm:$0xf]
    %v395 = vld [vmem:[%s1 + $0xec] sm:$0xf]
    %v396 = vld [vmem:[%s1 + $0xf0] sm:$0xf]
    %v397 = vld [vmem:[%s1 + $0xf4] sm:$0xf]
    %v398 = vld [vmem:[%s1 + $0xf8] sm:$0xf]
    %v399 = vld [vmem:[%s1 + $0xfc] sm:$0xf]
    %v400 = vld [vmem:[%s2] sm:$0x1]
    %v402 = vperm.slane %v400, 0
    %v468 = vunpack.c.l.b16 %v336
    %v469 = vunpack.c.l.b16 %v337
    %v470 = vunpack.c.l.b16 %v338
    %v471 = vunpack.c.l.b16 %v339
    %v472 = vunpack.c.l.b16 %v340
    %v473 = vunpack.c.l.b16 %v341
    %v474 = vunpack.c.l.b16 %v342
    %v475 = vunpack.c.l.b16 %v343
    %v476 = vunpack.c.l.b16 %v344
    %v477 = vunpack.c.l.b16 %v345
    %v478 = vunpack.c.l.b16 %v346
    %v479 = vunpack.c.l.b16 %v347
    %v480 = vunpack.c.l.b16 %v348
    %v481 = vunpack.c.l.b16 %v349
    %v482 = vunpack.c.l.b16 %v350
    %v483 = vunpack.c.l.b16 %v351
    %v484 = vunpack.c.l.b16 %v352
    %v485 = vunpack.c.l.b16 %v353
    %v486 = vunpack.c.l.b16 %v354
    %v487 = vunpack.c.l.b16 %v355
    %v488 = vunpack.c.l.b16 %v356
    %v489 = vunpack.c.l.b16 %v357
    %v490 = vunpack.c.l.b16 %v358
    %v491 = vunpack.c.l.b16 %v359
    %v492 = vunpack.c.l.b16 %v360
    %v493 = vunpack.c.l.b16 %v361
    %v494 = vunpack.c.l.b16 %v362
    %v495 = vunpack.c.l.b16 %v363
    %v496 = vunpack.c.l.b16 %v364
    %v497 = vunpack.c.l.b16 %v365
    %v498 = vunpack.c.l.b16 %v366
    %v499 = vunpack.c.l.b16 %v367
    %v500 = vunpack.c.l.b16 %v368
    %v501 = vunpack.c.l.b16 %v369
    %v502 = vunpack.c.l.b16 %v370
    %v503 = vunpack.c.l.b16 %v371
    %v504 = vunpack.c.l.b16 %v372
    %v505 = vunpack.c.l.b16 %v373
    %v506 = vunpack.c.l.b16 %v374
    %v507 = vunpack.c.l.b16 %v375
    %v508 = vunpack.c.l.b16 %v376
    %v509 = vunpack.c.l.b16 %v377
    %v510 = vunpack.c.l.b16 %v378
    %v511 = vunpack.c.l.b16 %v379
    %v512 = vunpack.c.l.b16 %v380
    %v513 = vunpack.c.l.b16 %v381
    %v514 = vunpack.c.l.b16 %v382
    %v515 = vunpack.c.l.b16 %v383
    %v516 = vunpack.c.l.b16 %v384
    %v517 = vunpack.c.l.b16 %v385
    %v518 = vunpack.c.l.b16 %v386
    %v519 = vunpack.c.l.b16 %v387
    %v520 = vunpack.c.l.b16 %v388
    %v521 = vunpack.c.l.b16 %v389
    %v522 = vunpack.c.l.b16 %v390
    %v523 = vunpack.c.l.b16 %v391
    %v524 = vunpack.c.l.b16 %v392
    %v525 = vunpack.c.l.b16 %v393
    %v526 = vunpack.c.l.b16 %v394
    %v527 = vunpack.c.l.b16 %v395
    %v528 = vunpack.c.l.b16 %v396
    %v529 = vunpack.c.l.b16 %v397
    %v530 = vunpack.c.l.b16 %v398
    %v531 = vunpack.c.l.b16 %v399
    %v532 = vpack.c.b16 %v469, %v468
    %v533 = vpack.c.b16 %v471, %v470
    %v534 = vpack.c.b16 %v473, %v472
    %v535 = vpack.c.b16 %v475, %v474
    %v536 = vpack.c.b16 %v477, %v476
    %v537 = vpack.c.b16 %v479, %v478
    %v538 = vpack.c.b16 %v481, %v480
    %v539 = vpack.c.b16 %v483, %v482
    %v540 = vpack.c.b16 %v485, %v484
    %v541 = vpack.c.b16 %v487, %v486
    %v542 = vpack.c.b16 %v489, %v488
    %v543 = vpack.c.b16 %v491, %v490
    %v544 = vpack.c.b16 %v493, %v492
    %v545 = vpack.c.b16 %v495, %v494
    %v546 = vpack.c.b16 %v497, %v496
    %v547 = vpack.c.b16 %v499, %v498
    %v548 = vpack.c.b16 %v501, %v500
    %v549 = vpack.c.b16 %v503, %v502
    %v550 = vpack.c.b16 %v505, %v504
    %v551 = vpack.c.b16 %v507, %v506
    %v552 = vpack.c.b16 %v509, %v508
    %v553 = vpack.c.b16 %v511, %v510
    %v554 = vpack.c.b16 %v513, %v512
    %v555 = vpack.c.b16 %v515, %v514
    %v556 = vpack.c.b16 %v517, %v516
    %v557 = vpack.c.b16 %v519, %v518
    %v558 = vpack.c.b16 %v521, %v520
    %v559 = vpack.c.b16 %v523, %v522
    %v560 = vpack.c.b16 %v525, %v524
    %v561 = vpack.c.b16 %v527, %v526
    %v562 = vpack.c.b16 %v529, %v528
    %v563 = vpack.c.b16 %v531, %v530
    %596 = vmatpush.bf16.msra.mxu0 %v539
    %597 = vmatpush.bf16.msra.mxu0 %v538
    %598 = vmatpush.bf16.msra.mxu0 %v537
    %599 = vmatpush.bf16.msra.mxu0 %v536
    %600 = vmatpush.bf16.msra.mxu0 %v535
    %601 = vmatpush.bf16.msra.mxu0 %v534
    %602 = vmatpush.bf16.msra.mxu0 %v533
    %603 = vmatpush.bf16.msra.mxu0 %v532
    %604 = vmatmul.bf16.gmra.mxu0 %v328
    %v605 = vpop.f32.mrf.mxu0
    %v606 = vadd.f32 %v402, %v605
    %v607 = vpop.f32.mrf.mxu0
    %v608 = vadd.f32 %v402, %v607
    %609 = vmatmul.bf16.gmra.mxu0 %v332
    %v610 = vpop.f32.mrf.mxu0
    %v611 = vadd.f32 %v402, %v610
    %v612 = vpop.f32.mrf.mxu0
    %v613 = vadd.f32 %v402, %v612
    %614 = vdwg.mxu0
    %615 = vmatpush.bf16.msra.mxu0 %v547
    %616 = vmatpush.bf16.msra.mxu0 %v546
    %617 = vmatpush.bf16.msra.mxu0 %v545
    %618 = vmatpush.bf16.msra.mxu0 %v544
    %619 = vmatpush.bf16.msra.mxu0 %v543
    %620 = vmatpush.bf16.msra.mxu0 %v542
    %621 = vmatpush.bf16.msra.mxu0 %v541
    %622 = vmatpush.bf16.msra.mxu0 %v540
    %623 = vmatmul.bf16.gmra.mxu0 %v329
    %v624 = vpop.f32.mrf.mxu0
    %v625 = vadd.f32 %v606, %v624
    %v626 = vpop.f32.mrf.mxu0
    %v627 = vadd.f32 %v608, %v626
    %628 = vmatmul.bf16.gmra.mxu0 %v333
    %v629 = vpop.f32.mrf.mxu0
    %v630 = vadd.f32 %v611, %v629
    %v631 = vpop.f32.mrf.mxu0
    %v632 = vadd.f32 %v613, %v631
    %633 = vdwg.mxu0
    %634 = vmatpush.bf16.msra.mxu0 %v555
    %635 = vmatpush.bf16.msra.mxu0 %v554
    %636 = vmatpush.bf16.msra.mxu0 %v553
    %637 = vmatpush.bf16.msra.mxu0 %v552
    %638 = vmatpush.bf16.msra.mxu0 %v551
    %639 = vmatpush.bf16.msra.mxu0 %v550
    %640 = vmatpush.bf16.msra.mxu0 %v549
    %641 = vmatpush.bf16.msra.mxu0 %v548
    %642 = vmatmul.bf16.gmra.mxu0 %v330
    %v643 = vpop.f32.mrf.mxu0
    %v644 = vadd.f32 %v625, %v643
    %v645 = vpop.f32.mrf.mxu0
    %v646 = vadd.f32 %v627, %v645
    %647 = vmatmul.bf16.gmra.mxu0 %v334
    %v648 = vpop.f32.mrf.mxu0
    %v649 = vadd.f32 %v630, %v648
    %v650 = vpop.f32.mrf.mxu0
    %v651 = vadd.f32 %v632, %v650
    %652 = vdwg.mxu0
    %653 = vmatpush.bf16.msra.mxu0 %v563
    %654 = vmatpush.bf16.msra.mxu0 %v562
    %655 = vmatpush.bf16.msra.mxu0 %v561
    %656 = vmatpush.bf16.msra.mxu0 %v560
    %657 = vmatpush.bf16.msra.mxu0 %v559
    %658 = vmatpush.bf16.msra.mxu0 %v558
    %659 = vmatpush.bf16.msra.mxu0 %v557
    %660 = vmatpush.bf16.msra.mxu0 %v556
    %661 = vmatmul.bf16.gmra.mxu0 %v331
    %v662 = vpop.f32.mrf.mxu0
    %v663 = vadd.f32 %v644, %v662
    %v664 = vpop.f32.mrf.mxu0
    %v665 = vadd.f32 %v646, %v664
    %666 = vmatmul.bf16.gmra.mxu0 %v335
    %v667 = vpop.f32.mrf.mxu0
    %v668 = vadd.f32 %v649, %v667
    %v669 = vpop.f32.mrf.mxu0
    %v670 = vadd.f32 %v651, %v669
    %671 = vdwg.mxu0
    %vm672 = vcmp.gt.f32.partialorder %v663, 0.0
    %vm673 = vcmp.gt.f32.partialorder %v665, 0.0
    %vm674 = vcmp.gt.f32.partialorder %v668, 0.0
    %vm675 = vcmp.gt.f32.partialorder %v670, 0.0
    %v676 = vmul.f32 %v663, 0.2
    %v677 = vmul.f32 %v665, 0.2
    %v678 = vmul.f32 %v668, 0.2
    %v679 = vmul.f32 %v670, 0.2
    %v680 = vsel %vm672, %v663, %v676
    %v681 = vsel %vm673, %v665, %v677
    %v682 = vsel %vm674, %v668, %v678
    %v683 = vsel %vm675, %v670, %v679
    %684 = vst [vmem:[#allocation6 + $0x1] sm:$0xff] %v680
    %685 = vst [vmem:[#allocation6 + $0x9] sm:$0xff] %v681
    %686 = vst [vmem:[#allocation6 + $0x13] sm:$0xff] %v682
    %687 = vst [vmem:[#allocation6 + $0x1b] sm:$0xff] %v683
    %v688 = vld [vmem:[#allocation6] ss:$2 sm:$0xff]
    %s689 = scalar_lea.vmem [#allocation6], 18
    %v690 = vld [vmem:[%s689] ss:$2 sm:$0xff]
    %s691 = scalar_lea.vmem [#allocation6], 1
    %v692 = vld [vmem:[%s691] ss:$2 sm:$0xff]
    %s693 = scalar_lea.vmem [#allocation6], 19
    %v694 = vld [vmem:[%s693] ss:$2 sm:$0xff]
    %s695 = scalar_lea.vmem [#allocation6], 2
    %v696 = vld [vmem:[%s695] ss:$2 sm:$0xff]
    %s697 = scalar_lea.vmem [#allocation6], 20
    %v698 = vld [vmem:[%s697] ss:$2 sm:$0xff]
    %s699 = scalar_lea.vmem [#allocation6], 3
    %v700 = vld [vmem:[%s699] ss:$2 sm:$0xff]
    %s701 = scalar_lea.vmem [#allocation6], 21
    %v702 = vld [vmem:[%s701] ss:$2 sm:$0xff]
    %v703 = vpack.c.bf16 %v690, %v688
    %v704 = vpack.c.bf16 %v694, %v692
    %v705 = vpack.c.bf16 %v698, %v696
    %v706 = vpack.c.bf16 %v702, %v700
    %s707 = smul.u32 4, 64
    %s708 = smul.u32 %s707, 1
    %s709 = sshll.u32 %s708, 4
    %710 = dma.done [#allocation5], %s709
    %v711 = vld [vmem:[#allocation2] sm:$0xf]
    %v712 = vld [vmem:[#allocation2 + $0x4] sm:$0xf]
    %v713 = vld [vmem:[#allocation2 + $0x8] sm:$0xf]
    %v714 = vld [vmem:[#allocation2 + $0xc] sm:$0xf]
    %v715 = vld [vmem:[#allocation2 + $0x10] sm:$0xf]
    %v716 = vld [vmem:[#allocation2 + $0x14] sm:$0xf]
    %v717 = vld [vmem:[#allocation2 + $0x18] sm:$0xf]
    %v718 = vld [vmem:[#allocation2 + $0x1c] sm:$0xf]
    %v719 = vld [vmem:[#allocation2 + $0x20] sm:$0xf]
    %v720 = vld [vmem:[#allocation2 + $0x24] sm:$0xf]
    %v721 = vld [vmem:[#allocation2 + $0x28] sm:$0xf]
    %v722 = vld [vmem:[#allocation2 + $0x2c] sm:$0xf]
    %v723 = vld [vmem:[#allocation2 + $0x30] sm:$0xf]
    %v724 = vld [vmem:[#allocation2 + $0x34] sm:$0xf]
    %v725 = vld [vmem:[#allocation2 + $0x38] sm:$0xf]
    %v726 = vld [vmem:[#allocation2 + $0x3c] sm:$0xf]
    %v727 = vld [vmem:[#allocation2 + $0x40] sm:$0xf]
    %v728 = vld [vmem:[#allocation2 + $0x44] sm:$0xf]
    %v729 = vld [vmem:[#allocation2 + $0x48] sm:$0xf]
    %v730 = vld [vmem:[#allocation2 + $0x4c] sm:$0xf]
    %v731 = vld [vmem:[#allocation2 + $0x50] sm:$0xf]
    %v732 = vld [vmem:[#allocation2 + $0x54] sm:$0xf]
    %v733 = vld [vmem:[#allocation2 + $0x58] sm:$0xf]
    %v734 = vld [vmem:[#allocation2 + $0x5c] sm:$0xf]
    %v735 = vld [vmem:[#allocation2 + $0x60] sm:$0xf]
    %v736 = vld [vmem:[#allocation2 + $0x64] sm:$0xf]
    %v737 = vld [vmem:[#allocation2 + $0x68] sm:$0xf]
    %v738 = vld [vmem:[#allocation2 + $0x6c] sm:$0xf]
    %v739 = vld [vmem:[#allocation2 + $0x70] sm:$0xf]
    %v740 = vld [vmem:[#allocation2 + $0x74] sm:$0xf]
    %v741 = vld [vmem:[#allocation2 + $0x78] sm:$0xf]
    %v742 = vld [vmem:[#allocation2 + $0x7c] sm:$0xf]
    %v743 = vld [vmem:[#allocation2 + $0x80] sm:$0xf]
    %v744 = vld [vmem:[#allocation2 + $0x84] sm:$0xf]
    %v745 = vld [vmem:[#allocation2 + $0x88] sm:$0xf]
    %v746 = vld [vmem:[#allocation2 + $0x8c] sm:$0xf]
    %v747 = vld [vmem:[#allocation2 + $0x90] sm:$0xf]
    %v748 = vld [vmem:[#allocation2 + $0x94] sm:$0xf]
    %v749 = vld [vmem:[#allocation2 + $0x98] sm:$0xf]
    %v750 = vld [vmem:[#allocation2 + $0x9c] sm:$0xf]
    %v751 = vld [vmem:[#allocation2 + $0xa0] sm:$0xf]
    %v752 = vld [vmem:[#allocation2 + $0xa4] sm:$0xf]
    %v753 = vld [vmem:[#allocation2 + $0xa8] sm:$0xf]
    %v754 = vld [vmem:[#allocation2 + $0xac] sm:$0xf]
    %v755 = vld [vmem:[#allocation2 + $0xb0] sm:$0xf]
    %v756 = vld [vmem:[#allocation2 + $0xb4] sm:$0xf]
    %v757 = vld [vmem:[#allocation2 + $0xb8] sm:$0xf]
    %v758 = vld [vmem:[#allocation2 + $0xbc] sm:$0xf]
    %v759 = vld [vmem:[#allocation2 + $0xc0] sm:$0xf]
    %v760 = vld [vmem:[#allocation2 + $0xc4] sm:$0xf]
    %v761 = vld [vmem:[#allocation2 + $0xc8] sm:$0xf]
    %v762 = vld [vmem:[#allocation2 + $0xcc] sm:$0xf]
    %v763 = vld [vmem:[#allocation2 + $0xd0] sm:$0xf]
    %v764 = vld [vmem:[#allocation2 + $0xd4] sm:$0xf]
    %v765 = vld [vmem:[#allocation2 + $0xd8] sm:$0xf]
    %v766 = vld [vmem:[#allocation2 + $0xdc] sm:$0xf]
    %v767 = vld [vmem:[#allocation2 + $0xe0] sm:$0xf]
    %v768 = vld [vmem:[#allocation2 + $0xe4] sm:$0xf]
    %v769 = vld [vmem:[#allocation2 + $0xe8] sm:$0xf]
    %v770 = vld [vmem:[#allocation2 + $0xec] sm:$0xf]
    %v771 = vld [vmem:[#allocation2 + $0xf0] sm:$0xf]
    %v772 = vld [vmem:[#allocation2 + $0xf4] sm:$0xf]
    %v773 = vld [vmem:[#allocation2 + $0xf8] sm:$0xf]
    %v774 = vld [vmem:[#allocation2 + $0xfc] sm:$0xf]
    %v839 = vunpack.c.l.b16 %v711
    %v840 = vunpack.c.l.b16 %v712
    %v841 = vunpack.c.l.b16 %v713
    %v842 = vunpack.c.l.b16 %v714
    %v843 = vunpack.c.l.b16 %v715
    %v844 = vunpack.c.l.b16 %v716
    %v845 = vunpack.c.l.b16 %v717
    %v846 = vunpack.c.l.b16 %v718
    %v847 = vunpack.c.l.b16 %v719
    %v848 = vunpack.c.l.b16 %v720
    %v849 = vunpack.c.l.b16 %v721
    %v850 = vunpack.c.l.b16 %v722
    %v851 = vunpack.c.l.b16 %v723
    %v852 = vunpack.c.l.b16 %v724
    %v853 = vunpack.c.l.b16 %v725
    %v854 = vunpack.c.l.b16 %v726
    %v855 = vunpack.c.l.b16 %v727
    %v856 = vunpack.c.l.b16 %v728
    %v857 = vunpack.c.l.b16 %v729
    %v858 = vunpack.c.l.b16 %v730
    %v859 = vunpack.c.l.b16 %v731
    %v860 = vunpack.c.l.b16 %v732
    %v861 = vunpack.c.l.b16 %v733
    %v862 = vunpack.c.l.b16 %v734
    %v863 = vunpack.c.l.b16 %v735
    %v864 = vunpack.c.l.b16 %v736
    %v865 = vunpack.c.l.b16 %v737
    %v866 = vunpack.c.l.b16 %v738
    %v867 = vunpack.c.l.b16 %v739
    %v868 = vunpack.c.l.b16 %v740
    %v869 = vunpack.c.l.b16 %v741
    %v870 = vunpack.c.l.b16 %v742
    %v871 = vunpack.c.l.b16 %v743
    %v872 = vunpack.c.l.b16 %v744
    %v873 = vunpack.c.l.b16 %v745
    %v874 = vunpack.c.l.b16 %v746
    %v875 = vunpack.c.l.b16 %v747
    %v876 = vunpack.c.l.b16 %v748
    %v877 = vunpack.c.l.b16 %v749
    %v878 = vunpack.c.l.b16 %v750
    %v879 = vunpack.c.l.b16 %v751
    %v880 = vunpack.c.l.b16 %v752
    %v881 = vunpack.c.l.b16 %v753
    %v882 = vunpack.c.l.b16 %v754
    %v883 = vunpack.c.l.b16 %v755
    %v884 = vunpack.c.l.b16 %v756
    %v885 = vunpack.c.l.b16 %v757
    %v886 = vunpack.c.l.b16 %v758
    %v887 = vunpack.c.l.b16 %v759
    %v888 = vunpack.c.l.b16 %v760
    %v889 = vunpack.c.l.b16 %v761
    %v890 = vunpack.c.l.b16 %v762
    %v891 = vunpack.c.l.b16 %v763
    %v892 = vunpack.c.l.b16 %v764
    %v893 = vunpack.c.l.b16 %v765
    %v894 = vunpack.c.l.b16 %v766
    %v895 = vunpack.c.l.b16 %v767
    %v896 = vunpack.c.l.b16 %v768
    %v897 = vunpack.c.l.b16 %v769
    %v898 = vunpack.c.l.b16 %v770
    %v899 = vunpack.c.l.b16 %v771
    %v900 = vunpack.c.l.b16 %v772
    %v901 = vunpack.c.l.b16 %v773
    %v902 = vunpack.c.l.b16 %v774
    %v903 = vpack.c.b16 %v840, %v839
    %v904 = vpack.c.b16 %v842, %v841
    %v905 = vpack.c.b16 %v844, %v843
    %v906 = vpack.c.b16 %v846, %v845
    %v907 = vpack.c.b16 %v848, %v847
    %v908 = vpack.c.b16 %v850, %v849
    %v909 = vpack.c.b16 %v852, %v851
    %v910 = vpack.c.b16 %v854, %v853
    %v911 = vpack.c.b16 %v856, %v855
    %v912 = vpack.c.b16 %v858, %v857
    %v913 = vpack.c.b16 %v860, %v859
    %v914 = vpack.c.b16 %v862, %v861
    %v915 = vpack.c.b16 %v864, %v863
    %v916 = vpack.c.b16 %v866, %v865
    %v917 = vpack.c.b16 %v868, %v867
    %v918 = vpack.c.b16 %v870, %v869
    %v919 = vpack.c.b16 %v872, %v871
    %v920 = vpack.c.b16 %v874, %v873
    %v921 = vpack.c.b16 %v876, %v875
    %v922 = vpack.c.b16 %v878, %v877
    %v923 = vpack.c.b16 %v880, %v879
    %v924 = vpack.c.b16 %v882, %v881
    %v925 = vpack.c.b16 %v884, %v883
    %v926 = vpack.c.b16 %v886, %v885
    %v927 = vpack.c.b16 %v888, %v887
    %v928 = vpack.c.b16 %v890, %v889
    %v929 = vpack.c.b16 %v892, %v891
    %v930 = vpack.c.b16 %v894, %v893
    %v931 = vpack.c.b16 %v896, %v895
    %v932 = vpack.c.b16 %v898, %v897
    %v933 = vpack.c.b16 %v900, %v899
    %v934 = vpack.c.b16 %v902, %v901
    %967 = vmatpush.bf16.msra.mxu0 %v910
    %968 = vmatpush.bf16.msra.mxu0 %v909
    %969 = vmatpush.bf16.msra.mxu0 %v908
    %970 = vmatpush.bf16.msra.mxu0 %v907
    %971 = vmatpush.bf16.msra.mxu0 %v906
    %972 = vmatpush.bf16.msra.mxu0 %v905
    %973 = vmatpush.bf16.msra.mxu0 %v904
    %974 = vmatpush.bf16.msra.mxu0 %v903
    %975 = vmatmul.bf16.gmra.mxu0 %v703
    %v976 = vpop.f32.mrf.mxu0
    %v977 = vadd.f32 0.0, %v976
    %v978 = vpop.f32.mrf.mxu0
    %v979 = vadd.f32 0.0, %v978
    %980 = vdwg.mxu0
    %981 = vmatpush.bf16.msra.mxu0 %v918
    %982 = vmatpush.bf16.msra.mxu0 %v917
    %983 = vmatpush.bf16.msra.mxu0 %v916
    %984 = vmatpush.bf16.msra.mxu0 %v915
    %985 = vmatpush.bf16.msra.mxu0 %v914
    %986 = vmatpush.bf16.msra.mxu0 %v913
    %987 = vmatpush.bf16.msra.mxu0 %v912
    %988 = vmatpush.bf16.msra.mxu0 %v911
    %989 = vmatmul.bf16.gmra.mxu0 %v704
    %v990 = vpop.f32.mrf.mxu0
    %v991 = vadd.f32 %v977, %v990
    %v992 = vpop.f32.mrf.mxu0
    %v993 = vadd.f32 %v979, %v992
    %994 = vdwg.mxu0
    %995 = vmatpush.bf16.msra.mxu0 %v926
    %996 = vmatpush.bf16.msra.mxu0 %v925
    %997 = vmatpush.bf16.msra.mxu0 %v924
    %998 = vmatpush.bf16.msra.mxu0 %v923
    %999 = vmatpush.bf16.msra.mxu0 %v922
    %1000 = vmatpush.bf16.msra.mxu0 %v921
    %1001 = vmatpush.bf16.msra.mxu0 %v920
    %1002 = vmatpush.bf16.msra.mxu0 %v919
    %1003 = vmatmul.bf16.gmra.mxu0 %v705
    %v1004 = vpop.f32.mrf.mxu0
    %v1005 = vadd.f32 %v991, %v1004
    %v1006 = vpop.f32.mrf.mxu0
    %v1007 = vadd.f32 %v993, %v1006
    %1008 = vdwg.mxu0
    %1009 = vmatpush.bf16.msra.mxu0 %v934
    %1010 = vmatpush.bf16.msra.mxu0 %v933
    %1011 = vmatpush.bf16.msra.mxu0 %v932
    %1012 = vmatpush.bf16.msra.mxu0 %v931
    %1013 = vmatpush.bf16.msra.mxu0 %v930
    %1014 = vmatpush.bf16.msra.mxu0 %v929
    %1015 = vmatpush.bf16.msra.mxu0 %v928
    %1016 = vmatpush.bf16.msra.mxu0 %v927
    %1017 = vmatmul.bf16.gmra.mxu0 %v706
    %v1018 = vpop.f32.mrf.mxu0
    %v1019 = vadd.f32 %v1005, %v1018
    %v1020 = vpop.f32.mrf.mxu0
    %v1021 = vadd.f32 %v1007, %v1020
    %1022 = vdwg.mxu0
    %v1023 = vlaneseq
    %v1024 = vshrl.u32 %v1023, 7
    %v1025 = vadd.s32 %v1024, 8
    %v1026 = vadd.s32 %v1024, 16
    %v1027 = vadd.s32 %v1024, 24
    %v1028 = vadd.s32 %v1024, 32
    %v1029 = vadd.s32 %v1024, 40
    %v1030 = vadd.s32 %v1024, 48
    %v1031 = vadd.s32 %v1024, 56
    %v1032 = vadd.s32 %v1024, 64
    %v1033 = vadd.s32 %v1024, 72
    %v1034 = vadd.s32 %v1024, 80
    %v1035 = vadd.s32 %v1024, 88
    %v1036 = vadd.s32 %v1024, 96
    %v1037 = vadd.s32 %v1024, 104
    %v1038 = vadd.s32 %v1024, 112
    %v1039 = vadd.s32 %v1024, 120
    %v1040 = vlaneseq
    %v1041 = vand.u32 %v1040, 127
    %v1042 = vand.u32 %v1024, 15
    %v1043 = vand.u32 %v1025, 15
    %v1044 = vand.u32 %v1026, 15
    %v1045 = vand.u32 %v1027, 15
    %v1046 = vand.u32 %v1028, 15
    %v1047 = vand.u32 %v1029, 15
    %v1048 = vand.u32 %v1030, 15
    %v1049 = vand.u32 %v1031, 15
    %v1050 = vand.u32 %v1032, 15
    %v1051 = vand.u32 %v1033, 15
    %v1052 = vand.u32 %v1034, 15
    %v1053 = vand.u32 %v1035, 15
    %v1054 = vand.u32 %v1036, 15
    %v1055 = vand.u32 %v1037, 15
    %v1056 = vand.u32 %v1038, 15
    %v1057 = vand.u32 %v1039, 15
    %v1058 = vand.u32 %v1041, 15
    %vm1059 = vcmp.eq.s32.totalorder %v1042, %v1058
    %vm1060 = vcmp.eq.s32.totalorder %v1043, %v1058
    %vm1061 = vcmp.eq.s32.totalorder %v1044, %v1058
    %vm1062 = vcmp.eq.s32.totalorder %v1045, %v1058
    %vm1063 = vcmp.eq.s32.totalorder %v1046, %v1058
    %vm1064 = vcmp.eq.s32.totalorder %v1047, %v1058
    %vm1065 = vcmp.eq.s32.totalorder %v1048, %v1058
    %vm1066 = vcmp.eq.s32.totalorder %v1049, %v1058
    %vm1067 = vcmp.eq.s32.totalorder %v1050, %v1058
    %vm1068 = vcmp.eq.s32.totalorder %v1051, %v1058
    %vm1069 = vcmp.eq.s32.totalorder %v1052, %v1058
    %vm1070 = vcmp.eq.s32.totalorder %v1053, %v1058
    %vm1071 = vcmp.eq.s32.totalorder %v1054, %v1058
    %vm1072 = vcmp.eq.s32.totalorder %v1055, %v1058
    %vm1073 = vcmp.eq.s32.totalorder %v1056, %v1058
    %vm1074 = vcmp.eq.s32.totalorder %v1057, %v1058
    %v1075 = vsel %vm1059, 0.0078125, 0.0
    %v1076 = vsel %vm1060, 0.0078125, 0.0
    %v1077 = vsel %vm1061, 0.0078125, 0.0
    %v1078 = vsel %vm1062, 0.0078125, 0.0
    %v1079 = vsel %vm1063, 0.0078125, 0.0
    %v1080 = vsel %vm1064, 0.0078125, 0.0
    %v1081 = vsel %vm1065, 0.0078125, 0.0
    %v1082 = vsel %vm1066, 0.0078125, 0.0
    %v1083 = vsel %vm1067, 0.0078125, 0.0
    %v1084 = vsel %vm1068, 0.0078125, 0.0
    %v1085 = vsel %vm1069, 0.0078125, 0.0
    %v1086 = vsel %vm1070, 0.0078125, 0.0
    %v1087 = vsel %vm1071, 0.0078125, 0.0
    %v1088 = vsel %vm1072, 0.0078125, 0.0
    %v1089 = vsel %vm1073, 0.0078125, 0.0
    %v1090 = vsel %vm1074, 0.0078125, 0.0
    %1091 = vmatpush.msra.mxu0 %v1090
    %1092 = vmatpush.msra.mxu0 %v1089
    %1093 = vmatpush.msra.mxu0 %v1088
    %1094 = vmatpush.msra.mxu0 %v1087
    %1095 = vmatpush.msra.mxu0 %v1086
    %1096 = vmatpush.msra.mxu0 %v1085
    %1097 = vmatpush.msra.mxu0 %v1084
    %1098 = vmatpush.msra.mxu0 %v1083
    %1099 = vmatpush.msra.mxu0 %v1082
    %1100 = vmatpush.msra.mxu0 %v1081
    %1101 = vmatpush.msra.mxu0 %v1080
    %1102 = vmatpush.msra.mxu0 %v1079
    %1103 = vmatpush.msra.mxu0 %v1078
    %1104 = vmatpush.msra.mxu0 %v1077
    %1105 = vmatpush.msra.mxu0 %v1076
    %1106 = vmatpush.msra.mxu0 %v1075
    %1107 = vmatmul.f32.gmra.mxu0 %v1019
    %v1108 = vpop.f32.mrf.mxu0
    %v1109 = vadd.f32 0.0, %v1108
    %1110 = vmatmul.f32.gmra.mxu0 %v1021
    %v1111 = vpop.f32.mrf.mxu0
    %v1112 = vadd.f32 0.0, %v1111
    %1113 = vdwg.mxu0
    %v1114 = vadd.f32 %v1109, %v1112
    %v1115 = vrot.slane %v1114, 4
    %v1116 = vadd.f32 %v1114, %v1115
    %v1117 = vrot.slane %v1116, 2
    %v1118 = vadd.f32 %v1116, %v1117
    %v1119 = vrot.slane %v1118, 1
    %v1120 = vadd.f32 %v1118, %v1119
    %v1121 = vsub.f32 %v1019, %v1120
    %v1122 = vsub.f32 %v1021, %v1120
    %v1123 = vmul.f32 %v1121, %v1121
    %v1124 = vmul.f32 %v1122, %v1122
    %1125 = vmatpush.msra.mxu0 %v1090
    %1126 = vmatpush.msra.mxu0 %v1089
    %1127 = vmatpush.msra.mxu0 %v1088
    %1128 = vmatpush.msra.mxu0 %v1087
    %1129 = vmatpush.msra.mxu0 %v1086
    %1130 = vmatpush.msra.mxu0 %v1085
    %1131 = vmatpush.msra.mxu0 %v1084
    %1132 = vmatpush.msra.mxu0 %v1083
    %1133 = vmatpush.msra.mxu0 %v1082
    %1134 = vmatpush.msra.mxu0 %v1081
    %1135 = vmatpush.msra.mxu0 %v1080
    %1136 = vmatpush.msra.mxu0 %v1079
    %1137 = vmatpush.msra.mxu0 %v1078
    %1138 = vmatpush.msra.mxu0 %v1077
    %1139 = vmatpush.msra.mxu0 %v1076
    %1140 = vmatpush.msra.mxu0 %v1075
    %1141 = vmatmul.f32.gmra.mxu0 %v1123
    %v1142 = vpop.f32.mrf.mxu0
    %v1143 = vadd.f32 0.0, %v1142
    %1144 = vmatmul.f32.gmra.mxu0 %v1124
    %v1145 = vpop.f32.mrf.mxu0
    %v1146 = vadd.f32 0.0, %v1145
    %1147 = vdwg.mxu0
    %v1148 = vadd.f32 %v1143, %v1146
    %v1149 = vrot.slane %v1148, 4
    %v1150 = vadd.f32 %v1148, %v1149
    %v1151 = vrot.slane %v1150, 2
    %v1152 = vadd.f32 %v1150, %v1151
    %v1153 = vrot.slane %v1152, 1
    %v1154 = vadd.f32 %v1152, %v1153
    %v1155 = vmax.f32 %v1154, 0.0
    %v1156 = vadd.f32 %v1155, 1e-05
    %v1157 = vrsqrt.pop %v1156
    %v1158 = vmul.f32 %v1157, %v1156
    %v1159 = vmul.f32 %v1158, %v1157
    %v1160 = vmul.f32 0.5, %v1159
    %v1161 = vsub.f32 1.5, %v1160
    %v1162 = vmul.f32 %v1157, %v1161
    %vm1163 = vweird.f32 %v1156
    %vm1164 = vweird.f32 %v1157
    %vm1165 = vmor %vm1163, %vm1164
    %v1166 = vsel %vm1165, %v1157, %v1162
    %v1167 = vmul.f32 %v1121, %v1166
    %v1168 = vmul.f32 %v1122, %v1166
    %v1169 = vld [vmem:[%s4] sm:$0x1]
    %v1171 = vperm.slane %v1169, 0
    %v1173 = vmul.f32 %v1167, %v1171
    %v1174 = vmul.f32 %v1168, %v1171
    %v1175 = vld [vmem:[%s5] sm:$0x1]
    %v1177 = vperm.slane %v1175, 0
    %v1179 = vadd.f32 %v1173, %v1177
    %v1180 = vadd.f32 %v1174, %v1177
    %vm1181 = vcmp.gt.f32.partialorder %v1179, 0.0
    %vm1182 = vcmp.gt.f32.partialorder %v1180, 0.0
    %v1183 = vmul.f32 %v1179, 0.2
    %v1184 = vmul.f32 %v1180, 0.2
    %v1185 = vsel %vm1181, %v1179, %v1183
    %v1186 = vsel %vm1182, %v1180, %v1184
    %1187 = vst [vmem:[#allocation7 + $0x1] sm:$0xff] %v1185
    %1188 = vst [vmem:[#allocation7 + $0xb] sm:$0xff] %v1186
    %v1189 = vld [vmem:[#allocation7] ss:$2 sm:$0xf]
    %s1190 = scalar_lea.vmem [#allocation7], 10
    %v1191 = vld [vmem:[%s1190] ss:$2 sm:$0xf]
    %v1193 = vrot.slane %v1191, 4
    %vm1195 = vcmask 1043456
    %v1196 = vsel %vm1195, %v1189, %v1193
    %s1197 = scalar_lea.vmem [#allocation7], 1
    %v1198 = vld [vmem:[%s1197] ss:$2 sm:$0xf]
    %s1199 = scalar_lea.vmem [#allocation7], 11
    %v1200 = vld [vmem:[%s1199] ss:$2 sm:$0xf]
    %v1202 = vrot.slane %v1200, 4
    %v1204 = vsel %vm1195, %v1198, %v1202
    %s1205 = scalar_lea.vmem [#allocation7], 2
    %v1206 = vld [vmem:[%s1205] ss:$2 sm:$0xf]
    %s1207 = scalar_lea.vmem [#allocation7], 12
    %v1208 = vld [vmem:[%s1207] ss:$2 sm:$0xf]
    %v1210 = vrot.slane %v1208, 4
    %v1212 = vsel %vm1195, %v1206, %v1210
    %s1213 = scalar_lea.vmem [#allocation7], 3
    %v1214 = vld [vmem:[%s1213] ss:$2 sm:$0xf]
    %s1215 = scalar_lea.vmem [#allocation7], 13
    %v1216 = vld [vmem:[%s1215] ss:$2 sm:$0xf]
    %v1218 = vrot.slane %v1216, 4
    %v1220 = vsel %vm1195, %v1214, %v1218
    %v1221 = vpack.c.bf16 %v1196, %v1196
    %v1222 = vpack.c.bf16 %v1204, %v1204
    %v1223 = vpack.c.bf16 %v1212, %v1212
    %v1224 = vpack.c.bf16 %v1220, %v1220
    %s1225 = sshll.u32 %s708, 4
    %1226 = dma.done %s122, %s1225
    %v1227 = vld [vmem:[#allocation3] sm:$0xf]
    %v1228 = vld [vmem:[#allocation3 + $0x4] sm:$0xf]
    %v1229 = vld [vmem:[#allocation3 + $0x8] sm:$0xf]
    %v1230 = vld [vmem:[#allocation3 + $0xc] sm:$0xf]
    %v1231 = vld [vmem:[#allocation3 + $0x10] sm:$0xf]
    %v1232 = vld [vmem:[#allocation3 + $0x14] sm:$0xf]
    %v1233 = vld [vmem:[#allocation3 + $0x18] sm:$0xf]
    %v1234 = vld [vmem:[#allocation3 + $0x1c] sm:$0xf]
    %v1235 = vld [vmem:[#allocation3 + $0x20] sm:$0xf]
    %v1236 = vld [vmem:[#allocation3 + $0x24] sm:$0xf]
    %v1237 = vld [vmem:[#allocation3 + $0x28] sm:$0xf]
    %v1238 = vld [vmem:[#allocation3 + $0x2c] sm:$0xf]
    %v1239 = vld [vmem:[#allocation3 + $0x30] sm:$0xf]
    %v1240 = vld [vmem:[#allocation3 + $0x34] sm:$0xf]
    %v1241 = vld [vmem:[#allocation3 + $0x38] sm:$0xf]
    %v1242 = vld [vmem:[#allocation3 + $0x3c] sm:$0xf]
    %v1243 = vld [vmem:[#allocation3 + $0x40] sm:$0xf]
    %v1244 = vld [vmem:[#allocation3 + $0x44] sm:$0xf]
    %v1245 = vld [vmem:[#allocation3 + $0x48] sm:$0xf]
    %v1246 = vld [vmem:[#allocation3 + $0x4c] sm:$0xf]
    %v1247 = vld [vmem:[#allocation3 + $0x50] sm:$0xf]
    %v1248 = vld [vmem:[#allocation3 + $0x54] sm:$0xf]
    %v1249 = vld [vmem:[#allocation3 + $0x58] sm:$0xf]
    %v1250 = vld [vmem:[#allocation3 + $0x5c] sm:$0xf]
    %v1251 = vld [vmem:[#allocation3 + $0x60] sm:$0xf]
    %v1252 = vld [vmem:[#allocation3 + $0x64] sm:$0xf]
    %v1253 = vld [vmem:[#allocation3 + $0x68] sm:$0xf]
    %v1254 = vld [vmem:[#allocation3 + $0x6c] sm:$0xf]
    %v1255 = vld [vmem:[#allocation3 + $0x70] sm:$0xf]
    %v1256 = vld [vmem:[#allocation3 + $0x74] sm:$0xf]
    %v1257 = vld [vmem:[#allocation3 + $0x78] sm:$0xf]
    %v1258 = vld [vmem:[#allocation3 + $0x7c] sm:$0xf]
    %v1259 = vld [vmem:[#allocation3 + $0x80] sm:$0xf]
    %v1260 = vld [vmem:[#allocation3 + $0x84] sm:$0xf]
    %v1261 = vld [vmem:[#allocation3 + $0x88] sm:$0xf]
    %v1262 = vld [vmem:[#allocation3 + $0x8c] sm:$0xf]
    %v1263 = vld [vmem:[#allocation3 + $0x90] sm:$0xf]
    %v1264 = vld [vmem:[#allocation3 + $0x94] sm:$0xf]
    %v1265 = vld [vmem:[#allocation3 + $0x98] sm:$0xf]
    %v1266 = vld [vmem:[#allocation3 + $0x9c] sm:$0xf]
    %v1267 = vld [vmem:[#allocation3 + $0xa0] sm:$0xf]
    %v1268 = vld [vmem:[#allocation3 + $0xa4] sm:$0xf]
    %v1269 = vld [vmem:[#allocation3 + $0xa8] sm:$0xf]
    %v1270 = vld [vmem:[#allocation3 + $0xac] sm:$0xf]
    %v1271 = vld [vmem:[#allocation3 + $0xb0] sm:$0xf]
    %v1272 = vld [vmem:[#allocation3 + $0xb4] sm:$0xf]
    %v1273 = vld [vmem:[#allocation3 + $0xb8] sm:$0xf]
    %v1274 = vld [vmem:[#allocation3 + $0xbc] sm:$0xf]
    %v1275 = vld [vmem:[#allocation3 + $0xc0] sm:$0xf]
    %v1276 = vld [vmem:[#allocation3 + $0xc4] sm:$0xf]
    %v1277 = vld [vmem:[#allocation3 + $0xc8] sm:$0xf]
    %v1278 = vld [vmem:[#allocation3 + $0xcc] sm:$0xf]
    %v1279 = vld [vmem:[#allocation3 + $0xd0] sm:$0xf]
    %v1280 = vld [vmem:[#allocation3 + $0xd4] sm:$0xf]
    %v1281 = vld [vmem:[#allocation3 + $0xd8] sm:$0xf]
    %v1282 = vld [vmem:[#allocation3 + $0xdc] sm:$0xf]
    %v1283 = vld [vmem:[#allocation3 + $0xe0] sm:$0xf]
    %v1284 = vld [vmem:[#allocation3 + $0xe4] sm:$0xf]
    %v1285 = vld [vmem:[#allocation3 + $0xe8] sm:$0xf]
    %v1286 = vld [vmem:[#allocation3 + $0xec] sm:$0xf]
    %v1287 = vld [vmem:[#allocation3 + $0xf0] sm:$0xf]
    %v1288 = vld [vmem:[#allocation3 + $0xf4] sm:$0xf]
    %v1289 = vld [vmem:[#allocation3 + $0xf8] sm:$0xf]
    %v1290 = vld [vmem:[#allocation3 + $0xfc] sm:$0xf]
    %v1355 = vunpack.c.l.b16 %v1227
    %v1356 = vunpack.c.l.b16 %v1228
    %v1357 = vunpack.c.l.b16 %v1229
    %v1358 = vunpack.c.l.b16 %v1230
    %v1359 = vunpack.c.l.b16 %v1231
    %v1360 = vunpack.c.l.b16 %v1232
    %v1361 = vunpack.c.l.b16 %v1233
    %v1362 = vunpack.c.l.b16 %v1234
    %v1363 = vunpack.c.l.b16 %v1235
    %v1364 = vunpack.c.l.b16 %v1236
    %v1365 = vunpack.c.l.b16 %v1237
    %v1366 = vunpack.c.l.b16 %v1238
    %v1367 = vunpack.c.l.b16 %v1239
    %v1368 = vunpack.c.l.b16 %v1240
    %v1369 = vunpack.c.l.b16 %v1241
    %v1370 = vunpack.c.l.b16 %v1242
    %v1371 = vunpack.c.l.b16 %v1243
    %v1372 = vunpack.c.l.b16 %v1244
    %v1373 = vunpack.c.l.b16 %v1245
    %v1374 = vunpack.c.l.b16 %v1246
    %v1375 = vunpack.c.l.b16 %v1247
    %v1376 = vunpack.c.l.b16 %v1248
    %v1377 = vunpack.c.l.b16 %v1249
    %v1378 = vunpack.c.l.b16 %v1250
    %v1379 = vunpack.c.l.b16 %v1251
    %v1380 = vunpack.c.l.b16 %v1252
    %v1381 = vunpack.c.l.b16 %v1253
    %v1382 = vunpack.c.l.b16 %v1254
    %v1383 = vunpack.c.l.b16 %v1255
    %v1384 = vunpack.c.l.b16 %v1256
    %v1385 = vunpack.c.l.b16 %v1257
    %v1386 = vunpack.c.l.b16 %v1258
    %v1387 = vunpack.c.l.b16 %v1259
    %v1388 = vunpack.c.l.b16 %v1260
    %v1389 = vunpack.c.l.b16 %v1261
    %v1390 = vunpack.c.l.b16 %v1262
    %v1391 = vunpack.c.l.b16 %v1263
    %v1392 = vunpack.c.l.b16 %v1264
    %v1393 = vunpack.c.l.b16 %v1265
    %v1394 = vunpack.c.l.b16 %v1266
    %v1395 = vunpack.c.l.b16 %v1267
    %v1396 = vunpack.c.l.b16 %v1268
    %v1397 = vunpack.c.l.b16 %v1269
    %v1398 = vunpack.c.l.b16 %v1270
    %v1399 = vunpack.c.l.b16 %v1271
    %v1400 = vunpack.c.l.b16 %v1272
    %v1401 = vunpack.c.l.b16 %v1273
    %v1402 = vunpack.c.l.b16 %v1274
    %v1403 = vunpack.c.l.b16 %v1275
    %v1404 = vunpack.c.l.b16 %v1276
    %v1405 = vunpack.c.l.b16 %v1277
    %v1406 = vunpack.c.l.b16 %v1278
    %v1407 = vunpack.c.l.b16 %v1279
    %v1408 = vunpack.c.l.b16 %v1280
    %v1409 = vunpack.c.l.b16 %v1281
    %v1410 = vunpack.c.l.b16 %v1282
    %v1411 = vunpack.c.l.b16 %v1283
    %v1412 = vunpack.c.l.b16 %v1284
    %v1413 = vunpack.c.l.b16 %v1285
    %v1414 = vunpack.c.l.b16 %v1286
    %v1415 = vunpack.c.l.b16 %v1287
    %v1416 = vunpack.c.l.b16 %v1288
    %v1417 = vunpack.c.l.b16 %v1289
    %v1418 = vunpack.c.l.b16 %v1290
    %v1419 = vpack.c.b16 %v1356, %v1355
    %v1420 = vpack.c.b16 %v1358, %v1357
    %v1421 = vpack.c.b16 %v1360, %v1359
    %v1422 = vpack.c.b16 %v1362, %v1361
    %v1423 = vpack.c.b16 %v1364, %v1363
    %v1424 = vpack.c.b16 %v1366, %v1365
    %v1425 = vpack.c.b16 %v1368, %v1367
    %v1426 = vpack.c.b16 %v1370, %v1369
    %v1427 = vpack.c.b16 %v1372, %v1371
    %v1428 = vpack.c.b16 %v1374, %v1373
    %v1429 = vpack.c.b16 %v1376, %v1375
    %v1430 = vpack.c.b16 %v1378, %v1377
    %v1431 = vpack.c.b16 %v1380, %v1379
    %v1432 = vpack.c.b16 %v1382, %v1381
    %v1433 = vpack.c.b16 %v1384, %v1383
    %v1434 = vpack.c.b16 %v1386, %v1385
    %v1435 = vpack.c.b16 %v1388, %v1387
    %v1436 = vpack.c.b16 %v1390, %v1389
    %v1437 = vpack.c.b16 %v1392, %v1391
    %v1438 = vpack.c.b16 %v1394, %v1393
    %v1439 = vpack.c.b16 %v1396, %v1395
    %v1440 = vpack.c.b16 %v1398, %v1397
    %v1441 = vpack.c.b16 %v1400, %v1399
    %v1442 = vpack.c.b16 %v1402, %v1401
    %v1443 = vpack.c.b16 %v1404, %v1403
    %v1444 = vpack.c.b16 %v1406, %v1405
    %v1445 = vpack.c.b16 %v1408, %v1407
    %v1446 = vpack.c.b16 %v1410, %v1409
    %v1447 = vpack.c.b16 %v1412, %v1411
    %v1448 = vpack.c.b16 %v1414, %v1413
    %v1449 = vpack.c.b16 %v1416, %v1415
    %v1450 = vpack.c.b16 %v1418, %v1417
    %1483 = vmatpush.bf16.msra.mxu0 %v1426
    %1484 = vmatpush.bf16.msra.mxu0 %v1425
    %1485 = vmatpush.bf16.msra.mxu0 %v1424
    %1486 = vmatpush.bf16.msra.mxu0 %v1423
    %1487 = vmatpush.bf16.msra.mxu0 %v1422
    %1488 = vmatpush.bf16.msra.mxu0 %v1421
    %1489 = vmatpush.bf16.msra.mxu0 %v1420
    %1490 = vmatpush.bf16.msra.mxu0 %v1419
    %1491 = vmatmul.bf16.gmra.mxu0 %v1221
    %v1492 = vpop.f32.mrf.mxu0
    %v1493 = vadd.f32 0.0, %v1492
    %v1494 = vpop.f32.mrf.mxu0
    %1495 = vdwg.mxu0
    %1496 = vmatpush.bf16.msra.mxu0 %v1434
    %1497 = vmatpush.bf16.msra.mxu0 %v1433
    %1498 = vmatpush.bf16.msra.mxu0 %v1432
    %1499 = vmatpush.bf16.msra.mxu0 %v1431
    %1500 = vmatpush.bf16.msra.mxu0 %v1430
    %1501 = vmatpush.bf16.msra.mxu0 %v1429
    %1502 = vmatpush.bf16.msra.mxu0 %v1428
    %1503 = vmatpush.bf16.msra.mxu0 %v1427
    %1504 = vmatmul.bf16.gmra.mxu0 %v1222
    %v1505 = vpop.f32.mrf.mxu0
    %v1506 = vadd.f32 %v1493, %v1505
    %v1507 = vpop.f32.mrf.mxu0
    %1508 = vdwg.mxu0
    %1509 = vmatpush.bf16.msra.mxu0 %v1442
    %1510 = vmatpush.bf16.msra.mxu0 %v1441
    %1511 = vmatpush.bf16.msra.mxu0 %v1440
    %1512 = vmatpush.bf16.msra.mxu0 %v1439
    %1513 = vmatpush.bf16.msra.mxu0 %v1438
    %1514 = vmatpush.bf16.msra.mxu0 %v1437
    %1515 = vmatpush.bf16.msra.mxu0 %v1436
    %1516 = vmatpush.bf16.msra.mxu0 %v1435
    %1517 = vmatmul.bf16.gmra.mxu0 %v1223
    %v1518 = vpop.f32.mrf.mxu0
    %v1519 = vadd.f32 %v1506, %v1518
    %v1520 = vpop.f32.mrf.mxu0
    %1521 = vdwg.mxu0
    %1522 = vmatpush.bf16.msra.mxu0 %v1450
    %1523 = vmatpush.bf16.msra.mxu0 %v1449
    %1524 = vmatpush.bf16.msra.mxu0 %v1448
    %1525 = vmatpush.bf16.msra.mxu0 %v1447
    %1526 = vmatpush.bf16.msra.mxu0 %v1446
    %1527 = vmatpush.bf16.msra.mxu0 %v1445
    %1528 = vmatpush.bf16.msra.mxu0 %v1444
    %1529 = vmatpush.bf16.msra.mxu0 %v1443
    %1530 = vmatmul.bf16.gmra.mxu0 %v1224
    %v1531 = vpop.f32.mrf.mxu0
    %v1532 = vadd.f32 %v1519, %v1531
    %v1533 = vpop.f32.mrf.mxu0
    %1534 = vdwg.mxu0
    %v1535 = vand.u32 %v1024, 31
    %v1536 = vand.u32 %v1025, 31
    %v1537 = vand.u32 %v1026, 31
    %v1538 = vand.u32 %v1027, 31
    %v1539 = vand.u32 %v1028, 31
    %v1540 = vand.u32 %v1029, 31
    %v1541 = vand.u32 %v1030, 31
    %v1542 = vand.u32 %v1031, 31
    %v1543 = vand.u32 %v1032, 31
    %v1544 = vand.u32 %v1033, 31
    %v1545 = vand.u32 %v1034, 31
    %v1546 = vand.u32 %v1035, 31
    %v1547 = vand.u32 %v1036, 31
    %v1548 = vand.u32 %v1037, 31
    %v1549 = vand.u32 %v1038, 31
    %v1550 = vand.u32 %v1039, 31
    %v1551 = vand.u32 %v1041, 31
    %vm1552 = vcmp.eq.s32.totalorder %v1535, %v1551
    %vm1553 = vcmp.eq.s32.totalorder %v1536, %v1551
    %vm1554 = vcmp.eq.s32.totalorder %v1537, %v1551
    %vm1555 = vcmp.eq.s32.totalorder %v1538, %v1551
    %vm1556 = vcmp.eq.s32.totalorder %v1539, %v1551
    %vm1557 = vcmp.eq.s32.totalorder %v1540, %v1551
    %vm1558 = vcmp.eq.s32.totalorder %v1541, %v1551
    %vm1559 = vcmp.eq.s32.totalorder %v1542, %v1551
    %vm1560 = vcmp.eq.s32.totalorder %v1543, %v1551
    %vm1561 = vcmp.eq.s32.totalorder %v1544, %v1551
    %vm1562 = vcmp.eq.s32.totalorder %v1545, %v1551
    %vm1563 = vcmp.eq.s32.totalorder %v1546, %v1551
    %vm1564 = vcmp.eq.s32.totalorder %v1547, %v1551
    %vm1565 = vcmp.eq.s32.totalorder %v1548, %v1551
    %vm1566 = vcmp.eq.s32.totalorder %v1549, %v1551
    %vm1567 = vcmp.eq.s32.totalorder %v1550, %v1551
    %v1568 = vsel %vm1552, 0.03125, 0.0
    %v1569 = vsel %vm1553, 0.03125, 0.0
    %v1570 = vsel %vm1554, 0.03125, 0.0
    %v1571 = vsel %vm1555, 0.03125, 0.0
    %v1572 = vsel %vm1556, 0.03125, 0.0
    %v1573 = vsel %vm1557, 0.03125, 0.0
    %v1574 = vsel %vm1558, 0.03125, 0.0
    %v1575 = vsel %vm1559, 0.03125, 0.0
    %v1576 = vsel %vm1560, 0.03125, 0.0
    %v1577 = vsel %vm1561, 0.03125, 0.0
    %v1578 = vsel %vm1562, 0.03125, 0.0
    %v1579 = vsel %vm1563, 0.03125, 0.0
    %v1580 = vsel %vm1564, 0.03125, 0.0
    %v1581 = vsel %vm1565, 0.03125, 0.0
    %v1582 = vsel %vm1566, 0.03125, 0.0
    %v1583 = vsel %vm1567, 0.03125, 0.0
    %1584 = vmatpush.msra.mxu0 %v1583
    %1585 = vmatpush.msra.mxu0 %v1582
    %1586 = vmatpush.msra.mxu0 %v1581
    %1587 = vmatpush.msra.mxu0 %v1580
    %1588 = vmatpush.msra.mxu0 %v1579
    %1589 = vmatpush.msra.mxu0 %v1578
    %1590 = vmatpush.msra.mxu0 %v1577
    %1591 = vmatpush.msra.mxu0 %v1576
    %1592 = vmatpush.msra.mxu0 %v1575
    %1593 = vmatpush.msra.mxu0 %v1574
    %1594 = vmatpush.msra.mxu0 %v1573
    %1595 = vmatpush.msra.mxu0 %v1572
    %1596 = vmatpush.msra.mxu0 %v1571
    %1597 = vmatpush.msra.mxu0 %v1570
    %1598 = vmatpush.msra.mxu0 %v1569
    %1599 = vmatpush.msra.mxu0 %v1568
    %1600 = vmatmul.f32.gmra.mxu0 %v1532
    %v1601 = vpop.f32.mrf.mxu0
    %v1602 = vadd.f32 0.0, %v1601
    %1603 = vdwg.mxu0
    %v1604 = vrot.slane %v1602, 4
    %v1605 = vadd.f32 %v1602, %v1604
    %v1606 = vrot.slane %v1605, 2
    %v1607 = vadd.f32 %v1605, %v1606
    %v1608 = vrot.slane %v1607, 1
    %v1609 = vadd.f32 %v1607, %v1608
    %v1610 = vsub.f32 %v1532, %v1609
    %v1611 = vmul.f32 %v1610, %v1610
    %1612 = vmatpush.msra.mxu0 %v1583
    %1613 = vmatpush.msra.mxu0 %v1582
    %1614 = vmatpush.msra.mxu0 %v1581
    %1615 = vmatpush.msra.mxu0 %v1580
    %1616 = vmatpush.msra.mxu0 %v1579
    %1617 = vmatpush.msra.mxu0 %v1578
    %1618 = vmatpush.msra.mxu0 %v1577
    %1619 = vmatpush.msra.mxu0 %v1576
    %1620 = vmatpush.msra.mxu0 %v1575
    %1621 = vmatpush.msra.mxu0 %v1574
    %1622 = vmatpush.msra.mxu0 %v1573
    %1623 = vmatpush.msra.mxu0 %v1572
    %1624 = vmatpush.msra.mxu0 %v1571
    %1625 = vmatpush.msra.mxu0 %v1570
    %1626 = vmatpush.msra.mxu0 %v1569
    %1627 = vmatpush.msra.mxu0 %v1568
    %1628 = vmatmul.f32.gmra.mxu0 %v1611
    %v1629 = vpop.f32.mrf.mxu0
    %v1630 = vadd.f32 0.0, %v1629
    %1631 = vdwg.mxu0
    %v1632 = vrot.slane %v1630, 4
    %v1633 = vadd.f32 %v1630, %v1632
    %v1634 = vrot.slane %v1633, 2
    %v1635 = vadd.f32 %v1633, %v1634
    %v1636 = vrot.slane %v1635, 1
    %v1637 = vadd.f32 %v1635, %v1636
    %v1638 = vmax.f32 %v1637, 0.0
    %v1639 = vadd.f32 %v1638, 1e-05
    %v1640 = vrsqrt.pop %v1639
    %v1641 = vmul.f32 %v1640, %v1639
    %v1642 = vmul.f32 %v1641, %v1640
    %v1643 = vmul.f32 0.5, %v1642
    %v1644 = vsub.f32 1.5, %v1643
    %v1645 = vmul.f32 %v1640, %v1644
    %vm1646 = vweird.f32 %v1639
    %vm1647 = vweird.f32 %v1640
    %vm1648 = vmor %vm1646, %vm1647
    %v1649 = vsel %vm1648, %v1640, %v1645
    %v1650 = vmul.f32 %v1610, %v1649
    %v1651 = vld [vmem:[%s7] sm:$0x1]
    %v1653 = vperm.slane %v1651, 0
    %v1655 = vmul.f32 %v1650, %v1653
    %v1656 = vld [vmem:[%s8] sm:$0x1]
    %v1658 = vperm.slane %v1656, 0
    %v1660 = vadd.f32 %v1655, %v1658
    %vm1661 = vcmp.gt.f32.partialorder %v1660, 0.0
    %v1662 = vmul.f32 %v1660, 0.2
    %v1663 = vsel %vm1661, %v1660, %v1662
    %1664 = vst [vmem:[#allocation8 + $0x1] sm:$0xf] %v1663
    %1665 = vst [vmem:[#allocation8 + $0x3] sm:$0xf0] %v1663
    %v1666 = vld [vmem:[#allocation8] sm:$0x7]
    %v1667 = vld [vmem:[#allocation8 + $0x6] sm:$0x7]
    %v1669 = vrot.slane %v1667, 5
    %vm1671 = vcmask 1042432
    %v1672 = vsel %vm1671, %v1666, %v1669
    %v1673 = vld [vmem:[#allocation8 + $0x1] sm:$0x7]
    %v1674 = vld [vmem:[#allocation8 + $0x7] sm:$0x7]
    %v1676 = vrot.slane %v1674, 5
    %v1678 = vsel %vm1671, %v1673, %v1676
    %v1679 = vld [vmem:[#allocation8 + $0x2] sm:$0x7]
    %v1680 = vld [vmem:[#allocation8 + $0x8] sm:$0x7]
    %v1682 = vrot.slane %v1680, 5
    %v1684 = vsel %vm1671, %v1679, %v1682
    %v1685 = vld [vmem:[#allocation8 + $0x3] sm:$0x7]
    %v1686 = vld [vmem:[#allocation8 + $0x9] sm:$0x7]
    %v1688 = vrot.slane %v1686, 5
    %v1690 = vsel %vm1671, %v1685, %v1688
    %v1691 = vpack.c.bf16 %v1672, %v1672
    %v1692 = vpack.c.bf16 %v1678, %v1678
    %v1693 = vpack.c.bf16 %v1684, %v1684
    %v1694 = vpack.c.bf16 %v1690, %v1690
    %s1695 = smul.u32 %s707, 2
    %s1696 = sshll.u32 %s1695, 4
    %1697 = dma.done %s136, %s1696
    %v1698 = vld [vmem:[#allocation4] sm:$0xff]
    %v1699 = vld [vmem:[#allocation4 + $0x8] sm:$0xff]
    %v1700 = vld [vmem:[#allocation4 + $0x10] sm:$0xff]
    %v1701 = vld [vmem:[#allocation4 + $0x18] sm:$0xff]
    %v1702 = vld [vmem:[#allocation4 + $0x20] sm:$0xff]
    %v1703 = vld [vmem:[#allocation4 + $0x28] sm:$0xff]
    %v1704 = vld [vmem:[#allocation4 + $0x30] sm:$0xff]
    %v1705 = vld [vmem:[#allocation4 + $0x38] sm:$0xff]
    %v1706 = vld [vmem:[#allocation4 + $0x40] sm:$0xff]
    %v1707 = vld [vmem:[#allocation4 + $0x48] sm:$0xff]
    %v1708 = vld [vmem:[#allocation4 + $0x50] sm:$0xff]
    %v1709 = vld [vmem:[#allocation4 + $0x58] sm:$0xff]
    %v1710 = vld [vmem:[#allocation4 + $0x60] sm:$0xff]
    %v1711 = vld [vmem:[#allocation4 + $0x68] sm:$0xff]
    %v1712 = vld [vmem:[#allocation4 + $0x70] sm:$0xff]
    %v1713 = vld [vmem:[#allocation4 + $0x78] sm:$0xff]
    %v1714 = vld [vmem:[#allocation4 + $0x80] sm:$0xff]
    %v1715 = vld [vmem:[#allocation4 + $0x88] sm:$0xff]
    %v1716 = vld [vmem:[#allocation4 + $0x90] sm:$0xff]
    %v1717 = vld [vmem:[#allocation4 + $0x98] sm:$0xff]
    %v1718 = vld [vmem:[#allocation4 + $0xa0] sm:$0xff]
    %v1719 = vld [vmem:[#allocation4 + $0xa8] sm:$0xff]
    %v1720 = vld [vmem:[#allocation4 + $0xb0] sm:$0xff]
    %v1721 = vld [vmem:[#allocation4 + $0xb8] sm:$0xff]
    %v1722 = vld [vmem:[#allocation4 + $0xc0] sm:$0xff]
    %v1723 = vld [vmem:[#allocation4 + $0xc8] sm:$0xff]
    %v1724 = vld [vmem:[#allocation4 + $0xd0] sm:$0xff]
    %v1725 = vld [vmem:[#allocation4 + $0xd8] sm:$0xff]
    %v1726 = vld [vmem:[#allocation4 + $0xe0] sm:$0xff]
    %v1727 = vld [vmem:[#allocation4 + $0xe8] sm:$0xff]
    %v1728 = vld [vmem:[#allocation4 + $0xf0] sm:$0xff]
    %v1729 = vld [vmem:[#allocation4 + $0xf8] sm:$0xff]
    %v1730 = vld [vmem:[#allocation4 + $0x100] sm:$0xff]
    %v1731 = vld [vmem:[#allocation4 + $0x108] sm:$0xff]
    %v1732 = vld [vmem:[#allocation4 + $0x110] sm:$0xff]
    %v1733 = vld [vmem:[#allocation4 + $0x118] sm:$0xff]
    %v1734 = vld [vmem:[#allocation4 + $0x120] sm:$0xff]
    %v1735 = vld [vmem:[#allocation4 + $0x128] sm:$0xff]
    %v1736 = vld [vmem:[#allocation4 + $0x130] sm:$0xff]
    %v1737 = vld [vmem:[#allocation4 + $0x138] sm:$0xff]
    %v1738 = vld [vmem:[#allocation4 + $0x140] sm:$0xff]
    %v1739 = vld [vmem:[#allocation4 + $0x148] sm:$0xff]
    %v1740 = vld [vmem:[#allocation4 + $0x150] sm:$0xff]
    %v1741 = vld [vmem:[#allocation4 + $0x158] sm:$0xff]
    %v1742 = vld [vmem:[#allocation4 + $0x160] sm:$0xff]
    %v1743 = vld [vmem:[#allocation4 + $0x168] sm:$0xff]
    %v1744 = vld [vmem:[#allocation4 + $0x170] sm:$0xff]
    %v1745 = vld [vmem:[#allocation4 + $0x178] sm:$0xff]
    %v1746 = vld [vmem:[#allocation4 + $0x180] sm:$0xff]
    %v1747 = vld [vmem:[#allocation4 + $0x188] sm:$0xff]
    %v1748 = vld [vmem:[#allocation4 + $0x190] sm:$0xff]
    %v1749 = vld [vmem:[#allocation4 + $0x198] sm:$0xff]
    %v1750 = vld [vmem:[#allocation4 + $0x1a0] sm:$0xff]
    %v1751 = vld [vmem:[#allocation4 + $0x1a8] sm:$0xff]
    %v1752 = vld [vmem:[#allocation4 + $0x1b0] sm:$0xff]
    %v1753 = vld [vmem:[#allocation4 + $0x1b8] sm:$0xff]
    %v1754 = vld [vmem:[#allocation4 + $0x1c0] sm:$0xff]
    %v1755 = vld [vmem:[#allocation4 + $0x1c8] sm:$0xff]
    %v1756 = vld [vmem:[#allocation4 + $0x1d0] sm:$0xff]
    %v1757 = vld [vmem:[#allocation4 + $0x1d8] sm:$0xff]
    %v1758 = vld [vmem:[#allocation4 + $0x1e0] sm:$0xff]
    %v1759 = vld [vmem:[#allocation4 + $0x1e8] sm:$0xff]
    %v1760 = vld [vmem:[#allocation4 + $0x1f0] sm:$0xff]
    %v1761 = vld [vmem:[#allocation4 + $0x1f8] sm:$0xff]
    %v1826 = vunpack.c.l.b16 %v1698
    %v1827 = vunpack.c.h.b16 %v1698
    %v1828 = vunpack.c.l.b16 %v1699
    %v1829 = vunpack.c.h.b16 %v1699
    %v1830 = vunpack.c.l.b16 %v1700
    %v1831 = vunpack.c.h.b16 %v1700
    %v1832 = vunpack.c.l.b16 %v1701
    %v1833 = vunpack.c.h.b16 %v1701
    %v1834 = vunpack.c.l.b16 %v1702
    %v1835 = vunpack.c.h.b16 %v1702
    %v1836 = vunpack.c.l.b16 %v1703
    %v1837 = vunpack.c.h.b16 %v1703
    %v1838 = vunpack.c.l.b16 %v1704
    %v1839 = vunpack.c.h.b16 %v1704
    %v1840 = vunpack.c.l.b16 %v1705
    %v1841 = vunpack.c.h.b16 %v1705
    %v1842 = vunpack.c.l.b16 %v1706
    %v1843 = vunpack.c.h.b16 %v1706
    %v1844 = vunpack.c.l.b16 %v1707
    %v1845 = vunpack.c.h.b16 %v1707
    %v1846 = vunpack.c.l.b16 %v1708
    %v1847 = vunpack.c.h.b16 %v1708
    %v1848 = vunpack.c.l.b16 %v1709
    %v1849 = vunpack.c.h.b16 %v1709
    %v1850 = vunpack.c.l.b16 %v1710
    %v1851 = vunpack.c.h.b16 %v1710
    %v1852 = vunpack.c.l.b16 %v1711
    %v1853 = vunpack.c.h.b16 %v1711
    %v1854 = vunpack.c.l.b16 %v1712
    %v1855 = vunpack.c.h.b16 %v1712
    %v1856 = vunpack.c.l.b16 %v1713
    %v1857 = vunpack.c.h.b16 %v1713
    %v1858 = vunpack.c.l.b16 %v1714
    %v1859 = vunpack.c.h.b16 %v1714
    %v1860 = vunpack.c.l.b16 %v1715
    %v1861 = vunpack.c.h.b16 %v1715
    %v1862 = vunpack.c.l.b16 %v1716
    %v1863 = vunpack.c.h.b16 %v1716
    %v1864 = vunpack.c.l.b16 %v1717
    %v1865 = vunpack.c.h.b16 %v1717
    %v1866 = vunpack.c.l.b16 %v1718
    %v1867 = vunpack.c.h.b16 %v1718
    %v1868 = vunpack.c.l.b16 %v1719
    %v1869 = vunpack.c.h.b16 %v1719
    %v1870 = vunpack.c.l.b16 %v1720
    %v1871 = vunpack.c.h.b16 %v1720
    %v1872 = vunpack.c.l.b16 %v1721
    %v1873 = vunpack.c.h.b16 %v1721
    %v1874 = vunpack.c.l.b16 %v1722
    %v1875 = vunpack.c.h.b16 %v1722
    %v1876 = vunpack.c.l.b16 %v1723
    %v1877 = vunpack.c.h.b16 %v1723
    %v1878 = vunpack.c.l.b16 %v1724
    %v1879 = vunpack.c.h.b16 %v1724
    %v1880 = vunpack.c.l.b16 %v1725
    %v1881 = vunpack.c.h.b16 %v1725
    %v1882 = vunpack.c.l.b16 %v1726
    %v1883 = vunpack.c.h.b16 %v1726
    %v1884 = vunpack.c.l.b16 %v1727
    %v1885 = vunpack.c.h.b16 %v1727
    %v1886 = vunpack.c.l.b16 %v1728
    %v1887 = vunpack.c.h.b16 %v1728
    %v1888 = vunpack.c.l.b16 %v1729
    %v1889 = vunpack.c.h.b16 %v1729
    %v1890 = vunpack.c.l.b16 %v1730
    %v1891 = vunpack.c.h.b16 %v1730
    %v1892 = vunpack.c.l.b16 %v1731
    %v1893 = vunpack.c.h.b16 %v1731
    %v1894 = vunpack.c.l.b16 %v1732
    %v1895 = vunpack.c.h.b16 %v1732
    %v1896 = vunpack.c.l.b16 %v1733
    %v1897 = vunpack.c.h.b16 %v1733
    %v1898 = vunpack.c.l.b16 %v1734
    %v1899 = vunpack.c.h.b16 %v1734
    %v1900 = vunpack.c.l.b16 %v1735
    %v1901 = vunpack.c.h.b16 %v1735
    %v1902 = vunpack.c.l.b16 %v1736
    %v1903 = vunpack.c.h.b16 %v1736
    %v1904 = vunpack.c.l.b16 %v1737
    %v1905 = vunpack.c.h.b16 %v1737
    %v1906 = vunpack.c.l.b16 %v1738
    %v1907 = vunpack.c.h.b16 %v1738
    %v1908 = vunpack.c.l.b16 %v1739
    %v1909 = vunpack.c.h.b16 %v1739
    %v1910 = vunpack.c.l.b16 %v1740
    %v1911 = vunpack.c.h.b16 %v1740
    %v1912 = vunpack.c.l.b16 %v1741
    %v1913 = vunpack.c.h.b16 %v1741
    %v1914 = vunpack.c.l.b16 %v1742
    %v1915 = vunpack.c.h.b16 %v1742
    %v1916 = vunpack.c.l.b16 %v1743
    %v1917 = vunpack.c.h.b16 %v1743
    %v1918 = vunpack.c.l.b16 %v1744
    %v1919 = vunpack.c.h.b16 %v1744
    %v1920 = vunpack.c.l.b16 %v1745
    %v1921 = vunpack.c.h.b16 %v1745
    %v1922 = vunpack.c.l.b16 %v1746
    %v1923 = vunpack.c.h.b16 %v1746
    %v1924 = vunpack.c.l.b16 %v1747
    %v1925 = vunpack.c.h.b16 %v1747
    %v1926 = vunpack.c.l.b16 %v1748
    %v1927 = vunpack.c.h.b16 %v1748
    %v1928 = vunpack.c.l.b16 %v1749
    %v1929 = vunpack.c.h.b16 %v1749
    %v1930 = vunpack.c.l.b16 %v1750
    %v1931 = vunpack.c.h.b16 %v1750
    %v1932 = vunpack.c.l.b16 %v1751
    %v1933 = vunpack.c.h.b16 %v1751
    %v1934 = vunpack.c.l.b16 %v1752
    %v1935 = vunpack.c.h.b16 %v1752
    %v1936 = vunpack.c.l.b16 %v1753
    %v1937 = vunpack.c.h.b16 %v1753
    %v1938 = vunpack.c.l.b16 %v1754
    %v1939 = vunpack.c.h.b16 %v1754
    %v1940 = vunpack.c.l.b16 %v1755
    %v1941 = vunpack.c.h.b16 %v1755
    %v1942 = vunpack.c.l.b16 %v1756
    %v1943 = vunpack.c.h.b16 %v1756
    %v1944 = vunpack.c.l.b16 %v1757
    %v1945 = vunpack.c.h.b16 %v1757
    %v1946 = vunpack.c.l.b16 %v1758
    %v1947 = vunpack.c.h.b16 %v1758
    %v1948 = vunpack.c.l.b16 %v1759
    %v1949 = vunpack.c.h.b16 %v1759
    %v1950 = vunpack.c.l.b16 %v1760
    %v1951 = vunpack.c.h.b16 %v1760
    %v1952 = vunpack.c.l.b16 %v1761
    %v1953 = vunpack.c.h.b16 %v1761
    %v1954 = vpack.c.b16 %v1828, %v1826
    %v1955 = vpack.c.b16 %v1829, %v1827
    %v1956 = vpack.c.b16 %v1832, %v1830
    %v1957 = vpack.c.b16 %v1833, %v1831
    %v1958 = vpack.c.b16 %v1836, %v1834
    %v1959 = vpack.c.b16 %v1837, %v1835
    %v1960 = vpack.c.b16 %v1840, %v1838
    %v1961 = vpack.c.b16 %v1841, %v1839
    %v1962 = vpack.c.b16 %v1844, %v1842
    %v1963 = vpack.c.b16 %v1845, %v1843
    %v1964 = vpack.c.b16 %v1848, %v1846
    %v1965 = vpack.c.b16 %v1849, %v1847
    %v1966 = vpack.c.b16 %v1852, %v1850
    %v1967 = vpack.c.b16 %v1853, %v1851
    %v1968 = vpack.c.b16 %v1856, %v1854
    %v1969 = vpack.c.b16 %v1857, %v1855
    %v1970 = vpack.c.b16 %v1860, %v1858
    %v1971 = vpack.c.b16 %v1861, %v1859
    %v1972 = vpack.c.b16 %v1864, %v1862
    %v1973 = vpack.c.b16 %v1865, %v1863
    %v1974 = vpack.c.b16 %v1868, %v1866
    %v1975 = vpack.c.b16 %v1869, %v1867
    %v1976 = vpack.c.b16 %v1872, %v1870
    %v1977 = vpack.c.b16 %v1873, %v1871
    %v1978 = vpack.c.b16 %v1876, %v1874
    %v1979 = vpack.c.b16 %v1877, %v1875
    %v1980 = vpack.c.b16 %v1880, %v1878
    %v1981 = vpack.c.b16 %v1881, %v1879
    %v1982 = vpack.c.b16 %v1884, %v1882
    %v1983 = vpack.c.b16 %v1885, %v1883
    %v1984 = vpack.c.b16 %v1888, %v1886
    %v1985 = vpack.c.b16 %v1889, %v1887
    %v1986 = vpack.c.b16 %v1892, %v1890
    %v1987 = vpack.c.b16 %v1893, %v1891
    %v1988 = vpack.c.b16 %v1896, %v1894
    %v1989 = vpack.c.b16 %v1897, %v1895
    %v1990 = vpack.c.b16 %v1900, %v1898
    %v1991 = vpack.c.b16 %v1901, %v1899
    %v1992 = vpack.c.b16 %v1904, %v1902
    %v1993 = vpack.c.b16 %v1905, %v1903
    %v1994 = vpack.c.b16 %v1908, %v1906
    %v1995 = vpack.c.b16 %v1909, %v1907
    %v1996 = vpack.c.b16 %v1912, %v1910
    %v1997 = vpack.c.b16 %v1913, %v1911
    %v1998 = vpack.c.b16 %v1916, %v1914
    %v1999 = vpack.c.b16 %v1917, %v1915
    %v2000 = vpack.c.b16 %v1920, %v1918
    %v2001 = vpack.c.b16 %v1921, %v1919
    %v2002 = vpack.c.b16 %v1924, %v1922
    %v2003 = vpack.c.b16 %v1925, %v1923
    %v2004 = vpack.c.b16 %v1928, %v1926
    %v2005 = vpack.c.b16 %v1929, %v1927
    %v2006 = vpack.c.b16 %v1932, %v1930
    %v2007 = vpack.c.b16 %v1933, %v1931
    %v2008 = vpack.c.b16 %v1936, %v1934
    %v2009 = vpack.c.b16 %v1937, %v1935
    %v2010 = vpack.c.b16 %v1940, %v1938
    %v2011 = vpack.c.b16 %v1941, %v1939
    %v2012 = vpack.c.b16 %v1944, %v1942
    %v2013 = vpack.c.b16 %v1945, %v1943
    %v2014 = vpack.c.b16 %v1948, %v1946
    %v2015 = vpack.c.b16 %v1949, %v1947
    %v2016 = vpack.c.b16 %v1952, %v1950
    %v2017 = vpack.c.b16 %v1953, %v1951
    %2082 = vmatpush.bf16.msra.mxu0 %v1968
    %2083 = vmatpush.bf16.msra.mxu0 %v1966
    %2084 = vmatpush.bf16.msra.mxu0 %v1964
    %2085 = vmatpush.bf16.msra.mxu0 %v1962
    %2086 = vmatpush.bf16.msra.mxu0 %v1960
    %2087 = vmatpush.bf16.msra.mxu0 %v1958
    %2088 = vmatpush.bf16.msra.mxu0 %v1956
    %2089 = vmatpush.bf16.msra.mxu0 %v1954
    %2090 = vmatmul.bf16.gmra.mxu0 %v1691
    %v2091 = vpop.f32.mrf.mxu0
    %v2092 = vadd.f32 0.0, %v2091
    %v2093 = vpop.f32.mrf.mxu0
    %2094 = vdwg.mxu0
    %2095 = vmatpush.bf16.msra.mxu0 %v1984
    %2096 = vmatpush.bf16.msra.mxu0 %v1982
    %2097 = vmatpush.bf16.msra.mxu0 %v1980
    %2098 = vmatpush.bf16.msra.mxu0 %v1978
    %2099 = vmatpush.bf16.msra.mxu0 %v1976
    %2100 = vmatpush.bf16.msra.mxu0 %v1974
    %2101 = vmatpush.bf16.msra.mxu0 %v1972
    %2102 = vmatpush.bf16.msra.mxu0 %v1970
    %2103 = vmatmul.bf16.gmra.mxu0 %v1692
    %v2104 = vpop.f32.mrf.mxu0
    %v2105 = vadd.f32 %v2092, %v2104
    %v2106 = vpop.f32.mrf.mxu0
    %2107 = vdwg.mxu0
    %2108 = vmatpush.bf16.msra.mxu0 %v2000
    %2109 = vmatpush.bf16.msra.mxu0 %v1998
    %2110 = vmatpush.bf16.msra.mxu0 %v1996
    %2111 = vmatpush.bf16.msra.mxu0 %v1994
    %2112 = vmatpush.bf16.msra.mxu0 %v1992
    %2113 = vmatpush.bf16.msra.mxu0 %v1990
    %2114 = vmatpush.bf16.msra.mxu0 %v1988
    %2115 = vmatpush.bf16.msra.mxu0 %v1986
    %2116 = vmatmul.bf16.gmra.mxu0 %v1693
    %v2117 = vpop.f32.mrf.mxu0
    %v2118 = vadd.f32 %v2105, %v2117
    %v2119 = vpop.f32.mrf.mxu0
    %2120 = vdwg.mxu0
    %2121 = vmatpush.bf16.msra.mxu0 %v2016
    %2122 = vmatpush.bf16.msra.mxu0 %v2014
    %2123 = vmatpush.bf16.msra.mxu0 %v2012
    %2124 = vmatpush.bf16.msra.mxu0 %v2010
    %2125 = vmatpush.bf16.msra.mxu0 %v2008
    %2126 = vmatpush.bf16.msra.mxu0 %v2006
    %2127 = vmatpush.bf16.msra.mxu0 %v2004
    %2128 = vmatpush.bf16.msra.mxu0 %v2002
    %2129 = vmatmul.bf16.gmra.mxu0 %v1694
    %v2130 = vpop.f32.mrf.mxu0
    %v2131 = vadd.f32 %v2118, %v2130
    %v2132 = vpop.f32.mrf.mxu0
    %2133 = vdwg.mxu0
    %2134 = vmatpush.bf16.msra.mxu0 %v1969
    %2135 = vmatpush.bf16.msra.mxu0 %v1967
    %2136 = vmatpush.bf16.msra.mxu0 %v1965
    %2137 = vmatpush.bf16.msra.mxu0 %v1963
    %2138 = vmatpush.bf16.msra.mxu0 %v1961
    %2139 = vmatpush.bf16.msra.mxu0 %v1959
    %2140 = vmatpush.bf16.msra.mxu0 %v1957
    %2141 = vmatpush.bf16.msra.mxu0 %v1955
    %2142 = vmatmul.bf16.gmra.mxu0 %v1691
    %v2143 = vpop.f32.mrf.mxu0
    %v2144 = vadd.f32 0.0, %v2143
    %v2145 = vpop.f32.mrf.mxu0
    %2146 = vdwg.mxu0
    %2147 = vmatpush.bf16.msra.mxu0 %v1985
    %2148 = vmatpush.bf16.msra.mxu0 %v1983
    %2149 = vmatpush.bf16.msra.mxu0 %v1981
    %2150 = vmatpush.bf16.msra.mxu0 %v1979
    %2151 = vmatpush.bf16.msra.mxu0 %v1977
    %2152 = vmatpush.bf16.msra.mxu0 %v1975
    %2153 = vmatpush.bf16.msra.mxu0 %v1973
    %2154 = vmatpush.bf16.msra.mxu0 %v1971
    %2155 = vmatmul.bf16.gmra.mxu0 %v1692
    %v2156 = vpop.f32.mrf.mxu0
    %v2157 = vadd.f32 %v2144, %v2156
    %v2158 = vpop.f32.mrf.mxu0
    %2159 = vdwg.mxu0
    %2160 = vmatpush.bf16.msra.mxu0 %v2001
    %2161 = vmatpush.bf16.msra.mxu0 %v1999
    %2162 = vmatpush.bf16.msra.mxu0 %v1997
    %2163 = vmatpush.bf16.msra.mxu0 %v1995
    %2164 = vmatpush.bf16.msra.mxu0 %v1993
    %2165 = vmatpush.bf16.msra.mxu0 %v1991
    %2166 = vmatpush.bf16.msra.mxu0 %v1989
    %2167 = vmatpush.bf16.msra.mxu0 %v1987
    %2168 = vmatmul.bf16.gmra.mxu0 %v1693
    %v2169 = vpop.f32.mrf.mxu0
    %v2170 = vadd.f32 %v2157, %v2169
    %v2171 = vpop.f32.mrf.mxu0
    %2172 = vdwg.mxu0
    %2173 = vmatpush.bf16.msra.mxu0 %v2017
    %2174 = vmatpush.bf16.msra.mxu0 %v2015
    %2175 = vmatpush.bf16.msra.mxu0 %v2013
    %2176 = vmatpush.bf16.msra.mxu0 %v2011
    %2177 = vmatpush.bf16.msra.mxu0 %v2009
    %2178 = vmatpush.bf16.msra.mxu0 %v2007
    %2179 = vmatpush.bf16.msra.mxu0 %v2005
    %2180 = vmatpush.bf16.msra.mxu0 %v2003
    %2181 = vmatmul.bf16.gmra.mxu0 %v1694
    %v2182 = vpop.f32.mrf.mxu0
    %v2183 = vadd.f32 %v2170, %v2182
    %v2184 = vpop.f32.mrf.mxu0
    %2185 = vdwg.mxu0
    %v2186 = vadd.s32 %v1024, 128
    %v2187 = vadd.s32 %v1024, 136
    %v2188 = vadd.s32 %v1024, 144
    %v2189 = vadd.s32 %v1024, 152
    %v2190 = vadd.s32 %v1024, 160
    %v2191 = vadd.s32 %v1024, 168
    %v2192 = vadd.s32 %v1024, 176
    %v2193 = vadd.s32 %v1024, 184
    %v2194 = vadd.s32 %v1041, 128
    %v2195 = vand.u32 %v1024, 63
    %v2196 = vand.u32 %v1025, 63
    %v2197 = vand.u32 %v1026, 63
    %v2198 = vand.u32 %v1027, 63
    %v2199 = vand.u32 %v1028, 63
    %v2200 = vand.u32 %v1029, 63
    %v2201 = vand.u32 %v1030, 63
    %v2202 = vand.u32 %v1031, 63
    %v2203 = vand.u32 %v1032, 63
    %v2204 = vand.u32 %v1033, 63
    %v2205 = vand.u32 %v1034, 63
    %v2206 = vand.u32 %v1035, 63
    %v2207 = vand.u32 %v1036, 63
    %v2208 = vand.u32 %v1037, 63
    %v2209 = vand.u32 %v1038, 63
    %v2210 = vand.u32 %v1039, 63
    %v2211 = vand.u32 %v2186, 63
    %v2212 = vand.u32 %v2187, 63
    %v2213 = vand.u32 %v2188, 63
    %v2214 = vand.u32 %v2189, 63
    %v2215 = vand.u32 %v2190, 63
    %v2216 = vand.u32 %v2191, 63
    %v2217 = vand.u32 %v2192, 63
    %v2218 = vand.u32 %v2193, 63
    %v2219 = vand.u32 %v1041, 63
    %v2220 = vand.u32 %v2194, 63
    %vm2221 = vcmp.eq.s32.totalorder %v2195, %v2219
    %vm2222 = vcmp.eq.s32.totalorder %v2195, %v2220
    %vm2223 = vcmp.eq.s32.totalorder %v2196, %v2219
    %vm2224 = vcmp.eq.s32.totalorder %v2196, %v2220
    %vm2225 = vcmp.eq.s32.totalorder %v2197, %v2219
    %vm2226 = vcmp.eq.s32.totalorder %v2197, %v2220
    %vm2227 = vcmp.eq.s32.totalorder %v2198, %v2219
    %vm2228 = vcmp.eq.s32.totalorder %v2198, %v2220
    %vm2229 = vcmp.eq.s32.totalorder %v2199, %v2219
    %vm2230 = vcmp.eq.s32.totalorder %v2199, %v2220
    %vm2231 = vcmp.eq.s32.totalorder %v2200, %v2219
    %vm2232 = vcmp.eq.s32.totalorder %v2200, %v2220
    %vm2233 = vcmp.eq.s32.totalorder %v2201, %v2219
    %vm2234 = vcmp.eq.s32.totalorder %v2201, %v2220
    %vm2235 = vcmp.eq.s32.totalorder %v2202, %v2219
    %vm2236 = vcmp.eq.s32.totalorder %v2202, %v2220
    %vm2237 = vcmp.eq.s32.totalorder %v2203, %v2219
    %vm2238 = vcmp.eq.s32.totalorder %v2203, %v2220
    %vm2239 = vcmp.eq.s32.totalorder %v2204, %v2219
    %vm2240 = vcmp.eq.s32.totalorder %v2204, %v2220
    %vm2241 = vcmp.eq.s32.totalorder %v2205, %v2219
    %vm2242 = vcmp.eq.s32.totalorder %v2205, %v2220
    %vm2243 = vcmp.eq.s32.totalorder %v2206, %v2219
    %vm2244 = vcmp.eq.s32.totalorder %v2206, %v2220
    %vm2245 = vcmp.eq.s32.totalorder %v2207, %v2219
    %vm2246 = vcmp.eq.s32.totalorder %v2207, %v2220
    %vm2247 = vcmp.eq.s32.totalorder %v2208, %v2219
    %vm2248 = vcmp.eq.s32.totalorder %v2208, %v2220
    %vm2249 = vcmp.eq.s32.totalorder %v2209, %v2219
    %vm2250 = vcmp.eq.s32.totalorder %v2209, %v2220
    %vm2251 = vcmp.eq.s32.totalorder %v2210, %v2219
    %vm2252 = vcmp.eq.s32.totalorder %v2210, %v2220
    %vm2253 = vcmp.eq.s32.totalorder %v2211, %v2219
    %vm2254 = vcmp.eq.s32.totalorder %v2211, %v2220
    %vm2255 = vcmp.eq.s32.totalorder %v2212, %v2219
    %vm2256 = vcmp.eq.s32.totalorder %v2212, %v2220
    %vm2257 = vcmp.eq.s32.totalorder %v2213, %v2219
    %vm2258 = vcmp.eq.s32.totalorder %v2213, %v2220
    %vm2259 = vcmp.eq.s32.totalorder %v2214, %v2219
    %vm2260 = vcmp.eq.s32.totalorder %v2214, %v2220
    %vm2261 = vcmp.eq.s32.totalorder %v2215, %v2219
    %vm2262 = vcmp.eq.s32.totalorder %v2215, %v2220
    %vm2263 = vcmp.eq.s32.totalorder %v2216, %v2219
    %vm2264 = vcmp.eq.s32.totalorder %v2216, %v2220
    %vm2265 = vcmp.eq.s32.totalorder %v2217, %v2219
    %vm2266 = vcmp.eq.s32.totalorder %v2217, %v2220
    %vm2267 = vcmp.eq.s32.totalorder %v2218, %v2219
    %vm2268 = vcmp.eq.s32.totalorder %v2218, %v2220
    %v2269 = vsel %vm2221, 0.055555556, 0.0
    %v2270 = vsel %vm2222, 0.055555556, 0.0
    %v2271 = vsel %vm2223, 0.055555556, 0.0
    %v2272 = vsel %vm2224, 0.055555556, 0.0
    %v2273 = vsel %vm2225, 0.055555556, 0.0
    %v2274 = vsel %vm2226, 0.055555556, 0.0
    %v2275 = vsel %vm2227, 0.055555556, 0.0
    %v2276 = vsel %vm2228, 0.055555556, 0.0
    %v2277 = vsel %vm2229, 0.055555556, 0.0
    %v2278 = vsel %vm2230, 0.055555556, 0.0
    %v2279 = vsel %vm2231, 0.055555556, 0.0
    %v2280 = vsel %vm2232, 0.055555556, 0.0
    %v2281 = vsel %vm2233, 0.055555556, 0.0
    %v2282 = vsel %vm2234, 0.055555556, 0.0
    %v2283 = vsel %vm2235, 0.055555556, 0.0
    %v2284 = vsel %vm2236, 0.055555556, 0.0
    %v2285 = vsel %vm2237, 0.055555556, 0.0
    %v2286 = vsel %vm2238, 0.055555556, 0.0
    %v2287 = vsel %vm2239, 0.055555556, 0.0
    %v2288 = vsel %vm2240, 0.055555556, 0.0
    %v2289 = vsel %vm2241, 0.055555556, 0.0
    %v2290 = vsel %vm2242, 0.055555556, 0.0
    %v2291 = vsel %vm2243, 0.055555556, 0.0
    %v2292 = vsel %vm2244, 0.055555556, 0.0
    %v2293 = vsel %vm2245, 0.055555556, 0.0
    %v2294 = vsel %vm2246, 0.055555556, 0.0
    %v2295 = vsel %vm2247, 0.055555556, 0.0
    %v2296 = vsel %vm2248, 0.055555556, 0.0
    %v2297 = vsel %vm2249, 0.055555556, 0.0
    %v2298 = vsel %vm2250, 0.055555556, 0.0
    %v2299 = vsel %vm2251, 0.055555556, 0.0
    %v2300 = vsel %vm2252, 0.055555556, 0.0
    %v2301 = vsel %vm2253, 0.055555556, 0.0
    %v2302 = vsel %vm2254, 0.055555556, 0.0
    %v2303 = vsel %vm2255, 0.055555556, 0.0
    %v2304 = vsel %vm2256, 0.055555556, 0.0
    %v2305 = vsel %vm2257, 0.055555556, 0.0
    %v2306 = vsel %vm2258, 0.055555556, 0.0
    %v2307 = vsel %vm2259, 0.055555556, 0.0
    %v2308 = vsel %vm2260, 0.055555556, 0.0
    %v2309 = vsel %vm2261, 0.055555556, 0.0
    %v2310 = vsel %vm2262, 0.055555556, 0.0
    %v2311 = vsel %vm2263, 0.055555556, 0.0
    %v2312 = vsel %vm2264, 0.055555556, 0.0
    %v2313 = vsel %vm2265, 0.055555556, 0.0
    %v2314 = vsel %vm2266, 0.055555556, 0.0
    %v2315 = vsel %vm2267, 0.055555556, 0.0
    %v2316 = vsel %vm2268, 0.055555556, 0.0
    %v2318 = vsel %vm292, %v2183, 0
    %2320 = vmatpush.msra.mxu0 %v2299
    %2321 = vmatpush.msra.mxu0 %v2297
    %2322 = vmatpush.msra.mxu0 %v2295
    %2323 = vmatpush.msra.mxu0 %v2293
    %2324 = vmatpush.msra.mxu0 %v2291
    %2325 = vmatpush.msra.mxu0 %v2289
    %2326 = vmatpush.msra.mxu0 %v2287
    %2327 = vmatpush.msra.mxu0 %v2285
    %2328 = vmatpush.msra.mxu0 %v2283
    %2329 = vmatpush.msra.mxu0 %v2281
    %2330 = vmatpush.msra.mxu0 %v2279
    %2331 = vmatpush.msra.mxu0 %v2277
    %2332 = vmatpush.msra.mxu0 %v2275
    %2333 = vmatpush.msra.mxu0 %v2273
    %2334 = vmatpush.msra.mxu0 %v2271
    %2335 = vmatpush.msra.mxu0 %v2269
    %2336 = vmatmul.f32.gmra.mxu0 %v2131
    %v2337 = vpop.f32.mrf.mxu0
    %v2338 = vadd.f32 0.0, %v2337
    %2339 = vdwg.mxu0
    %2340 = vmatpush.msra.mxu0 0.0
    %2341 = vmatpush.msra.mxu0 0.0
    %2342 = vmatpush.msra.mxu0 0.0
    %2343 = vmatpush.msra.mxu0 0.0
    %2344 = vmatpush.msra.mxu0 0.0
    %2345 = vmatpush.msra.mxu0 0.0
    %2346 = vmatpush.msra.mxu0 0.0
    %2347 = vmatpush.msra.mxu0 0.0
    %2348 = vmatpush.msra.mxu0 %v2315
    %2349 = vmatpush.msra.mxu0 %v2313
    %2350 = vmatpush.msra.mxu0 %v2311
    %2351 = vmatpush.msra.mxu0 %v2309
    %2352 = vmatpush.msra.mxu0 %v2307
    %2353 = vmatpush.msra.mxu0 %v2305
    %2354 = vmatpush.msra.mxu0 %v2303
    %2355 = vmatpush.msra.mxu0 %v2301
    %2356 = vmatmul.f32.gmra.mxu0 %v2318
    %v2357 = vpop.f32.mrf.mxu0
    %v2358 = vadd.f32 %v2338, %v2357
    %2359 = vdwg.mxu0
    %2360 = vmatpush.msra.mxu0 %v2300
    %2361 = vmatpush.msra.mxu0 %v2298
    %2362 = vmatpush.msra.mxu0 %v2296
    %2363 = vmatpush.msra.mxu0 %v2294
    %2364 = vmatpush.msra.mxu0 %v2292
    %2365 = vmatpush.msra.mxu0 %v2290
    %2366 = vmatpush.msra.mxu0 %v2288
    %2367 = vmatpush.msra.mxu0 %v2286
    %2368 = vmatpush.msra.mxu0 %v2284
    %2369 = vmatpush.msra.mxu0 %v2282
    %2370 = vmatpush.msra.mxu0 %v2280
    %2371 = vmatpush.msra.mxu0 %v2278
    %2372 = vmatpush.msra.mxu0 %v2276
    %2373 = vmatpush.msra.mxu0 %v2274
    %2374 = vmatpush.msra.mxu0 %v2272
    %2375 = vmatpush.msra.mxu0 %v2270
    %2376 = vmatmul.f32.gmra.mxu0 %v2131
    %v2377 = vpop.f32.mrf.mxu0
    %v2378 = vadd.f32 0.0, %v2377
    %2379 = vdwg.mxu0
    %2380 = vmatpush.msra.mxu0 0.0
    %2381 = vmatpush.msra.mxu0 0.0
    %2382 = vmatpush.msra.mxu0 0.0
    %2383 = vmatpush.msra.mxu0 0.0
    %2384 = vmatpush.msra.mxu0 0.0
    %2385 = vmatpush.msra.mxu0 0.0
    %2386 = vmatpush.msra.mxu0 0.0
    %2387 = vmatpush.msra.mxu0 0.0
    %2388 = vmatpush.msra.mxu0 %v2316
    %2389 = vmatpush.msra.mxu0 %v2314
    %2390 = vmatpush.msra.mxu0 %v2312
    %2391 = vmatpush.msra.mxu0 %v2310
    %2392 = vmatpush.msra.mxu0 %v2308
    %2393 = vmatpush.msra.mxu0 %v2306
    %2394 = vmatpush.msra.mxu0 %v2304
    %2395 = vmatpush.msra.mxu0 %v2302
    %2396 = vmatmul.f32.gmra.mxu0 %v2318
    %v2397 = vpop.f32.mrf.mxu0
    %v2398 = vadd.f32 %v2378, %v2397
    %2399 = vdwg.mxu0
    %vm2400 = vcmask 1045504
    %v2401 = vsel %vm2400, %v2358, 0.0
    %v2402 = vrot.slane %v2401, 4
    %v2403 = vadd.f32 %v2401, %v2402
    %v2404 = vrot.slane %v2403, 2
    %v2405 = vadd.f32 %v2403, %v2404
    %v2406 = vrot.slane %v2405, 1
    %v2407 = vadd.f32 %v2405, %v2406
    %vm2408 = vcmask 521216
    %v2409 = vsel %vm2408, %v2398, 0.0
    %v2410 = vrot.slane %v2409, 4
    %v2411 = vadd.f32 %v2409, %v2410
    %v2412 = vrot.slane %v2411, 2
    %v2413 = vadd.f32 %v2411, %v2412
    %v2414 = vrot.slane %v2413, 1
    %v2415 = vadd.f32 %v2413, %v2414
    %v2416 = vsub.f32 %v2131, %v2407
    %v2417 = vsub.f32 %v2183, %v2415
    %v2418 = vmul.f32 %v2416, %v2416
    %v2419 = vmul.f32 %v2417, %v2417
    %v2421 = vsel %vm292, %v2419, 0
    %2423 = vmatpush.msra.mxu0 %v2299
    %2424 = vmatpush.msra.mxu0 %v2297
    %2425 = vmatpush.msra.mxu0 %v2295
    %2426 = vmatpush.msra.mxu0 %v2293
    %2427 = vmatpush.msra.mxu0 %v2291
    %2428 = vmatpush.msra.mxu0 %v2289
    %2429 = vmatpush.msra.mxu0 %v2287
    %2430 = vmatpush.msra.mxu0 %v2285
    %2431 = vmatpush.msra.mxu0 %v2283
    %2432 = vmatpush.msra.mxu0 %v2281
    %2433 = vmatpush.msra.mxu0 %v2279
    %2434 = vmatpush.msra.mxu0 %v2277
    %2435 = vmatpush.msra.mxu0 %v2275
    %2436 = vmatpush.msra.mxu0 %v2273
    %2437 = vmatpush.msra.mxu0 %v2271
    %2438 = vmatpush.msra.mxu0 %v2269
    %2439 = vmatmul.f32.gmra.mxu0 %v2418
    %v2440 = vpop.f32.mrf.mxu0
    %v2441 = vadd.f32 0.0, %v2440
    %2442 = vdwg.mxu0
    %2443 = vmatpush.msra.mxu0 0.0
    %2444 = vmatpush.msra.mxu0 0.0
    %2445 = vmatpush.msra.mxu0 0.0
    %2446 = vmatpush.msra.mxu0 0.0
    %2447 = vmatpush.msra.mxu0 0.0
    %2448 = vmatpush.msra.mxu0 0.0
    %2449 = vmatpush.msra.mxu0 0.0
    %2450 = vmatpush.msra.mxu0 0.0
    %2451 = vmatpush.msra.mxu0 %v2315
    %2452 = vmatpush.msra.mxu0 %v2313
    %2453 = vmatpush.msra.mxu0 %v2311
    %2454 = vmatpush.msra.mxu0 %v2309
    %2455 = vmatpush.msra.mxu0 %v2307
    %2456 = vmatpush.msra.mxu0 %v2305
    %2457 = vmatpush.msra.mxu0 %v2303
    %2458 = vmatpush.msra.mxu0 %v2301
    %2459 = vmatmul.f32.gmra.mxu0 %v2421
    %v2460 = vpop.f32.mrf.mxu0
    %v2461 = vadd.f32 %v2441, %v2460
    %2462 = vdwg.mxu0
    %2463 = vmatpush.msra.mxu0 %v2300
    %2464 = vmatpush.msra.mxu0 %v2298
    %2465 = vmatpush.msra.mxu0 %v2296
    %2466 = vmatpush.msra.mxu0 %v2294
    %2467 = vmatpush.msra.mxu0 %v2292
    %2468 = vmatpush.msra.mxu0 %v2290
    %2469 = vmatpush.msra.mxu0 %v2288
    %2470 = vmatpush.msra.mxu0 %v2286
    %2471 = vmatpush.msra.mxu0 %v2284
    %2472 = vmatpush.msra.mxu0 %v2282
    %2473 = vmatpush.msra.mxu0 %v2280
    %2474 = vmatpush.msra.mxu0 %v2278
    %2475 = vmatpush.msra.mxu0 %v2276
    %2476 = vmatpush.msra.mxu0 %v2274
    %2477 = vmatpush.msra.mxu0 %v2272
    %2478 = vmatpush.msra.mxu0 %v2270
    %2479 = vmatmul.f32.gmra.mxu0 %v2418
    %v2480 = vpop.f32.mrf.mxu0
    %v2481 = vadd.f32 0.0, %v2480
    %2482 = vdwg.mxu0
    %2483 = vmatpush.msra.mxu0 0.0
    %2484 = vmatpush.msra.mxu0 0.0
    %2485 = vmatpush.msra.mxu0 0.0
    %2486 = vmatpush.msra.mxu0 0.0
    %2487 = vmatpush.msra.mxu0 0.0
    %2488 = vmatpush.msra.mxu0 0.0
    %2489 = vmatpush.msra.mxu0 0.0
    %2490 = vmatpush.msra.mxu0 0.0
    %2491 = vmatpush.msra.mxu0 %v2316
    %2492 = vmatpush.msra.mxu0 %v2314
    %2493 = vmatpush.msra.mxu0 %v2312
    %2494 = vmatpush.msra.mxu0 %v2310
    %2495 = vmatpush.msra.mxu0 %v2308
    %2496 = vmatpush.msra.mxu0 %v2306
    %2497 = vmatpush.msra.mxu0 %v2304
    %2498 = vmatpush.msra.mxu0 %v2302
    %2499 = vmatmul.f32.gmra.mxu0 %v2421
    %v2500 = vpop.f32.mrf.mxu0
    %v2501 = vadd.f32 %v2481, %v2500
    %2502 = vdwg.mxu0
    %v2503 = vsel %vm2400, %v2461, 0.0
    %v2504 = vrot.slane %v2503, 4
    %v2505 = vadd.f32 %v2503, %v2504
    %v2506 = vrot.slane %v2505, 2
    %v2507 = vadd.f32 %v2505, %v2506
    %v2508 = vrot.slane %v2507, 1
    %v2509 = vadd.f32 %v2507, %v2508
    %v2510 = vsel %vm2408, %v2501, 0.0
    %v2511 = vrot.slane %v2510, 4
    %v2512 = vadd.f32 %v2510, %v2511
    %v2513 = vrot.slane %v2512, 2
    %v2514 = vadd.f32 %v2512, %v2513
    %v2515 = vrot.slane %v2514, 1
    %v2516 = vadd.f32 %v2514, %v2515
    %v2517 = vmax.f32 %v2509, 0.0
    %v2518 = vmax.f32 %v2516, 0.0
    %v2519 = vadd.f32 %v2517, 1e-05
    %v2520 = vadd.f32 %v2518, 1e-05
    %v2521 = vrsqrt.pop %v2519
    %v2522 = vmul.f32 %v2521, %v2519
    %v2523 = vmul.f32 %v2522, %v2521
    %v2524 = vmul.f32 0.5, %v2523
    %v2525 = vsub.f32 1.5, %v2524
    %v2526 = vmul.f32 %v2521, %v2525
    %vm2527 = vweird.f32 %v2519
    %vm2528 = vweird.f32 %v2521
    %vm2529 = vmor %vm2527, %vm2528
    %v2530 = vsel %vm2529, %v2521, %v2526
    %v2531 = vrsqrt.pop %v2520
    %v2532 = vmul.f32 %v2531, %v2520
    %v2533 = vmul.f32 %v2532, %v2531
    %v2534 = vmul.f32 0.5, %v2533
    %v2535 = vsub.f32 1.5, %v2534
    %v2536 = vmul.f32 %v2531, %v2535
    %vm2537 = vweird.f32 %v2520
    %vm2538 = vweird.f32 %v2531
    %vm2539 = vmor %vm2537, %vm2538
    %v2540 = vsel %vm2539, %v2531, %v2536
    %v2541 = vmul.f32 %v2416, %v2530
    %v2542 = vmul.f32 %v2417, %v2540
    %v2543 = vld [vmem:[%s10] sm:$0x3]
    %v2545 = vperm.slane %v2543, 0
    %v2546 = vperm.slane %v2543, 1
    %v2549 = vmul.f32 %v2541, %v2545
    %v2550 = vmul.f32 %v2542, %v2546
    %v2551 = vld [vmem:[%s11] sm:$0x3]
    %v2553 = vperm.slane %v2551, 0
    %v2554 = vperm.slane %v2551, 1
    %v2557 = vadd.f32 %v2549, %v2553
    %v2558 = vadd.f32 %v2550, %v2554
    %vm2559 = vcmp.gt.f32.partialorder %v2557, 0.0
    %vm2560 = vcmp.gt.f32.partialorder %v2558, 0.0
    %v2561 = vmul.f32 %v2557, 0.2
    %v2562 = vmul.f32 %v2558, 0.2
    %v2563 = vsel %vm2559, %v2557, %v2561
    %v2564 = vsel %vm2560, %v2558, %v2562
    %v2567 = vrot.slane %v2563, 7
    %v2568 = vrot.slane %v2564, 7
    %2571 = vst [vmem:[#allocation9] sm:$0xe] %v2567
    %vm2572 = vcmask 519169
    %2573 = vst.msk [vmem:[#allocation9 + $0x8] sm:$0xe] %vm2572, %v2568
    %v2574 = vrot.slane %v2563, 5
    %v2575 = vrot.slane %v2564, 5
    %2578 = vst [vmem:[#allocation9] sm:$0xc0] %v2574
    %vm2579 = vcmask 523270
    %2580 = vst.msk [vmem:[#allocation9 + $0x8] sm:$0xc0] %vm2579, %v2575
    %2581 = vst [vmem:[#allocation9 + $0x10] sm:$0x1] %v2574
    %vm2582 = vcmask 516096
    %2583 = vst.msk [vmem:[#allocation9 + $0x18] sm:$0x1] %vm2582, %v2575
    %v2584 = vld [vmem:[#allocation9] sm:$0x3]
    %v2585 = vld [vmem:[#allocation9 + $0x8] sm:$0x3]
    %v2586 = vld [vmem:[#allocation9] sm:$0x60]
    %v2587 = vld [vmem:[#allocation9 + $0x8] sm:$0x60]
    %v2590 = vrot.slane %v2586, 3
    %v2591 = vrot.slane %v2587, 3
    %vm2594 = vcmask 1041408
    %v2595 = vsel %vm2594, %v2584, %v2590
    %v2596 = vsel %vm2594, %v2585, %v2591
    %v2597 = vld [vmem:[#allocation9] sm:$0x6]
    %v2598 = vld [vmem:[#allocation9 + $0x8] sm:$0x6]
    %v2599 = vld [vmem:[#allocation9] sm:$0xc0]
    %v2600 = vld [vmem:[#allocation9 + $0x8] sm:$0xc0]
    %v2603 = vrot.slane %v2597, 1
    %v2604 = vrot.slane %v2598, 1
    %v2609 = vrot.slane %v2599, 4
    %v2610 = vrot.slane %v2600, 4
    %v2613 = vsel %vm2594, %v2603, %v2609
    %v2614 = vsel %vm2594, %v2604, %v2610
    %v2615 = vld [vmem:[#allocation9] sm:$0xc]
    %v2616 = vld [vmem:[#allocation9 + $0x8] sm:$0xc]
    %v2617 = vld [vmem:[#allocation9] sm:$0x80]
    %v2618 = vld [vmem:[#allocation9 + $0x8] sm:$0x80]
    %v2619 = vld [vmem:[#allocation9 + $0x10] sm:$0x1]
    %v2620 = vld [vmem:[#allocation9 + $0x18] sm:$0x1]
    %v2623 = vrot.slane %v2615, 2
    %v2624 = vrot.slane %v2616, 2
    %v2631 = vrot.slane %v2617, 5
    %v2632 = vrot.slane %v2619, 5
    %v2633 = vsel %vm1671, %v2631, %v2632
    %v2634 = vrot.slane %v2618, 5
    %v2635 = vrot.slane %v2620, 5
    %v2636 = vsel %vm1671, %v2634, %v2635
    %v2639 = vsel %vm2594, %v2623, %v2633
    %v2640 = vsel %vm2594, %v2624, %v2636
    %v2641 = vld [vmem:[#allocation9] sm:$0x18]
    %v2642 = vld [vmem:[#allocation9 + $0x8] sm:$0x18]
    %v2643 = vld [vmem:[#allocation9 + $0x10] sm:$0x3]
    %v2644 = vld [vmem:[#allocation9 + $0x18] sm:$0x3]
    %v2647 = vrot.slane %v2641, 3
    %v2648 = vrot.slane %v2642, 3
    %v2653 = vrot.slane %v2643, 6
    %v2654 = vrot.slane %v2644, 6
    %v2657 = vsel %vm2594, %v2647, %v2653
    %v2658 = vsel %vm2594, %v2648, %v2654
    %2661 = vrot.lane.b32.xlu0 %v2613, 64
    %v2662 = vpop.permute.xlu0 %2661
    %2663 = vrot.lane.b32.xlu0 %v2614, 64
    %v2664 = vpop.permute.xlu0 %2663
    %v2665 = vsel %vm292, %v2662, %v2664
    %2670 = vrot.lane.b32.xlu0 %v2657, 64
    %v2671 = vpop.permute.xlu0 %2670
    %2672 = vrot.lane.b32.xlu0 %v2658, 64
    %v2673 = vpop.permute.xlu0 %2672
    %v2674 = vsel %vm292, %v2671, %v2673
    %v2677 = vsel %vm292, %v2596, %v2662
    %v2678 = vsel %vm292, %v2640, %v2671
    %v2679 = vpack.c.bf16 %v2595, %v2595
    %v2680 = vpack.c.bf16 %v2677, %v2677
    %v2681 = vpack.c.bf16 %v2665, %v2665
    %v2682 = vpack.c.bf16 %v2639, %v2639
    %v2683 = vpack.c.bf16 %v2678, %v2678
    %v2684 = vpack.c.bf16 %v2674, %v2674
    %v2685 = vld [vmem:[%s12] sm:$0xf]
    %v2686 = vld [vmem:[%s12 + $0x4] sm:$0xf]
    %v2687 = vld [vmem:[%s12 + $0x8] sm:$0xf]
    %v2688 = vld [vmem:[%s12 + $0xc] sm:$0xf]
    %v2689 = vld [vmem:[%s12 + $0x10] sm:$0xf]
    %v2690 = vld [vmem:[%s12 + $0x14] sm:$0xf]
    %v2691 = vld [vmem:[%s12 + $0x18] sm:$0xf]
    %v2692 = vld [vmem:[%s12 + $0x1c] sm:$0xf]
    %v2693 = vld [vmem:[%s12 + $0x20] sm:$0xf]
    %v2694 = vld [vmem:[%s12 + $0x24] sm:$0xf]
    %v2695 = vld [vmem:[%s12 + $0x28] sm:$0xf]
    %v2696 = vld [vmem:[%s12 + $0x2c] sm:$0xf]
    %v2697 = vld [vmem:[%s12 + $0x30] sm:$0xf]
    %v2698 = vld [vmem:[%s12 + $0x34] sm:$0xf]
    %v2699 = vld [vmem:[%s12 + $0x38] sm:$0xf]
    %v2700 = vld [vmem:[%s12 + $0x3c] sm:$0xf]
    %v2701 = vld [vmem:[%s12 + $0x40] sm:$0xf]
    %v2702 = vld [vmem:[%s12 + $0x44] sm:$0xf]
    %v2703 = vld [vmem:[%s12 + $0x48] sm:$0xf]
    %v2704 = vld [vmem:[%s12 + $0x4c] sm:$0xf]
    %v2705 = vld [vmem:[%s12 + $0x50] sm:$0xf]
    %v2706 = vld [vmem:[%s12 + $0x54] sm:$0xf]
    %v2707 = vld [vmem:[%s12 + $0x58] sm:$0xf]
    %v2708 = vld [vmem:[%s12 + $0x5c] sm:$0xf]
    %v2709 = vld [vmem:[%s12 + $0x60] sm:$0xf]
    %v2710 = vld [vmem:[%s12 + $0x64] sm:$0xf]
    %v2711 = vld [vmem:[%s12 + $0x68] sm:$0xf]
    %v2712 = vld [vmem:[%s12 + $0x6c] sm:$0xf]
    %v2713 = vld [vmem:[%s12 + $0x70] sm:$0xf]
    %v2714 = vld [vmem:[%s12 + $0x74] sm:$0xf]
    %v2715 = vld [vmem:[%s12 + $0x78] sm:$0xf]
    %v2716 = vld [vmem:[%s12 + $0x7c] sm:$0xf]
    %v2717 = vld [vmem:[%s12 + $0x80] sm:$0xf]
    %v2718 = vld [vmem:[%s12 + $0x84] sm:$0xf]
    %v2719 = vld [vmem:[%s12 + $0x88] sm:$0xf]
    %v2720 = vld [vmem:[%s12 + $0x8c] sm:$0xf]
    %v2721 = vld [vmem:[%s12 + $0x90] sm:$0xf]
    %v2722 = vld [vmem:[%s12 + $0x94] sm:$0xf]
    %v2723 = vld [vmem:[%s12 + $0x98] sm:$0xf]
    %v2724 = vld [vmem:[%s12 + $0x9c] sm:$0xf]
    %v2725 = vld [vmem:[%s12 + $0xa0] sm:$0xf]
    %v2726 = vld [vmem:[%s12 + $0xa4] sm:$0xf]
    %v2727 = vld [vmem:[%s12 + $0xa8] sm:$0xf]
    %v2728 = vld [vmem:[%s12 + $0xac] sm:$0xf]
    %v2729 = vld [vmem:[%s12 + $0xb0] sm:$0xf]
    %v2730 = vld [vmem:[%s12 + $0xb4] sm:$0xf]
    %v2731 = vld [vmem:[%s12 + $0xb8] sm:$0xf]
    %v2732 = vld [vmem:[%s12 + $0xbc] sm:$0xf]
    %v2733 = vld [vmem:[%s12 + $0xc0] sm:$0xf]
    %v2734 = vld [vmem:[%s12 + $0xc4] sm:$0xf]
    %v2735 = vld [vmem:[%s12 + $0xc8] sm:$0xf]
    %v2736 = vld [vmem:[%s12 + $0xcc] sm:$0xf]
    %v2737 = vld [vmem:[%s12 + $0xd0] sm:$0xf]
    %v2738 = vld [vmem:[%s12 + $0xd4] sm:$0xf]
    %v2739 = vld [vmem:[%s12 + $0xd8] sm:$0xf]
    %v2740 = vld [vmem:[%s12 + $0xdc] sm:$0xf]
    %v2741 = vld [vmem:[%s12 + $0xe0] sm:$0xf]
    %v2742 = vld [vmem:[%s12 + $0xe4] sm:$0xf]
    %v2743 = vld [vmem:[%s12 + $0xe8] sm:$0xf]
    %v2744 = vld [vmem:[%s12 + $0xec] sm:$0xf]
    %v2745 = vld [vmem:[%s12 + $0xf0] sm:$0xf]
    %v2746 = vld [vmem:[%s12 + $0xf4] sm:$0xf]
    %v2747 = vld [vmem:[%s12 + $0xf8] sm:$0xf]
    %v2748 = vld [vmem:[%s12 + $0xfc] sm:$0xf]
    %v2749 = vld [vmem:[%s12 + $0x100] sm:$0xf]
    %v2750 = vld [vmem:[%s12 + $0x104] sm:$0xf]
    %v2751 = vld [vmem:[%s12 + $0x108] sm:$0xf]
    %v2752 = vld [vmem:[%s12 + $0x10c] sm:$0xf]
    %v2753 = vld [vmem:[%s12 + $0x110] sm:$0xf]
    %v2754 = vld [vmem:[%s12 + $0x114] sm:$0xf]
    %v2755 = vld [vmem:[%s12 + $0x118] sm:$0xf]
    %v2756 = vld [vmem:[%s12 + $0x11c] sm:$0xf]
    %v2757 = vld [vmem:[%s12 + $0x120] sm:$0xf]
    %v2758 = vld [vmem:[%s12 + $0x124] sm:$0xf]
    %v2759 = vld [vmem:[%s12 + $0x128] sm:$0xf]
    %v2760 = vld [vmem:[%s12 + $0x12c] sm:$0xf]
    %v2761 = vld [vmem:[%s12 + $0x130] sm:$0xf]
    %v2762 = vld [vmem:[%s12 + $0x134] sm:$0xf]
    %v2763 = vld [vmem:[%s12 + $0x138] sm:$0xf]
    %v2764 = vld [vmem:[%s12 + $0x13c] sm:$0xf]
    %v2765 = vld [vmem:[%s12 + $0x140] sm:$0xf]
    %v2766 = vld [vmem:[%s12 + $0x144] sm:$0xf]
    %v2767 = vld [vmem:[%s12 + $0x148] sm:$0xf]
    %v2768 = vld [vmem:[%s12 + $0x14c] sm:$0xf]
    %v2769 = vld [vmem:[%s12 + $0x150] sm:$0xf]
    %v2770 = vld [vmem:[%s12 + $0x154] sm:$0xf]
    %v2771 = vld [vmem:[%s12 + $0x158] sm:$0xf]
    %v2772 = vld [vmem:[%s12 + $0x15c] sm:$0xf]
    %v2773 = vld [vmem:[%s12 + $0x160] sm:$0xf]
    %v2774 = vld [vmem:[%s12 + $0x164] sm:$0xf]
    %v2775 = vld [vmem:[%s12 + $0x168] sm:$0xf]
    %v2776 = vld [vmem:[%s12 + $0x16c] sm:$0xf]
    %v2777 = vld [vmem:[%s12 + $0x170] sm:$0xf]
    %v2778 = vld [vmem:[%s12 + $0x174] sm:$0xf]
    %v2779 = vld [vmem:[%s12 + $0x178] sm:$0xf]
    %v2780 = vld [vmem:[%s12 + $0x17c] sm:$0xf]
    %v2781 = vld [vmem:[%s13] sm:$0x1]
    %v2783 = vperm.slane %v2781, 0
    %v2881 = vunpack.c.l.b16 %v2685
    %v2882 = vunpack.c.l.b16 %v2686
    %v2883 = vunpack.c.l.b16 %v2687
    %v2884 = vunpack.c.l.b16 %v2688
    %v2885 = vunpack.c.l.b16 %v2689
    %v2886 = vunpack.c.l.b16 %v2690
    %v2887 = vunpack.c.l.b16 %v2691
    %v2888 = vunpack.c.l.b16 %v2692
    %v2889 = vunpack.c.l.b16 %v2693
    %v2890 = vunpack.c.l.b16 %v2694
    %v2891 = vunpack.c.l.b16 %v2695
    %v2892 = vunpack.c.l.b16 %v2696
    %v2893 = vunpack.c.l.b16 %v2697
    %v2894 = vunpack.c.l.b16 %v2698
    %v2895 = vunpack.c.l.b16 %v2699
    %v2896 = vunpack.c.l.b16 %v2700
    %v2897 = vunpack.c.l.b16 %v2701
    %v2898 = vunpack.c.l.b16 %v2702
    %v2899 = vunpack.c.l.b16 %v2703
    %v2900 = vunpack.c.l.b16 %v2704
    %v2901 = vunpack.c.l.b16 %v2705
    %v2902 = vunpack.c.l.b16 %v2706
    %v2903 = vunpack.c.l.b16 %v2707
    %v2904 = vunpack.c.l.b16 %v2708
    %v2905 = vunpack.c.l.b16 %v2709
    %v2906 = vunpack.c.l.b16 %v2710
    %v2907 = vunpack.c.l.b16 %v2711
    %v2908 = vunpack.c.l.b16 %v2712
    %v2909 = vunpack.c.l.b16 %v2713
    %v2910 = vunpack.c.l.b16 %v2714
    %v2911 = vunpack.c.l.b16 %v2715
    %v2912 = vunpack.c.l.b16 %v2716
    %v2913 = vunpack.c.l.b16 %v2717
    %v2914 = vunpack.c.l.b16 %v2718
    %v2915 = vunpack.c.l.b16 %v2719
    %v2916 = vunpack.c.l.b16 %v2720
    %v2917 = vunpack.c.l.b16 %v2721
    %v2918 = vunpack.c.l.b16 %v2722
    %v2919 = vunpack.c.l.b16 %v2723
    %v2920 = vunpack.c.l.b16 %v2724
    %v2921 = vunpack.c.l.b16 %v2725
    %v2922 = vunpack.c.l.b16 %v2726
    %v2923 = vunpack.c.l.b16 %v2727
    %v2924 = vunpack.c.l.b16 %v2728
    %v2925 = vunpack.c.l.b16 %v2729
    %v2926 = vunpack.c.l.b16 %v2730
    %v2927 = vunpack.c.l.b16 %v2731
    %v2928 = vunpack.c.l.b16 %v2732
    %v2929 = vunpack.c.l.b16 %v2733
    %v2930 = vunpack.c.l.b16 %v2734
    %v2931 = vunpack.c.l.b16 %v2735
    %v2932 = vunpack.c.l.b16 %v2736
    %v2933 = vunpack.c.l.b16 %v2737
    %v2934 = vunpack.c.l.b16 %v2738
    %v2935 = vunpack.c.l.b16 %v2739
    %v2936 = vunpack.c.l.b16 %v2740
    %v2937 = vunpack.c.l.b16 %v2741
    %v2938 = vunpack.c.l.b16 %v2742
    %v2939 = vunpack.c.l.b16 %v2743
    %v2940 = vunpack.c.l.b16 %v2744
    %v2941 = vunpack.c.l.b16 %v2745
    %v2942 = vunpack.c.l.b16 %v2746
    %v2943 = vunpack.c.l.b16 %v2747
    %v2944 = vunpack.c.l.b16 %v2748
    %v2945 = vunpack.c.l.b16 %v2749
    %v2946 = vunpack.c.l.b16 %v2750
    %v2947 = vunpack.c.l.b16 %v2751
    %v2948 = vunpack.c.l.b16 %v2752
    %v2949 = vunpack.c.l.b16 %v2753
    %v2950 = vunpack.c.l.b16 %v2754
    %v2951 = vunpack.c.l.b16 %v2755
    %v2952 = vunpack.c.l.b16 %v2756
    %v2953 = vunpack.c.l.b16 %v2757
    %v2954 = vunpack.c.l.b16 %v2758
    %v2955 = vunpack.c.l.b16 %v2759
    %v2956 = vunpack.c.l.b16 %v2760
    %v2957 = vunpack.c.l.b16 %v2761
    %v2958 = vunpack.c.l.b16 %v2762
    %v2959 = vunpack.c.l.b16 %v2763
    %v2960 = vunpack.c.l.b16 %v2764
    %v2961 = vunpack.c.l.b16 %v2765
    %v2962 = vunpack.c.l.b16 %v2766
    %v2963 = vunpack.c.l.b16 %v2767
    %v2964 = vunpack.c.l.b16 %v2768
    %v2965 = vunpack.c.l.b16 %v2769
    %v2966 = vunpack.c.l.b16 %v2770
    %v2967 = vunpack.c.l.b16 %v2771
    %v2968 = vunpack.c.l.b16 %v2772
    %v2969 = vunpack.c.l.b16 %v2773
    %v2970 = vunpack.c.l.b16 %v2774
    %v2971 = vunpack.c.l.b16 %v2775
    %v2972 = vunpack.c.l.b16 %v2776
    %v2973 = vunpack.c.l.b16 %v2777
    %v2974 = vunpack.c.l.b16 %v2778
    %v2975 = vunpack.c.l.b16 %v2779
    %v2976 = vunpack.c.l.b16 %v2780
    %v2977 = vpack.c.b16 %v2882, %v2881
    %v2978 = vpack.c.b16 %v2884, %v2883
    %v2979 = vpack.c.b16 %v2886, %v2885
    %v2980 = vpack.c.b16 %v2888, %v2887
    %v2981 = vpack.c.b16 %v2890, %v2889
    %v2982 = vpack.c.b16 %v2892, %v2891
    %v2983 = vpack.c.b16 %v2894, %v2893
    %v2984 = vpack.c.b16 %v2896, %v2895
    %v2985 = vpack.c.b16 %v2898, %v2897
    %v2986 = vpack.c.b16 %v2900, %v2899
    %v2987 = vpack.c.b16 %v2902, %v2901
    %v2988 = vpack.c.b16 %v2904, %v2903
    %v2989 = vpack.c.b16 %v2906, %v2905
    %v2990 = vpack.c.b16 %v2908, %v2907
    %v2991 = vpack.c.b16 %v2910, %v2909
    %v2992 = vpack.c.b16 %v2912, %v2911
    %v2993 = vpack.c.b16 %v2914, %v2913
    %v2994 = vpack.c.b16 %v2916, %v2915
    %v2995 = vpack.c.b16 %v2918, %v2917
    %v2996 = vpack.c.b16 %v2920, %v2919
    %v2997 = vpack.c.b16 %v2922, %v2921
    %v2998 = vpack.c.b16 %v2924, %v2923
    %v2999 = vpack.c.b16 %v2926, %v2925
    %v3000 = vpack.c.b16 %v2928, %v2927
    %v3001 = vpack.c.b16 %v2930, %v2929
    %v3002 = vpack.c.b16 %v2932, %v2931
    %v3003 = vpack.c.b16 %v2934, %v2933
    %v3004 = vpack.c.b16 %v2936, %v2935
    %v3005 = vpack.c.b16 %v2938, %v2937
    %v3006 = vpack.c.b16 %v2940, %v2939
    %v3007 = vpack.c.b16 %v2942, %v2941
    %v3008 = vpack.c.b16 %v2944, %v2943
    %v3009 = vpack.c.b16 %v2946, %v2945
    %v3010 = vpack.c.b16 %v2948, %v2947
    %v3011 = vpack.c.b16 %v2950, %v2949
    %v3012 = vpack.c.b16 %v2952, %v2951
    %v3013 = vpack.c.b16 %v2954, %v2953
    %v3014 = vpack.c.b16 %v2956, %v2955
    %v3015 = vpack.c.b16 %v2958, %v2957
    %v3016 = vpack.c.b16 %v2960, %v2959
    %v3017 = vpack.c.b16 %v2962, %v2961
    %v3018 = vpack.c.b16 %v2964, %v2963
    %v3019 = vpack.c.b16 %v2966, %v2965
    %v3020 = vpack.c.b16 %v2968, %v2967
    %v3021 = vpack.c.b16 %v2970, %v2969
    %v3022 = vpack.c.b16 %v2972, %v2971
    %v3023 = vpack.c.b16 %v2974, %v2973
    %v3024 = vpack.c.b16 %v2976, %v2975
    %3073 = vmatpush.bf16.msra.mxu0 %v2984
    %3074 = vmatpush.bf16.msra.mxu0 %v2983
    %3075 = vmatpush.bf16.msra.mxu0 %v2982
    %3076 = vmatpush.bf16.msra.mxu0 %v2981
    %3077 = vmatpush.bf16.msra.mxu0 %v2980
    %3078 = vmatpush.bf16.msra.mxu0 %v2979
    %3079 = vmatpush.bf16.msra.mxu0 %v2978
    %3080 = vmatpush.bf16.msra.mxu0 %v2977
    %3081 = vmatmul.bf16.gmra.mxu0 %v2679
    %v3082 = vpop.f32.mrf.mxu0
    %v3083 = vadd.f32 %v2783, %v3082
    %v3084 = vpop.f32.mrf.mxu0
    %3085 = vdwg.mxu0
    %3086 = vmatpush.bf16.msra.mxu0 %v2992
    %3087 = vmatpush.bf16.msra.mxu0 %v2991
    %3088 = vmatpush.bf16.msra.mxu0 %v2990
    %3089 = vmatpush.bf16.msra.mxu0 %v2989
    %3090 = vmatpush.bf16.msra.mxu0 %v2988
    %3091 = vmatpush.bf16.msra.mxu0 %v2987
    %3092 = vmatpush.bf16.msra.mxu0 %v2986
    %3093 = vmatpush.bf16.msra.mxu0 %v2985
    %3094 = vmatmul.bf16.gmra.mxu0 %v2680
    %v3095 = vpop.f32.mrf.mxu0
    %v3096 = vadd.f32 %v3083, %v3095
    %v3097 = vpop.f32.mrf.mxu0
    %3098 = vdwg.mxu0
    %3099 = vmatpush.bf16.msra.mxu0 %v3000
    %3100 = vmatpush.bf16.msra.mxu0 %v2999
    %3101 = vmatpush.bf16.msra.mxu0 %v2998
    %3102 = vmatpush.bf16.msra.mxu0 %v2997
    %3103 = vmatpush.bf16.msra.mxu0 %v2996
    %3104 = vmatpush.bf16.msra.mxu0 %v2995
    %3105 = vmatpush.bf16.msra.mxu0 %v2994
    %3106 = vmatpush.bf16.msra.mxu0 %v2993
    %3107 = vmatmul.bf16.gmra.mxu0 %v2681
    %v3108 = vpop.f32.mrf.mxu0
    %v3109 = vadd.f32 %v3096, %v3108
    %v3110 = vpop.f32.mrf.mxu0
    %3111 = vdwg.mxu0
    %3112 = vmatpush.bf16.msra.mxu0 %v3008
    %3113 = vmatpush.bf16.msra.mxu0 %v3007
    %3114 = vmatpush.bf16.msra.mxu0 %v3006
    %3115 = vmatpush.bf16.msra.mxu0 %v3005
    %3116 = vmatpush.bf16.msra.mxu0 %v3004
    %3117 = vmatpush.bf16.msra.mxu0 %v3003
    %3118 = vmatpush.bf16.msra.mxu0 %v3002
    %3119 = vmatpush.bf16.msra.mxu0 %v3001
    %3120 = vmatmul.bf16.gmra.mxu0 %v2682
    %v3121 = vpop.f32.mrf.mxu0
    %v3122 = vadd.f32 %v3109, %v3121
    %v3123 = vpop.f32.mrf.mxu0
    %3124 = vdwg.mxu0
    %3125 = vmatpush.bf16.msra.mxu0 %v3016
    %3126 = vmatpush.bf16.msra.mxu0 %v3015
    %3127 = vmatpush.bf16.msra.mxu0 %v3014
    %3128 = vmatpush.bf16.msra.mxu0 %v3013
    %3129 = vmatpush.bf16.msra.mxu0 %v3012
    %3130 = vmatpush.bf16.msra.mxu0 %v3011
    %3131 = vmatpush.bf16.msra.mxu0 %v3010
    %3132 = vmatpush.bf16.msra.mxu0 %v3009
    %3133 = vmatmul.bf16.gmra.mxu0 %v2683
    %v3134 = vpop.f32.mrf.mxu0
    %v3135 = vadd.f32 %v3122, %v3134
    %v3136 = vpop.f32.mrf.mxu0
    %3137 = vdwg.mxu0
    %3138 = vmatpush.bf16.msra.mxu0 %v3024
    %3139 = vmatpush.bf16.msra.mxu0 %v3023
    %3140 = vmatpush.bf16.msra.mxu0 %v3022
    %3141 = vmatpush.bf16.msra.mxu0 %v3021
    %3142 = vmatpush.bf16.msra.mxu0 %v3020
    %3143 = vmatpush.bf16.msra.mxu0 %v3019
    %3144 = vmatpush.bf16.msra.mxu0 %v3018
    %3145 = vmatpush.bf16.msra.mxu0 %v3017
    %3146 = vmatmul.bf16.gmra.mxu0 %v2684
    %v3147 = vpop.f32.mrf.mxu0
    %v3148 = vadd.f32 %v3135, %v3147
    %v3149 = vpop.f32.mrf.mxu0
    %3150 = vdwg.mxu0
    %vm3151 = vcmask 11264
    %3152 = vst.msk [vmem:[#allocation10] sm:$0xf] %vm3151, %v3148
    // Predicated region
    $region88: #{forward.1} parent=1 // pred_check
      _
    $region89: #{forward.1} parent=1 // pred_check_branch
      %3154 = sbr.rel (0) target = $region91
    $region90: #{forward.1} parent=1 // pred_region
      %3156 = vsyncadd [#allocation11], 0
      %s3158 = sshll.u32 [#allocation10], 4
      %s3159 = int_to_ptr.vmem [resolvable:$true] %s3158
      %s3160 = sshll.u32 %s14, 4
      %s3161 = int_to_ptr.hbm [resolvable:$true] %s3160
      %3163 = dma.vmem_to_hbm [thread:$0]  %s3159, 64, %s3161, [#allocation11]
    $region91: #{forward.1} parent=1 // pred_fallthru
      _
    // Predicated region
    $region92: #{forward.1} parent=1 // pred_check
      _
    $region93: #{forward.1} parent=1 // pred_check_branch
      %3165 = sbr.rel (0) target = $region95
    $region94: #{forward.1} parent=1 // pred_region
      %3167 = dma.done [#allocation11], 64
    $region95: #{forward.1} parent=1 // pred_fallthru
      _
    %3168 = vsyncpa [#allocation11], 1
  %3169 = vsyncmov [#allocation5]
  %s3170 = vpop.sfrf %3169
  %p3171 = scmp.eq.s32.totalorder %s3170, 0
  %p3172 = pneg %p3171
  %3174 = shalt.err (%p3172)
  %s3175 = scalar_lea.sflag [#allocation5], 1
  %3176 = vsyncmov %s3175
  %s3177 = vpop.sfrf %3176
  %p3178 = scmp.eq.s32.totalorder %s3177, 0
  %p3179 = pneg %p3178
  %3181 = shalt.err (%p3179)
  %s3182 = scalar_lea.sflag [#allocation5], 2
  %3183 = vsyncmov %s3182
  %s3184 = vpop.sfrf %3183
  %p3185 = scmp.eq.s32.totalorder %s3184, 0
  %p3186 = pneg %p3185
  %3188 = shalt.err (%p3186)

</llo_original>
